<compile_context>
chip_gen: v7x
topology: tpu7x:2x2x1
jax: 0.10.0
libtpu: 0.0.40
codegen_flags: <defaults>
</compile_context>

<pallas_src>
import functools
import math

import jax
import jax.numpy as jnp
from jax.experimental import pallas as pl
from jax.experimental.pallas import tpu as pltpu


def _layer_norm(x, gamma, beta, eps):
    # x: (rows, D); gamma/beta: (1, D). Biased variance, matching nn.LayerNorm.
    mean = jnp.mean(x, axis=-1, keepdims=True)
    var = jnp.mean((x - mean) ** 2, axis=-1, keepdims=True)
    return (x - mean) * jax.lax.rsqrt(var + eps) * gamma + beta


def bsarec_kernel(*refs, batch_block, seq_len, n_heads, alpha, layer_norm_eps,
                  has_mask):
    if has_mask:
        (x_ref, mask_ref, a_ref, at_ref, wqkv_ref, bqkv_ref, wd_ref, bd_ref,
         ga_ref, ba_ref, fbeta_ref, gf_ref, bf_ref, out_ref, ctx_ref) = refs
    else:
        (x_ref, a_ref, at_ref, wqkv_ref, bqkv_ref, wd_ref, bd_ref,
         ga_ref, ba_ref, fbeta_ref, gf_ref, bf_ref, out_ref, ctx_ref) = refs
        mask_ref = None

    Bb, S, H = batch_block, seq_len, n_heads
    BbS, D = x_ref.shape                      # (Bb*S, D)
    dh = D // H
    scale = 1.0 / math.sqrt(dh)

    x = x_ref[...].astype(jnp.float32)        # (Bb*S, D) f32 (residual / LN / freq)
    x_bf = x.astype(jnp.bfloat16)             # bf16 operand for the MXU

    # -------- fused QKV projection: one (Bb*S, D) @ (D, 3D) MXU matmul --------
    qkv = jnp.dot(x_bf, wqkv_ref[...], preferred_element_type=jnp.float32)
    qkv = (qkv + bqkv_ref[...]).astype(jnp.bfloat16)   # keep bf16 only
    q3 = qkv[:, 0 * D:1 * D].reshape(Bb, S, D)
    k3 = qkv[:, 1 * D:2 * D].reshape(Bb, S, D)
    v3 = qkv[:, 2 * D:3 * D].reshape(Bb, S, D)

    # -------- additive attention mask, built / broadcast ONCE (hoisted) --------
    if mask_ref is None:
        row = jax.lax.broadcasted_iota(jnp.int32, (S, S), 0)
        col = jax.lax.broadcasted_iota(jnp.int32, (S, S), 1)
        m2 = jnp.where(col <= row, 0.0, -10000.0).astype(jnp.float32)
        mask_b = jnp.broadcast_to(m2[None], (Bb, S, S))
    else:
        mask_b = jnp.broadcast_to(mask_ref[...].astype(jnp.float32), (Bb, S, S))

    # -------- MultiHeadAttention branch (gsp) --------
    # Per-head scores/softmax/context; contexts assembled into a lane-dense
    # (Bb*S, D) scratch so the output projection is a single K=D matmul.
    for h in range(H):                        # static loop over heads
        sl = slice(h * dh, (h + 1) * dh)
        s = jnp.einsum("bqd,bkd->bqk", q3[:, :, sl], k3[:, :, sl],
                       preferred_element_type=jnp.float32) * scale + mask_b
        s = s - jnp.max(s, axis=-1, keepdims=True)
        p = jnp.exp(s)
        p = p * pl.reciprocal(jnp.sum(p, axis=-1, keepdims=True), approx=True)
        ctx = jnp.einsum("bqk,bkd->bqd", p.astype(jnp.bfloat16), v3[:, :, sl],
                         preferred_element_type=jnp.float32)     # (Bb, S, dh)
        ctx_ref[:, sl] = ctx.reshape(BbS, dh)

    dense = jnp.dot(ctx_ref[...].astype(jnp.bfloat16), wd_ref[...],
                    preferred_element_type=jnp.float32) + bd_ref[...]
    gsp = _layer_norm(dense + x, ga_ref[...], ba_ref[...], layer_norm_eps)

    # -------- FrequencyLayer branch (dsp), fully batched over the block --------
    # low_pass = A @ (A^T @ x); frequency branch stays f32 (negligible FLOPs
    # after the rank-R factorization).
    R = a_ref.shape[1]
    x3 = x.reshape(Bb, S, D)
    at_b = jnp.broadcast_to(at_ref[...][None], (Bb, R, S))
    a_b = jnp.broadcast_to(a_ref[...][None], (Bb, S, R))
    coef = jnp.einsum("brs,bsd->brd", at_b, x3, preferred_element_type=jnp.float32)
    low = jnp.einsum("bsr,brd->bsd", a_b, coef,
                     preferred_element_type=jnp.float32).reshape(BbS, D)
    beta2 = fbeta_ref[...] * fbeta_ref[...]
    emb = low + beta2 * (x - low)
    # NOTE: FrequencyLayer's LayerNorm hardcodes eps=1e-12 in the reference.
    dsp = _layer_norm(emb + x, gf_ref[...], bf_ref[...], 1e-12)

    # Single lane-dense full-block store of the mixed output.
    out_ref[...] = (alpha * dsp + (1.0 - alpha) * gsp).astype(out_ref.dtype)


def make_lowpass_factor(seq_len, c):
    """Orthonormal basis A (S, R) of the kept rFFT bins.

    rfft -> zero bins >= c//2+1 -> irfft (both 'ortho') along the sequence axis
    is the orthogonal projection onto those bins, i.e. M = A @ A.T exactly.
    """
    S = seq_len
    c_half = min(c // 2 + 1, S // 2 + 1)
    n = jnp.arange(S, dtype=jnp.float32)
    cols = [jnp.full((S,), 1.0 / math.sqrt(S), jnp.float32)]          # DC bin
    for k in range(1, c_half):
        ang = 2.0 * math.pi * k * n / S
        if 2 * k == S:                                                # Nyquist
            cols.append(jnp.cos(ang) / math.sqrt(S))
        else:
            cols.append(math.sqrt(2.0 / S) * jnp.cos(ang))
            cols.append(math.sqrt(2.0 / S) * jnp.sin(ang))
    A = jnp.stack(cols, axis=1)                                       # (S, R)
    pad = (-A.shape[1]) % 8          # zero-pad rank (exact, layout friendly)
    if pad:
        A = jnp.concatenate([A, jnp.zeros((S, pad), jnp.float32)], axis=1)
    return A


def _vmem_capacity_bytes():
    try:
        cap = getattr(pltpu.get_tpu_info(), "vmem_capacity_bytes", None)
        if cap:
            return int(cap)
    except Exception:
        pass
    return 64 * 2 ** 20            # conservative default (v7x per-TensorCore)


def _vmem_estimate(bb, S, D, R, mask_batch, has_mask):
    f32, bf16 = 4, 2
    rows = bb * S
    est = 2 * rows * D * f32                       # x block (double-buffered)
    est += 2 * rows * D * f32                      # out block (double-buffered)
    if has_mask:
        est += (2 * bb if mask_batch > 1 else 1) * S * S * f32
    est += 4 * D * D * bf16 + 2 * S * R * f32 + 12 * D * f32   # constants (1x)
    est += rows * D * f32                          # ctx scratch
    # live intermediates: x_bf, fused qkv (f32 + bf16), dense/gsp, low/emb/dsp,
    # per-head q/k/v views
    est += rows * D * (bf16 + 3 * (f32 + bf16) + 5 * f32 + 3 * bf16)
    est += 3 * bb * S * S * f32                    # hoisted mask + scores + probs
    est += bb * R * D * f32                        # frequency coefficients
    return est


def _divisor_at_most(n, k):
    k = max(1, min(k, n))
    while n % k:
        k -= 1
    return k


def _pick_batch_block(B, S, D, R, mask_batch, has_mask, target, budget):
    cap = B // 2 if B >= 2 else B          # grid >= 2 so both v7x TCs get work
    bb = _divisor_at_most(B, min(target, cap))
    while bb > 1 and _vmem_estimate(bb, S, D, R, mask_batch, has_mask) > budget:
        bb = _divisor_at_most(B, bb - 1)
    return bb


def _normalize_mask(attention_mask, B, S):
    if attention_mask is None:
        return None
    m = jnp.asarray(attention_mask)
    if m.ndim == 4:
        # TODO(synk): genuinely per-head (B, H, S, S) masks are not supported.
        assert m.shape[1] == 1, "per-head attention masks are not supported"
        m = m[:, 0]
    elif m.ndim == 2:
        m = m[None]
    assert m.ndim == 3 and m.shape[-2:] == (S, S) and m.shape[0] in (1, B)
    return m.astype(jnp.float32)


def bsarec_layer(x, attention_mask, params, *, n_heads, alpha, layer_norm_eps,
                 batch_block=8, out_dtype=None):
    B, S, D = x.shape
    assert D % n_heads == 0
    # Pass out_dtype=jnp.bfloat16 to halve output DMA if downstream tolerates it.
    out_dtype = out_dtype or x.dtype

    a = params["A"].astype(jnp.float32)        # (S, R) low-pass factor
    at = jnp.transpose(a)                      # (R, S), precomputed
    R = a.shape[1]

    mask = _normalize_mask(attention_mask, B, S)
    has_mask = mask is not None
    mask_batch = mask.shape[0] if has_mask else 0

    # Fused QKV weights/biases (one (D, 3D) matmul in-kernel).
    wqkv = jnp.concatenate(
        [params["wq"], params["wk"], params["wv"]], axis=1).astype(jnp.bfloat16)
    bqkv = jnp.concatenate(
        [params["bq"], params["bk"], params["bv"]], axis=1).astype(jnp.float32)
    wd = params["wd"].astype(jnp.bfloat16)

    # VMEM-aware block sizing (v7x: 64 MiB physical, cap scoped limit <= 48 MiB).
    vmem_cap = _vmem_capacity_bytes()
    budget = min(int(0.70 * vmem_cap), 96 * 2 ** 20)
    bb = _pick_batch_block(B, S, D, R, mask_batch, has_mask, batch_block, budget)
    grid = (B // bb,)
    est = _vmem_estimate(bb, S, D, R, mask_batch, has_mask)
    limit_cap = min(int(0.75 * vmem_cap), 96 * 2 ** 20)
    need = int(1.4 * est)
    vmem_limit = None if need <= 16 * 2 ** 20 else min(max(need, 32 * 2 ** 20),
                                                       limit_cap)

    x2d = x.reshape(B * S, D)                  # lane-dense 2-D slab
    kernel = functools.partial(
        bsarec_kernel, batch_block=bb, seq_len=S, n_heads=n_heads,
        alpha=float(alpha), layer_norm_eps=float(layer_norm_eps),
        has_mask=has_mask)

    operands = [x2d]
    if has_mask:
        operands.append(mask)
    operands += [a, at, wqkv, bqkv, wd, params["bd"],
                 params["ln_attn_g"], params["ln_attn_b"],
                 params["freq_beta"], params["ln_filt_g"], params["ln_filt_b"]]

    def _call(single_buffer_consts):
        const_kw = dict(pipeline_mode=pl.Buffered(1)) if single_buffer_consts else {}

        def const(shape):
            imap = {2: lambda i: (0, 0), 3: lambda i: (0, 0, 0)}[len(shape)]
            return pl.BlockSpec(shape, imap, **const_kw)

        in_specs = [pl.BlockSpec((bb * S, D), lambda i: (i, 0))]     # x slab
        if has_mask:
            if mask_batch == 1:
                in_specs.append(const((1, S, S)))                    # shared mask
            else:
                in_specs.append(pl.BlockSpec((bb, S, S), lambda i: (i, 0, 0)))
        in_specs += [const((S, R)), const((R, S)),                   # A, A^T
                     const((D, 3 * D)), const((1, 3 * D)),           # Wqkv, bqkv
                     const((D, D)), const((1, D)),                   # Wdense, bdense
                     const((1, D)), const((1, D)),                   # attn LN g/b
                     const((1, D)),                                  # freq beta
                     const((1, D)), const((1, D))]                   # filter LN g/b
        out_spec = pl.BlockSpec((bb * S, D), lambda i: (i, 0))

        return pl.pallas_call(
            kernel,
            out_shape=jax.ShapeDtypeStruct((B * S, D), out_dtype),
            grid=grid,
            in_specs=in_specs,
            out_specs=out_spec,
            scratch_shapes=[pltpu.VMEM((bb * S, D), jnp.float32)],   # ctx assembly
            compiler_params=pltpu.CompilerParams(
                dimension_semantics=("parallel",),
                vmem_limit_bytes=vmem_limit),
        )(*operands)

    try:
        out2d = _call(True)
    except Exception:
        # pipeline_mode=pl.Buffered(1) unsupported on this jax version; the
        # constants are then simply double-buffered (slightly more VMEM).
        out2d = _call(False)
    return out2d.reshape(B, S, D)


def init_params(key, hidden_size, seq_len, c):
    D = hidden_size
    ks = jax.random.split(key, 5)
    s = 0.02

    def w(k):  # store big matmul weights in bf16 (halves DMA, MXU-friendly)
        return (s * jax.random.normal(k, (D, D), jnp.float32)).astype(jnp.bfloat16)

    return {
        "wq": w(ks[0]), "bq": jnp.zeros((1, D), jnp.float32),
        "wk": w(ks[1]), "bk": jnp.zeros((1, D), jnp.float32),
        "wv": w(ks[2]), "bv": jnp.zeros((1, D), jnp.float32),
        "wd": w(ks[3]), "bd": jnp.zeros((1, D), jnp.float32),
        "ln_attn_g": jnp.ones((1, D), jnp.float32),
        "ln_attn_b": jnp.zeros((1, D), jnp.float32),
        "freq_beta": jax.random.normal(ks[4], (1, D), jnp.float32),
        "ln_filt_g": jnp.ones((1, D), jnp.float32),
        "ln_filt_b": jnp.zeros((1, D), jnp.float32),
        "A": make_lowpass_factor(seq_len, c),
    }


def bsarec_reference(x, attention_mask, params, *, n_heads, alpha,
                     layer_norm_eps, c):
    """Pure-JAX f32 reference matching the PyTorch module (eval mode)."""
    B, S, D = x.shape
    dh = D // n_heads
    f32 = lambda a: a.astype(jnp.float32)

    def ln(v, g, b, eps):
        m = jnp.mean(v, -1, keepdims=True)
        var = jnp.mean((v - m) ** 2, -1, keepdims=True)
        return (v - m) * jax.lax.rsqrt(var + eps) * g + b

    q = x @ f32(params["wq"]) + params["bq"]
    k = x @ f32(params["wk"]) + params["bk"]
    v = x @ f32(params["wv"]) + params["bv"]
    heads = lambda t: t.reshape(B, S, n_heads, dh).transpose(0, 2, 1, 3)
    qh, kh, vh = heads(q), heads(k), heads(v)
    scores = (qh @ kh.transpose(0, 1, 3, 2)) / math.sqrt(dh)
    if attention_mask is None:
        causal = jnp.tril(jnp.ones((S, S), jnp.float32))
        attention_mask = ((1.0 - causal) * -10000.0)[None, None]
    scores = scores + attention_mask
    probs = jax.nn.softmax(scores, axis=-1)
    ctx = (probs @ vh).transpose(0, 2, 1, 3).reshape(B, S, D)
    dense = ctx @ f32(params["wd"]) + params["bd"]
    gsp = ln(dense + x, params["ln_attn_g"], params["ln_attn_b"], layer_norm_eps)

    X = jnp.fft.rfft(x, axis=1, norm="ortho")
    X = X.at[:, c // 2 + 1:, :].set(0)
    low = jnp.fft.irfft(X, n=S, axis=1, norm="ortho")
    emb = low + params["freq_beta"] ** 2 * (x - low)
    dsp = ln(emb + x, params["ln_filt_g"], params["ln_filt_b"], 1e-12)
    return alpha * dsp + (1.0 - alpha) * gsp


if __name__ == "__main__":
    # Small shapes consistent with the module's forward.
    B, S, D = 2, 8, 32
    n_heads = 2
    c = 5                # FrequencyLayer cutoff -> keeps c//2+1 = 3 rfft bins
    alpha = 0.7
    layer_norm_eps = 1e-12

    key = jax.random.PRNGKey(0)
    k_x, k_p = jax.random.split(key)
    x = jax.random.normal(k_x, (B, S, D), jnp.float32)
    params = init_params(k_p, D, S, c)

    # Path 1: attention_mask=None -> causal mask generated in-kernel (iota).
    out = bsarec_layer(x, None, params, n_heads=n_heads, alpha=alpha,
                       layer_norm_eps=layer_norm_eps)
    jax.block_until_ready(out)
    assert out.shape == (B, S, D)
    ref = bsarec_reference(x, None, params, n_heads=n_heads, alpha=alpha,
                           layer_norm_eps=layer_norm_eps, c=c)
    err0 = float(jnp.max(jnp.abs(out - ref)))
    assert err0 < 1e-2, f"causal-path max abs error vs reference = {err0}"

    # Path 2: explicit batch-invariant additive mask (1, 1, S, S), DMA'd once.
    causal = jnp.tril(jnp.ones((S, S), jnp.float32))
    attention_mask = ((1.0 - causal) * -10000.0)[None, None]
    out_m = bsarec_layer(x, attention_mask, params, n_heads=n_heads, alpha=alpha,
                         layer_norm_eps=layer_norm_eps)
    jax.block_until_ready(out_m)
    ref_m = bsarec_reference(x, attention_mask, params, n_heads=n_heads,
                             alpha=alpha, layer_norm_eps=layer_norm_eps, c=c)
    err1 = float(jnp.max(jnp.abs(out_m - ref_m)))
    assert err1 < 1e-2, f"explicit-mask max abs error vs reference = {err1}"

    print("KERNEL_OK")
</pallas_src>

<mosaic_0001>
module attributes {stable_mosaic.version = 11 : i64} {
  func.func @bsarec_kernel(%arg0: i32, %arg1: memref<8x32xf32, #tpu.memory_space<vmem>>, %arg2: memref<8x8xf32, #tpu.memory_space<vmem>>, %arg3: memref<8x8xf32, #tpu.memory_space<vmem>>, %arg4: memref<32x96xbf16, #tpu.memory_space<vmem>>, %arg5: memref<1x96xf32, #tpu.memory_space<vmem>>, %arg6: memref<32x32xbf16, #tpu.memory_space<vmem>>, %arg7: memref<1x32xf32, #tpu.memory_space<vmem>>, %arg8: memref<1x32xf32, #tpu.memory_space<vmem>>, %arg9: memref<1x32xf32, #tpu.memory_space<vmem>>, %arg10: memref<1x32xf32, #tpu.memory_space<vmem>>, %arg11: memref<1x32xf32, #tpu.memory_space<vmem>>, %arg12: memref<1x32xf32, #tpu.memory_space<vmem>>, %arg13: memref<8x32xf32, #tpu.memory_space<vmem>>, %arg14: memref<8x32xf32, #tpu.memory_space<vmem>>) attributes {dimension_semantics = [#tpu.dimension_semantics<parallel>], iteration_bounds = array<i64: 2>, scalar_prefetch = 0 : i64, scratch_operands = 1 : i64, tpu.core_type = #tpu.core_type<tc>, window_params = [{transform_indices = @transform_0, window_bounds = array<i64: 8, 32>}, {pipeline_mode = #tpu.pipeline_mode<synchronous>, transform_indices = @transform_1, window_bounds = array<i64: 8, 8>}, {pipeline_mode = #tpu.pipeline_mode<synchronous>, transform_indices = @transform_2, window_bounds = array<i64: 8, 8>}, {pipeline_mode = #tpu.pipeline_mode<synchronous>, transform_indices = @transform_3, window_bounds = array<i64: 32, 96>}, {pipeline_mode = #tpu.pipeline_mode<synchronous>, transform_indices = @transform_4, window_bounds = array<i64: 1, 96>}, {pipeline_mode = #tpu.pipeline_mode<synchronous>, transform_indices = @transform_5, window_bounds = array<i64: 32, 32>}, {pipeline_mode = #tpu.pipeline_mode<synchronous>, transform_indices = @transform_6, window_bounds = array<i64: 1, 32>}, {pipeline_mode = #tpu.pipeline_mode<synchronous>, transform_indices = @transform_7, window_bounds = array<i64: 1, 32>}, {pipeline_mode = #tpu.pipeline_mode<synchronous>, transform_indices = @transform_8, window_bounds = array<i64: 1, 32>}, {pipeline_mode = #tpu.pipeline_mode<synchronous>, transform_indices = @transform_9, window_bounds = array<i64: 1, 32>}, {pipeline_mode = #tpu.pipeline_mode<synchronous>, transform_indices = @transform_10, window_bounds = array<i64: 1, 32>}, {pipeline_mode = #tpu.pipeline_mode<synchronous>, transform_indices = @transform_11, window_bounds = array<i64: 1, 32>}, {transform_indices = @transform_12, window_bounds = array<i64: 8, 32>}]} {
    %c0 = arith.constant 0 : index
    %c0_0 = arith.constant 0 : index
    %0 = vector.load %arg1[%c0, %c0_0] : memref<8x32xf32, #tpu.memory_space<vmem>>, vector<8x32xf32>
    %1 = arith.truncf %0 : vector<8x32xf32> to vector<8x32xbf16>
    %c0_1 = arith.constant 0 : index
    %c0_2 = arith.constant 0 : index
    %2 = vector.load %arg4[%c0_1, %c0_2] : memref<32x96xbf16, #tpu.memory_space<vmem>>, vector<32x96xbf16>
    %cst = arith.constant dense<0.000000e+00> : vector<8x96xf32>
    %3 = tpu.matmul %1, %2, %cst {dimension_numbers = #tpu.dot_dimension_numbers<[1], [0], [0], [1], [0, 0, 1, 1], [], []>} : vector<8x32xbf16>, vector<32x96xbf16>, vector<8x96xf32> -> vector<8x96xf32>
    %c0_3 = arith.constant 0 : index
    %c0_4 = arith.constant 0 : index
    %4 = vector.load %arg5[%c0_3, %c0_4] : memref<1x96xf32, #tpu.memory_space<vmem>>, vector<1x96xf32>
    %5 = vector.broadcast %4 : vector<1x96xf32> to vector<8x96xf32>
    %6 = arith.addf %3, %5 : vector<8x96xf32>
    %7 = arith.truncf %6 : vector<8x96xf32> to vector<8x96xbf16>
    %8 = vector.extract_strided_slice %7 {offsets = [0, 0], sizes = [8, 32], strides = [1, 1]} : vector<8x96xbf16> to vector<8x32xbf16>
    %9 = vector.shape_cast %8 : vector<8x32xbf16> to vector<1x8x32xbf16>
    %10 = vector.extract_strided_slice %7 {offsets = [0, 32], sizes = [8, 32], strides = [1, 1]} : vector<8x96xbf16> to vector<8x32xbf16>
    %11 = vector.shape_cast %10 : vector<8x32xbf16> to vector<1x8x32xbf16>
    %12 = vector.extract_strided_slice %7 {offsets = [0, 64], sizes = [8, 32], strides = [1, 1]} : vector<8x96xbf16> to vector<8x32xbf16>
    %13 = vector.shape_cast %12 : vector<8x32xbf16> to vector<1x8x32xbf16>
    %14 = tpu.iota {dimensions = array<i32: 0>} : vector<8x8xi32>
    %15 = tpu.iota {dimensions = array<i32: 1>} : vector<8x8xi32>
    %16 = arith.cmpi sle, %15, %14 : vector<8x8xi32>
    %cst_5 = arith.constant 0.000000e+00 : f32
    %cst_6 = arith.constant -1.000000e+04 : f32
    %17 = vector.broadcast %cst_5 : f32 to vector<8x8xf32>
    %18 = vector.broadcast %cst_6 : f32 to vector<8x8xf32>
    %19 = arith.select %16, %17, %18 : vector<8x8xi1>, vector<8x8xf32>
    %20 = vector.shape_cast %19 : vector<8x8xf32> to vector<1x8x8xf32>
    %21 = vector.extract_strided_slice %9 {offsets = [0, 0, 0], sizes = [1, 8, 16], strides = [1, 1, 1]} : vector<1x8x32xbf16> to vector<1x8x16xbf16>
    %22 = vector.extract_strided_slice %11 {offsets = [0, 0, 0], sizes = [1, 8, 16], strides = [1, 1, 1]} : vector<1x8x32xbf16> to vector<1x8x16xbf16>
    "tpu.trace_start"() <{level = 10 : i32, message = "bqd,bkd->bqk"}> : () -> ()
    %cst_7 = arith.constant dense<0.000000e+00> : vector<1x8x8xf32>
    %23 = tpu.matmul %21, %22, %cst_7 {dimension_numbers = #tpu.dot_dimension_numbers<[2], [2], [1], [1], [0, 0, 0, 1, 1, 1], [0], [0]>} : vector<1x8x16xbf16>, vector<1x8x16xbf16>, vector<1x8x8xf32> -> vector<1x8x8xf32>
    "tpu.trace_stop"() : () -> ()
    %cst_8 = arith.constant 2.500000e-01 : f32
    %24 = vector.broadcast %cst_8 : f32 to vector<1x8x8xf32>
    %25 = arith.mulf %23, %24 : vector<1x8x8xf32>
    %26 = arith.addf %25, %20 : vector<1x8x8xf32>
    %cst_9 = arith.constant dense<0xFF800000> : vector<1x8xf32>
    %27 = vector.multi_reduction <maximumf>, %26, %cst_9 [2] : vector<1x8x8xf32> to vector<1x8xf32>
    %28 = vector.shape_cast %27 : vector<1x8xf32> to vector<1x8x1xf32>
    %29 = vector.broadcast %28 : vector<1x8x1xf32> to vector<1x8x8xf32>
    %30 = arith.subf %26, %29 : vector<1x8x8xf32>
    %31 = math.exp %30 : vector<1x8x8xf32>
    %cst_10 = arith.constant dense<0.000000e+00> : vector<1x8xf32>
    %32 = vector.multi_reduction <add>, %31, %cst_10 [2] : vector<1x8x8xf32> to vector<1x8xf32>
    %33 = vector.shape_cast %32 : vector<1x8xf32> to vector<1x8x1xf32>
    %34 = tpu.reciprocal %33 {approx = true} : vector<1x8x1xf32> -> vector<1x8x1xf32>
    %35 = vector.broadcast %34 : vector<1x8x1xf32> to vector<1x8x8xf32>
    %36 = arith.mulf %31, %35 : vector<1x8x8xf32>
    %37 = arith.truncf %36 : vector<1x8x8xf32> to vector<1x8x8xbf16>
    %38 = vector.extract_strided_slice %13 {offsets = [0, 0, 0], sizes = [1, 8, 16], strides = [1, 1, 1]} : vector<1x8x32xbf16> to vector<1x8x16xbf16>
    "tpu.trace_start"() <{level = 10 : i32, message = "bqk,bkd->bqd"}> : () -> ()
    %cst_11 = arith.constant dense<0.000000e+00> : vector<1x8x16xf32>
    %39 = tpu.matmul %37, %38, %cst_11 {dimension_numbers = #tpu.dot_dimension_numbers<[2], [1], [1], [2], [0, 0, 0, 1, 1, 2], [0], [0]>} : vector<1x8x8xbf16>, vector<1x8x16xbf16>, vector<1x8x16xf32> -> vector<1x8x16xf32>
    "tpu.trace_stop"() : () -> ()
    %40 = vector.shape_cast %39 : vector<1x8x16xf32> to vector<8x16xf32>
    %c0_12 = arith.constant 0 : index
    %c0_13 = arith.constant 0 : index
    %41 = vector.load %arg14[%c0_12, %c0_13] : memref<8x32xf32, #tpu.memory_space<vmem>>, vector<8x16xf32>
    tpu.vector_store %arg14[%c0_12, %c0_13], %40 {strides = array<i32>} : memref<8x32xf32, #tpu.memory_space<vmem>>, vector<8x16xf32>,
    %42 = vector.extract_strided_slice %9 {offsets = [0, 0, 16], sizes = [1, 8, 16], strides = [1, 1, 1]} : vector<1x8x32xbf16> to vector<1x8x16xbf16>
    %43 = vector.extract_strided_slice %11 {offsets = [0, 0, 16], sizes = [1, 8, 16], strides = [1, 1, 1]} : vector<1x8x32xbf16> to vector<1x8x16xbf16>
    "tpu.trace_start"() <{level = 10 : i32, message = "bqd,bkd->bqk"}> : () -> ()
    %cst_14 = arith.constant dense<0.000000e+00> : vector<1x8x8xf32>
    %44 = tpu.matmul %42, %43, %cst_14 {dimension_numbers = #tpu.dot_dimension_numbers<[2], [2], [1], [1], [0, 0, 0, 1, 1, 1], [0], [0]>} : vector<1x8x16xbf16>, vector<1x8x16xbf16>, vector<1x8x8xf32> -> vector<1x8x8xf32>
    "tpu.trace_stop"() : () -> ()
    %cst_15 = arith.constant 2.500000e-01 : f32
    %45 = vector.broadcast %cst_15 : f32 to vector<1x8x8xf32>
    %46 = arith.mulf %44, %45 : vector<1x8x8xf32>
    %47 = arith.addf %46, %20 : vector<1x8x8xf32>
    %cst_16 = arith.constant dense<0xFF800000> : vector<1x8xf32>
    %48 = vector.multi_reduction <maximumf>, %47, %cst_16 [2] : vector<1x8x8xf32> to vector<1x8xf32>
    %49 = vector.shape_cast %48 : vector<1x8xf32> to vector<1x8x1xf32>
    %50 = vector.broadcast %49 : vector<1x8x1xf32> to vector<1x8x8xf32>
    %51 = arith.subf %47, %50 : vector<1x8x8xf32>
    %52 = math.exp %51 : vector<1x8x8xf32>
    %cst_17 = arith.constant dense<0.000000e+00> : vector<1x8xf32>
    %53 = vector.multi_reduction <add>, %52, %cst_17 [2] : vector<1x8x8xf32> to vector<1x8xf32>
    %54 = vector.shape_cast %53 : vector<1x8xf32> to vector<1x8x1xf32>
    %55 = tpu.reciprocal %54 {approx = true} : vector<1x8x1xf32> -> vector<1x8x1xf32>
    %56 = vector.broadcast %55 : vector<1x8x1xf32> to vector<1x8x8xf32>
    %57 = arith.mulf %52, %56 : vector<1x8x8xf32>
    %58 = arith.truncf %57 : vector<1x8x8xf32> to vector<1x8x8xbf16>
    %59 = vector.extract_strided_slice %13 {offsets = [0, 0, 16], sizes = [1, 8, 16], strides = [1, 1, 1]} : vector<1x8x32xbf16> to vector<1x8x16xbf16>
    "tpu.trace_start"() <{level = 10 : i32, message = "bqk,bkd->bqd"}> : () -> ()
    %cst_18 = arith.constant dense<0.000000e+00> : vector<1x8x16xf32>
    %60 = tpu.matmul %58, %59, %cst_18 {dimension_numbers = #tpu.dot_dimension_numbers<[2], [1], [1], [2], [0, 0, 0, 1, 1, 2], [0], [0]>} : vector<1x8x8xbf16>, vector<1x8x16xbf16>, vector<1x8x16xf32> -> vector<1x8x16xf32>
    "tpu.trace_stop"() : () -> ()
    %61 = vector.shape_cast %60 : vector<1x8x16xf32> to vector<8x16xf32>
    %c0_19 = arith.constant 0 : index
    %c16 = arith.constant 16 : index
    %62 = vector.load %arg14[%c0_19, %c16] : memref<8x32xf32, #tpu.memory_space<vmem>>, vector<8x16xf32>
    tpu.vector_store %arg14[%c0_19, %c16], %61 {strides = array<i32>} : memref<8x32xf32, #tpu.memory_space<vmem>>, vector<8x16xf32>,
    %c0_20 = arith.constant 0 : index
    %c0_21 = arith.constant 0 : index
    %63 = vector.load %arg14[%c0_20, %c0_21] : memref<8x32xf32, #tpu.memory_space<vmem>>, vector<8x32xf32>
    %64 = arith.truncf %63 : vector<8x32xf32> to vector<8x32xbf16>
    %c0_22 = arith.constant 0 : index
    %c0_23 = arith.constant 0 : index
    %65 = vector.load %arg6[%c0_22, %c0_23] : memref<32x32xbf16, #tpu.memory_space<vmem>>, vector<32x32xbf16>
    %cst_24 = arith.constant dense<0.000000e+00> : vector<8x32xf32>
    %66 = tpu.matmul %64, %65, %cst_24 {dimension_numbers = #tpu.dot_dimension_numbers<[1], [0], [0], [1], [0, 0, 1, 1], [], []>} : vector<8x32xbf16>, vector<32x32xbf16>, vector<8x32xf32> -> vector<8x32xf32>
    %c0_25 = arith.constant 0 : index
    %c0_26 = arith.constant 0 : index
    %67 = vector.load %arg7[%c0_25, %c0_26] : memref<1x32xf32, #tpu.memory_space<vmem>>, vector<1x32xf32>
    %68 = vector.broadcast %67 : vector<1x32xf32> to vector<8x32xf32>
    %69 = arith.addf %66, %68 : vector<8x32xf32>
    %70 = arith.addf %69, %0 : vector<8x32xf32>
    %c0_27 = arith.constant 0 : index
    %c0_28 = arith.constant 0 : index
    %71 = vector.load %arg8[%c0_27, %c0_28] : memref<1x32xf32, #tpu.memory_space<vmem>>, vector<1x32xf32>
    %c0_29 = arith.constant 0 : index
    %c0_30 = arith.constant 0 : index
    %72 = vector.load %arg9[%c0_29, %c0_30] : memref<1x32xf32, #tpu.memory_space<vmem>>, vector<1x32xf32>
    %cst_31 = arith.constant dense<0.000000e+00> : vector<8xf32>
    %73 = vector.multi_reduction <add>, %70, %cst_31 [1] : vector<8x32xf32> to vector<8xf32>
    %74 = vector.shape_cast %73 : vector<8xf32> to vector<8x1xf32>
    %cst_32 = arith.constant 3.200000e+01 : f32
    %75 = vector.broadcast %cst_32 : f32 to vector<8x1xf32>
    %76 = arith.divf %74, %75 : vector<8x1xf32>
    %77 = vector.broadcast %76 : vector<8x1xf32> to vector<8x32xf32>
    %78 = arith.subf %70, %77 : vector<8x32xf32>
    %79 = arith.mulf %78, %78 : vector<8x32xf32>
    %cst_33 = arith.constant dense<0.000000e+00> : vector<8xf32>
    %80 = vector.multi_reduction <add>, %79, %cst_33 [1] : vector<8x32xf32> to vector<8xf32>
    %81 = vector.shape_cast %80 : vector<8xf32> to vector<8x1xf32>
    %cst_34 = arith.constant 3.200000e+01 : f32
    %82 = vector.broadcast %cst_34 : f32 to vector<8x1xf32>
    %83 = arith.divf %81, %82 : vector<8x1xf32>
    %84 = vector.broadcast %76 : vector<8x1xf32> to vector<8x32xf32>
    %85 = arith.subf %70, %84 : vector<8x32xf32>
    %cst_35 = arith.constant 9.99999996E-13 : f32
    %86 = vector.broadcast %cst_35 : f32 to vector<8x1xf32>
    %87 = arith.addf %83, %86 : vector<8x1xf32>
    %88 = math.rsqrt %87 : vector<8x1xf32>
    %89 = vector.broadcast %88 : vector<8x1xf32> to vector<8x32xf32>
    %90 = arith.mulf %85, %89 : vector<8x32xf32>
    %91 = vector.broadcast %71 : vector<1x32xf32> to vector<8x32xf32>
    %92 = arith.mulf %90, %91 : vector<8x32xf32>
    %93 = vector.broadcast %72 : vector<1x32xf32> to vector<8x32xf32>
    %94 = arith.addf %92, %93 : vector<8x32xf32>
    %95 = vector.shape_cast %0 : vector<8x32xf32> to vector<1x8x32xf32>
    %c0_36 = arith.constant 0 : index
    %c0_37 = arith.constant 0 : index
    %96 = vector.load %arg3[%c0_36, %c0_37] : memref<8x8xf32, #tpu.memory_space<vmem>>, vector<8x8xf32>
    %97 = vector.shape_cast %96 : vector<8x8xf32> to vector<1x8x8xf32>
    %c0_38 = arith.constant 0 : index
    %c0_39 = arith.constant 0 : index
    %98 = vector.load %arg2[%c0_38, %c0_39] : memref<8x8xf32, #tpu.memory_space<vmem>>, vector<8x8xf32>
    %99 = vector.shape_cast %98 : vector<8x8xf32> to vector<1x8x8xf32>
    "tpu.trace_start"() <{level = 10 : i32, message = "brs,bsd->brd"}> : () -> ()
    %cst_40 = arith.constant dense<0.000000e+00> : vector<1x8x32xf32>
    %100 = tpu.matmul %97, %95, %cst_40 {dimension_numbers = #tpu.dot_dimension_numbers<[2], [1], [1], [2], [0, 0, 0, 1, 1, 2], [0], [0]>} : vector<1x8x8xf32>, vector<1x8x32xf32>, vector<1x8x32xf32> -> vector<1x8x32xf32>
    "tpu.trace_stop"() : () -> ()
    "tpu.trace_start"() <{level = 10 : i32, message = "bsr,brd->bsd"}> : () -> ()
    %cst_41 = arith.constant dense<0.000000e+00> : vector<1x8x32xf32>
    %101 = tpu.matmul %99, %100, %cst_41 {dimension_numbers = #tpu.dot_dimension_numbers<[2], [1], [1], [2], [0, 0, 0, 1, 1, 2], [0], [0]>} : vector<1x8x8xf32>, vector<1x8x32xf32>, vector<1x8x32xf32> -> vector<1x8x32xf32>
    "tpu.trace_stop"() : () -> ()
    %102 = vector.shape_cast %101 : vector<1x8x32xf32> to vector<8x32xf32>
    %c0_42 = arith.constant 0 : index
    %c0_43 = arith.constant 0 : index
    %103 = vector.load %arg10[%c0_42, %c0_43] : memref<1x32xf32, #tpu.memory_space<vmem>>, vector<1x32xf32>
    %c0_44 = arith.constant 0 : index
    %c0_45 = arith.constant 0 : index
    %104 = vector.load %arg10[%c0_44, %c0_45] : memref<1x32xf32, #tpu.memory_space<vmem>>, vector<1x32xf32>
    %105 = arith.mulf %103, %104 : vector<1x32xf32>
    %106 = arith.subf %0, %102 : vector<8x32xf32>
    %107 = vector.broadcast %105 : vector<1x32xf32> to vector<8x32xf32>
    %108 = arith.mulf %107, %106 : vector<8x32xf32>
    %109 = arith.addf %102, %108 : vector<8x32xf32>
    %110 = arith.addf %109, %0 : vector<8x32xf32>
    %c0_46 = arith.constant 0 : index
    %c0_47 = arith.constant 0 : index
    %111 = vector.load %arg11[%c0_46, %c0_47] : memref<1x32xf32, #tpu.memory_space<vmem>>, vector<1x32xf32>
    %c0_48 = arith.constant 0 : index
    %c0_49 = arith.constant 0 : index
    %112 = vector.load %arg12[%c0_48, %c0_49] : memref<1x32xf32, #tpu.memory_space<vmem>>, vector<1x32xf32>
    %cst_50 = arith.constant dense<0.000000e+00> : vector<8xf32>
    %113 = vector.multi_reduction <add>, %110, %cst_50 [1] : vector<8x32xf32> to vector<8xf32>
    %114 = vector.shape_cast %113 : vector<8xf32> to vector<8x1xf32>
    %cst_51 = arith.constant 3.200000e+01 : f32
    %115 = vector.broadcast %cst_51 : f32 to vector<8x1xf32>
    %116 = arith.divf %114, %115 : vector<8x1xf32>
    %117 = vector.broadcast %116 : vector<8x1xf32> to vector<8x32xf32>
    %118 = arith.subf %110, %117 : vector<8x32xf32>
    %119 = arith.mulf %118, %118 : vector<8x32xf32>
    %cst_52 = arith.constant dense<0.000000e+00> : vector<8xf32>
    %120 = vector.multi_reduction <add>, %119, %cst_52 [1] : vector<8x32xf32> to vector<8xf32>
    %121 = vector.shape_cast %120 : vector<8xf32> to vector<8x1xf32>
    %cst_53 = arith.constant 3.200000e+01 : f32
    %122 = vector.broadcast %cst_53 : f32 to vector<8x1xf32>
    %123 = arith.divf %121, %122 : vector<8x1xf32>
    %124 = vector.broadcast %116 : vector<8x1xf32> to vector<8x32xf32>
    %125 = arith.subf %110, %124 : vector<8x32xf32>
    %cst_54 = arith.constant 9.99999996E-13 : f32
    %126 = vector.broadcast %cst_54 : f32 to vector<8x1xf32>
    %127 = arith.addf %123, %126 : vector<8x1xf32>
    %128 = math.rsqrt %127 : vector<8x1xf32>
    %129 = vector.broadcast %128 : vector<8x1xf32> to vector<8x32xf32>
    %130 = arith.mulf %125, %129 : vector<8x32xf32>
    %131 = vector.broadcast %111 : vector<1x32xf32> to vector<8x32xf32>
    %132 = arith.mulf %130, %131 : vector<8x32xf32>
    %133 = vector.broadcast %112 : vector<1x32xf32> to vector<8x32xf32>
    %134 = arith.addf %132, %133 : vector<8x32xf32>
    %cst_55 = arith.constant 0.699999988 : f32
    %135 = vector.broadcast %cst_55 : f32 to vector<8x32xf32>
    %136 = arith.mulf %135, %134 : vector<8x32xf32>
    %cst_56 = arith.constant 3.000000e-01 : f32
    %137 = vector.broadcast %cst_56 : f32 to vector<8x32xf32>
    %138 = arith.mulf %137, %94 : vector<8x32xf32>
    %139 = arith.addf %136, %138 : vector<8x32xf32>
    %c0_57 = arith.constant 0 : index
    %c0_58 = arith.constant 0 : index
    %140 = vector.load %arg13[%c0_57, %c0_58] : memref<8x32xf32, #tpu.memory_space<vmem>>, vector<8x32xf32>
    tpu.vector_store %arg13[%c0_57, %c0_58], %139 {strides = array<i32>} : memref<8x32xf32, #tpu.memory_space<vmem>>, vector<8x32xf32>,
    return
  }
  func.func @transform_0(%arg0: i32) -> (i32, i32) {
    %c0_i32 = arith.constant 0 : i32
    %c0_i32_0 = arith.constant 0 : i32
    return %arg0, %c0_i32 : i32, i32
  }
  func.func @transform_1(%arg0: i32) -> (i32, i32) {
    %c0_i32 = arith.constant 0 : i32
    %c0_i32_0 = arith.constant 0 : i32
    %c0_i32_1 = arith.constant 0 : i32
    return %c0_i32, %c0_i32_0 : i32, i32
  }
  func.func @transform_2(%arg0: i32) -> (i32, i32) {
    %c0_i32 = arith.constant 0 : i32
    %c0_i32_0 = arith.constant 0 : i32
    %c0_i32_1 = arith.constant 0 : i32
    return %c0_i32, %c0_i32_0 : i32, i32
  }
  func.func @transform_3(%arg0: i32) -> (i32, i32) {
    %c0_i32 = arith.constant 0 : i32
    %c0_i32_0 = arith.constant 0 : i32
    %c0_i32_1 = arith.constant 0 : i32
    return %c0_i32, %c0_i32_0 : i32, i32
  }
  func.func @transform_4(%arg0: i32) -> (i32, i32) {
    %c0_i32 = arith.constant 0 : i32
    %c0_i32_0 = arith.constant 0 : i32
    %c0_i32_1 = arith.constant 0 : i32
    return %c0_i32, %c0_i32_0 : i32, i32
  }
  func.func @transform_5(%arg0: i32) -> (i32, i32) {
    %c0_i32 = arith.constant 0 : i32
    %c0_i32_0 = arith.constant 0 : i32
    %c0_i32_1 = arith.constant 0 : i32
    return %c0_i32, %c0_i32_0 : i32, i32
  }
  func.func @transform_6(%arg0: i32) -> (i32, i32) {
    %c0_i32 = arith.constant 0 : i32
    %c0_i32_0 = arith.constant 0 : i32
    %c0_i32_1 = arith.constant 0 : i32
    return %c0_i32, %c0_i32_0 : i32, i32
  }
  func.func @transform_7(%arg0: i32) -> (i32, i32) {
    %c0_i32 = arith.constant 0 : i32
    %c0_i32_0 = arith.constant 0 : i32
    %c0_i32_1 = arith.constant 0 : i32
    return %c0_i32, %c0_i32_0 : i32, i32
  }
  func.func @transform_8(%arg0: i32) -> (i32, i32) {
    %c0_i32 = arith.constant 0 : i32
    %c0_i32_0 = arith.constant 0 : i32
    %c0_i32_1 = arith.constant 0 : i32
    return %c0_i32, %c0_i32_0 : i32, i32
  }
  func.func @transform_9(%arg0: i32) -> (i32, i32) {
    %c0_i32 = arith.constant 0 : i32
    %c0_i32_0 = arith.constant 0 : i32
    %c0_i32_1 = arith.constant 0 : i32
    return %c0_i32, %c0_i32_0 : i32, i32
  }
  func.func @transform_10(%arg0: i32) -> (i32, i32) {
    %c0_i32 = arith.constant 0 : i32
    %c0_i32_0 = arith.constant 0 : i32
    %c0_i32_1 = arith.constant 0 : i32
    return %c0_i32, %c0_i32_0 : i32, i32
  }
  func.func @transform_11(%arg0: i32) -> (i32, i32) {
    %c0_i32 = arith.constant 0 : i32
    %c0_i32_0 = arith.constant 0 : i32
    %c0_i32_1 = arith.constant 0 : i32
    return %c0_i32, %c0_i32_0 : i32, i32
  }
  func.func @transform_12(%arg0: i32) -> (i32, i32) {
    %c0_i32 = arith.constant 0 : i32
    %c0_i32_0 = arith.constant 0 : i32
    return %arg0, %c0_i32 : i32, i32
  }
}

module attributes {stable_mosaic.version = 11 : i64} {
  func.func @bsarec_kernel(%arg0: i32, %arg1: memref<8x32xf32, #tpu.memory_space<vmem>>, %arg2: memref<8x8xf32, #tpu.memory_space<vmem>>, %arg3: memref<8x8xf32, #tpu.memory_space<vmem>>, %arg4: memref<32x96xbf16, #tpu.memory_space<vmem>>, %arg5: memref<1x96xf32, #tpu.memory_space<vmem>>, %arg6: memref<32x32xbf16, #tpu.memory_space<vmem>>, %arg7: memref<1x32xf32, #tpu.memory_space<vmem>>, %arg8: memref<1x32xf32, #tpu.memory_space<vmem>>, %arg9: memref<1x32xf32, #tpu.memory_space<vmem>>, %arg10: memref<1x32xf32, #tpu.memory_space<vmem>>, %arg11: memref<1x32xf32, #tpu.memory_space<vmem>>, %arg12: memref<1x32xf32, #tpu.memory_space<vmem>>, %arg13: memref<8x32xf32, #tpu.memory_space<vmem>>, %arg14: memref<8x32xf32, #tpu.memory_space<vmem>>) attributes {dimension_semantics = [#tpu.dimension_semantics<parallel>], iteration_bounds = array<i64: 2>, scalar_prefetch = 0 : i64, scratch_operands = 1 : i64, tpu.core_type = #tpu.core_type<tc>, window_params = [{transform_indices = @transform_0, window_bounds = array<i64: 8, 32>}, {pipeline_mode = #tpu.pipeline_mode<synchronous>, transform_indices = @transform_1, window_bounds = array<i64: 8, 8>}, {pipeline_mode = #tpu.pipeline_mode<synchronous>, transform_indices = @transform_2, window_bounds = array<i64: 8, 8>}, {pipeline_mode = #tpu.pipeline_mode<synchronous>, transform_indices = @transform_3, window_bounds = array<i64: 32, 96>}, {pipeline_mode = #tpu.pipeline_mode<synchronous>, transform_indices = @transform_4, window_bounds = array<i64: 1, 96>}, {pipeline_mode = #tpu.pipeline_mode<synchronous>, transform_indices = @transform_5, window_bounds = array<i64: 32, 32>}, {pipeline_mode = #tpu.pipeline_mode<synchronous>, transform_indices = @transform_6, window_bounds = array<i64: 1, 32>}, {pipeline_mode = #tpu.pipeline_mode<synchronous>, transform_indices = @transform_7, window_bounds = array<i64: 1, 32>}, {pipeline_mode = #tpu.pipeline_mode<synchronous>, transform_indices = @transform_8, window_bounds = array<i64: 1, 32>}, {pipeline_mode = #tpu.pipeline_mode<synchronous>, transform_indices = @transform_9, window_bounds = array<i64: 1, 32>}, {pipeline_mode = #tpu.pipeline_mode<synchronous>, transform_indices = @transform_10, window_bounds = array<i64: 1, 32>}, {pipeline_mode = #tpu.pipeline_mode<synchronous>, transform_indices = @transform_11, window_bounds = array<i64: 1, 32>}, {transform_indices = @transform_12, window_bounds = array<i64: 8, 32>}]} {
    %c0 = arith.constant 0 : index
    %c0_0 = arith.constant 0 : index
    %0 = vector.load %arg1[%c0, %c0_0] : memref<8x32xf32, #tpu.memory_space<vmem>>, vector<8x32xf32>
    %1 = arith.truncf %0 : vector<8x32xf32> to vector<8x32xbf16>
    %c0_1 = arith.constant 0 : index
    %c0_2 = arith.constant 0 : index
    %2 = vector.load %arg4[%c0_1, %c0_2] : memref<32x96xbf16, #tpu.memory_space<vmem>>, vector<32x96xbf16>
    %cst = arith.constant dense<0.000000e+00> : vector<8x96xf32>
    %3 = tpu.matmul %1, %2, %cst {dimension_numbers = #tpu.dot_dimension_numbers<[1], [0], [0], [1], [0, 0, 1, 1], [], []>} : vector<8x32xbf16>, vector<32x96xbf16>, vector<8x96xf32> -> vector<8x96xf32>
    %c0_3 = arith.constant 0 : index
    %c0_4 = arith.constant 0 : index
    %4 = vector.load %arg5[%c0_3, %c0_4] : memref<1x96xf32, #tpu.memory_space<vmem>>, vector<1x96xf32>
    %5 = vector.broadcast %4 : vector<1x96xf32> to vector<8x96xf32>
    %6 = arith.addf %3, %5 : vector<8x96xf32>
    %7 = arith.truncf %6 : vector<8x96xf32> to vector<8x96xbf16>
    %8 = vector.extract_strided_slice %7 {offsets = [0, 0], sizes = [8, 32], strides = [1, 1]} : vector<8x96xbf16> to vector<8x32xbf16>
    %9 = vector.shape_cast %8 : vector<8x32xbf16> to vector<1x8x32xbf16>
    %10 = vector.extract_strided_slice %7 {offsets = [0, 32], sizes = [8, 32], strides = [1, 1]} : vector<8x96xbf16> to vector<8x32xbf16>
    %11 = vector.shape_cast %10 : vector<8x32xbf16> to vector<1x8x32xbf16>
    %12 = vector.extract_strided_slice %7 {offsets = [0, 64], sizes = [8, 32], strides = [1, 1]} : vector<8x96xbf16> to vector<8x32xbf16>
    %13 = vector.shape_cast %12 : vector<8x32xbf16> to vector<1x8x32xbf16>
    %14 = tpu.iota {dimensions = array<i32: 0>} : vector<8x8xi32>
    %15 = tpu.iota {dimensions = array<i32: 1>} : vector<8x8xi32>
    %16 = arith.cmpi sle, %15, %14 : vector<8x8xi32>
    %cst_5 = arith.constant 0.000000e+00 : f32
    %cst_6 = arith.constant -1.000000e+04 : f32
    %17 = vector.broadcast %cst_5 : f32 to vector<8x8xf32>
    %18 = vector.broadcast %cst_6 : f32 to vector<8x8xf32>
    %19 = arith.select %16, %17, %18 : vector<8x8xi1>, vector<8x8xf32>
    %20 = vector.shape_cast %19 : vector<8x8xf32> to vector<1x8x8xf32>
    %21 = vector.extract_strided_slice %9 {offsets = [0, 0, 0], sizes = [1, 8, 16], strides = [1, 1, 1]} : vector<1x8x32xbf16> to vector<1x8x16xbf16>
    %22 = vector.extract_strided_slice %11 {offsets = [0, 0, 0], sizes = [1, 8, 16], strides = [1, 1, 1]} : vector<1x8x32xbf16> to vector<1x8x16xbf16>
    "tpu.trace_start"() <{level = 10 : i32, message = "bqd,bkd->bqk"}> : () -> ()
    %cst_7 = arith.constant dense<0.000000e+00> : vector<1x8x8xf32>
    %23 = tpu.matmul %21, %22, %cst_7 {dimension_numbers = #tpu.dot_dimension_numbers<[2], [2], [1], [1], [0, 0, 0, 1, 1, 1], [0], [0]>} : vector<1x8x16xbf16>, vector<1x8x16xbf16>, vector<1x8x8xf32> -> vector<1x8x8xf32>
    "tpu.trace_stop"() : () -> ()
    %cst_8 = arith.constant 2.500000e-01 : f32
    %24 = vector.broadcast %cst_8 : f32 to vector<1x8x8xf32>
    %25 = arith.mulf %23, %24 : vector<1x8x8xf32>
    %26 = arith.addf %25, %20 : vector<1x8x8xf32>
    %cst_9 = arith.constant dense<0xFF800000> : vector<1x8xf32>
    %27 = vector.multi_reduction <maximumf>, %26, %cst_9 [2] : vector<1x8x8xf32> to vector<1x8xf32>
    %28 = vector.shape_cast %27 : vector<1x8xf32> to vector<1x8x1xf32>
    %29 = vector.broadcast %28 : vector<1x8x1xf32> to vector<1x8x8xf32>
    %30 = arith.subf %26, %29 : vector<1x8x8xf32>
    %31 = math.exp %30 : vector<1x8x8xf32>
    %cst_10 = arith.constant dense<0.000000e+00> : vector<1x8xf32>
    %32 = vector.multi_reduction <add>, %31, %cst_10 [2] : vector<1x8x8xf32> to vector<1x8xf32>
    %33 = vector.shape_cast %32 : vector<1x8xf32> to vector<1x8x1xf32>
    %34 = tpu.reciprocal %33 {approx = true} : vector<1x8x1xf32> -> vector<1x8x1xf32>
    %35 = vector.broadcast %34 : vector<1x8x1xf32> to vector<1x8x8xf32>
    %36 = arith.mulf %31, %35 : vector<1x8x8xf32>
    %37 = arith.truncf %36 : vector<1x8x8xf32> to vector<1x8x8xbf16>
    %38 = vector.extract_strided_slice %13 {offsets = [0, 0, 0], sizes = [1, 8, 16], strides = [1, 1, 1]} : vector<1x8x32xbf16> to vector<1x8x16xbf16>
    "tpu.trace_start"() <{level = 10 : i32, message = "bqk,bkd->bqd"}> : () -> ()
    %cst_11 = arith.constant dense<0.000000e+00> : vector<1x8x16xf32>
    %39 = tpu.matmul %37, %38, %cst_11 {dimension_numbers = #tpu.dot_dimension_numbers<[2], [1], [1], [2], [0, 0, 0, 1, 1, 2], [0], [0]>} : vector<1x8x8xbf16>, vector<1x8x16xbf16>, vector<1x8x16xf32> -> vector<1x8x16xf32>
    "tpu.trace_stop"() : () -> ()
    %40 = vector.shape_cast %39 : vector<1x8x16xf32> to vector<8x16xf32>
    %c0_12 = arith.constant 0 : index
    %c0_13 = arith.constant 0 : index
    %41 = vector.load %arg14[%c0_12, %c0_13] : memref<8x32xf32, #tpu.memory_space<vmem>>, vector<8x16xf32>
    tpu.vector_store %arg14[%c0_12, %c0_13], %40 {strides = array<i32>} : memref<8x32xf32, #tpu.memory_space<vmem>>, vector<8x16xf32>,
    %42 = vector.extract_strided_slice %9 {offsets = [0, 0, 16], sizes = [1, 8, 16], strides = [1, 1, 1]} : vector<1x8x32xbf16> to vector<1x8x16xbf16>
    %43 = vector.extract_strided_slice %11 {offsets = [0, 0, 16], sizes = [1, 8, 16], strides = [1, 1, 1]} : vector<1x8x32xbf16> to vector<1x8x16xbf16>
    "tpu.trace_start"() <{level = 10 : i32, message = "bqd,bkd->bqk"}> : () -> ()
    %cst_14 = arith.constant dense<0.000000e+00> : vector<1x8x8xf32>
    %44 = tpu.matmul %42, %43, %cst_14 {dimension_numbers = #tpu.dot_dimension_numbers<[2], [2], [1], [1], [0, 0, 0, 1, 1, 1], [0], [0]>} : vector<1x8x16xbf16>, vector<1x8x16xbf16>, vector<1x8x8xf32> -> vector<1x8x8xf32>
    "tpu.trace_stop"() : () -> ()
    %cst_15 = arith.constant 2.500000e-01 : f32
    %45 = vector.broadcast %cst_15 : f32 to vector<1x8x8xf32>
    %46 = arith.mulf %44, %45 : vector<1x8x8xf32>
    %47 = arith.addf %46, %20 : vector<1x8x8xf32>
    %cst_16 = arith.constant dense<0xFF800000> : vector<1x8xf32>
    %48 = vector.multi_reduction <maximumf>, %47, %cst_16 [2] : vector<1x8x8xf32> to vector<1x8xf32>
    %49 = vector.shape_cast %48 : vector<1x8xf32> to vector<1x8x1xf32>
    %50 = vector.broadcast %49 : vector<1x8x1xf32> to vector<1x8x8xf32>
    %51 = arith.subf %47, %50 : vector<1x8x8xf32>
    %52 = math.exp %51 : vector<1x8x8xf32>
    %cst_17 = arith.constant dense<0.000000e+00> : vector<1x8xf32>
    %53 = vector.multi_reduction <add>, %52, %cst_17 [2] : vector<1x8x8xf32> to vector<1x8xf32>
    %54 = vector.shape_cast %53 : vector<1x8xf32> to vector<1x8x1xf32>
    %55 = tpu.reciprocal %54 {approx = true} : vector<1x8x1xf32> -> vector<1x8x1xf32>
    %56 = vector.broadcast %55 : vector<1x8x1xf32> to vector<1x8x8xf32>
    %57 = arith.mulf %52, %56 : vector<1x8x8xf32>
    %58 = arith.truncf %57 : vector<1x8x8xf32> to vector<1x8x8xbf16>
    %59 = vector.extract_strided_slice %13 {offsets = [0, 0, 16], sizes = [1, 8, 16], strides = [1, 1, 1]} : vector<1x8x32xbf16> to vector<1x8x16xbf16>
    "tpu.trace_start"() <{level = 10 : i32, message = "bqk,bkd->bqd"}> : () -> ()
    %cst_18 = arith.constant dense<0.000000e+00> : vector<1x8x16xf32>
    %60 = tpu.matmul %58, %59, %cst_18 {dimension_numbers = #tpu.dot_dimension_numbers<[2], [1], [1], [2], [0, 0, 0, 1, 1, 2], [0], [0]>} : vector<1x8x8xbf16>, vector<1x8x16xbf16>, vector<1x8x16xf32> -> vector<1x8x16xf32>
    "tpu.trace_stop"() : () -> ()
    %61 = vector.shape_cast %60 : vector<1x8x16xf32> to vector<8x16xf32>
    %c0_19 = arith.constant 0 : index
    %c16 = arith.constant 16 : index
    %62 = vector.load %arg14[%c0_19, %c16] : memref<8x32xf32, #tpu.memory_space<vmem>>, vector<8x16xf32>
    tpu.vector_store %arg14[%c0_19, %c16], %61 {strides = array<i32>} : memref<8x32xf32, #tpu.memory_space<vmem>>, vector<8x16xf32>,
    %c0_20 = arith.constant 0 : index
    %c0_21 = arith.constant 0 : index
    %63 = vector.load %arg14[%c0_20, %c0_21] : memref<8x32xf32, #tpu.memory_space<vmem>>, vector<8x32xf32>
    %64 = arith.truncf %63 : vector<8x32xf32> to vector<8x32xbf16>
    %c0_22 = arith.constant 0 : index
    %c0_23 = arith.constant 0 : index
    %65 = vector.load %arg6[%c0_22, %c0_23] : memref<32x32xbf16, #tpu.memory_space<vmem>>, vector<32x32xbf16>
    %cst_24 = arith.constant dense<0.000000e+00> : vector<8x32xf32>
    %66 = tpu.matmul %64, %65, %cst_24 {dimension_numbers = #tpu.dot_dimension_numbers<[1], [0], [0], [1], [0, 0, 1, 1], [], []>} : vector<8x32xbf16>, vector<32x32xbf16>, vector<8x32xf32> -> vector<8x32xf32>
    %c0_25 = arith.constant 0 : index
    %c0_26 = arith.constant 0 : index
    %67 = vector.load %arg7[%c0_25, %c0_26] : memref<1x32xf32, #tpu.memory_space<vmem>>, vector<1x32xf32>
    %68 = vector.broadcast %67 : vector<1x32xf32> to vector<8x32xf32>
    %69 = arith.addf %66, %68 : vector<8x32xf32>
    %70 = arith.addf %69, %0 : vector<8x32xf32>
    %c0_27 = arith.constant 0 : index
    %c0_28 = arith.constant 0 : index
    %71 = vector.load %arg8[%c0_27, %c0_28] : memref<1x32xf32, #tpu.memory_space<vmem>>, vector<1x32xf32>
    %c0_29 = arith.constant 0 : index
    %c0_30 = arith.constant 0 : index
    %72 = vector.load %arg9[%c0_29, %c0_30] : memref<1x32xf32, #tpu.memory_space<vmem>>, vector<1x32xf32>
    %cst_31 = arith.constant dense<0.000000e+00> : vector<8xf32>
    %73 = vector.multi_reduction <add>, %70, %cst_31 [1] : vector<8x32xf32> to vector<8xf32>
    %74 = vector.shape_cast %73 : vector<8xf32> to vector<8x1xf32>
    %cst_32 = arith.constant 3.200000e+01 : f32
    %75 = vector.broadcast %cst_32 : f32 to vector<8x1xf32>
    %76 = arith.divf %74, %75 : vector<8x1xf32>
    %77 = vector.broadcast %76 : vector<8x1xf32> to vector<8x32xf32>
    %78 = arith.subf %70, %77 : vector<8x32xf32>
    %79 = arith.mulf %78, %78 : vector<8x32xf32>
    %cst_33 = arith.constant dense<0.000000e+00> : vector<8xf32>
    %80 = vector.multi_reduction <add>, %79, %cst_33 [1] : vector<8x32xf32> to vector<8xf32>
    %81 = vector.shape_cast %80 : vector<8xf32> to vector<8x1xf32>
    %cst_34 = arith.constant 3.200000e+01 : f32
    %82 = vector.broadcast %cst_34 : f32 to vector<8x1xf32>
    %83 = arith.divf %81, %82 : vector<8x1xf32>
    %84 = vector.broadcast %76 : vector<8x1xf32> to vector<8x32xf32>
    %85 = arith.subf %70, %84 : vector<8x32xf32>
    %cst_35 = arith.constant 9.99999996E-13 : f32
    %86 = vector.broadcast %cst_35 : f32 to vector<8x1xf32>
    %87 = arith.addf %83, %86 : vector<8x1xf32>
    %88 = math.rsqrt %87 : vector<8x1xf32>
    %89 = vector.broadcast %88 : vector<8x1xf32> to vector<8x32xf32>
    %90 = arith.mulf %85, %89 : vector<8x32xf32>
    %91 = vector.broadcast %71 : vector<1x32xf32> to vector<8x32xf32>
    %92 = arith.mulf %90, %91 : vector<8x32xf32>
    %93 = vector.broadcast %72 : vector<1x32xf32> to vector<8x32xf32>
    %94 = arith.addf %92, %93 : vector<8x32xf32>
    %95 = vector.shape_cast %0 : vector<8x32xf32> to vector<1x8x32xf32>
    %c0_36 = arith.constant 0 : index
    %c0_37 = arith.constant 0 : index
    %96 = vector.load %arg3[%c0_36, %c0_37] : memref<8x8xf32, #tpu.memory_space<vmem>>, vector<8x8xf32>
    %97 = vector.shape_cast %96 : vector<8x8xf32> to vector<1x8x8xf32>
    %c0_38 = arith.constant 0 : index
    %c0_39 = arith.constant 0 : index
    %98 = vector.load %arg2[%c0_38, %c0_39] : memref<8x8xf32, #tpu.memory_space<vmem>>, vector<8x8xf32>
    %99 = vector.shape_cast %98 : vector<8x8xf32> to vector<1x8x8xf32>
    "tpu.trace_start"() <{level = 10 : i32, message = "brs,bsd->brd"}> : () -> ()
    %cst_40 = arith.constant dense<0.000000e+00> : vector<1x8x32xf32>
    %100 = tpu.matmul %97, %95, %cst_40 {dimension_numbers = #tpu.dot_dimension_numbers<[2], [1], [1], [2], [0, 0, 0, 1, 1, 2], [0], [0]>} : vector<1x8x8xf32>, vector<1x8x32xf32>, vector<1x8x32xf32> -> vector<1x8x32xf32>
    "tpu.trace_stop"() : () -> ()
    "tpu.trace_start"() <{level = 10 : i32, message = "bsr,brd->bsd"}> : () -> ()
    %cst_41 = arith.constant dense<0.000000e+00> : vector<1x8x32xf32>
    %101 = tpu.matmul %99, %100, %cst_41 {dimension_numbers = #tpu.dot_dimension_numbers<[2], [1], [1], [2], [0, 0, 0, 1, 1, 2], [0], [0]>} : vector<1x8x8xf32>, vector<1x8x32xf32>, vector<1x8x32xf32> -> vector<1x8x32xf32>
    "tpu.trace_stop"() : () -> ()
    %102 = vector.shape_cast %101 : vector<1x8x32xf32> to vector<8x32xf32>
    %c0_42 = arith.constant 0 : index
    %c0_43 = arith.constant 0 : index
    %103 = vector.load %arg10[%c0_42, %c0_43] : memref<1x32xf32, #tpu.memory_space<vmem>>, vector<1x32xf32>
    %c0_44 = arith.constant 0 : index
    %c0_45 = arith.constant 0 : index
    %104 = vector.load %arg10[%c0_44, %c0_45] : memref<1x32xf32, #tpu.memory_space<vmem>>, vector<1x32xf32>
    %105 = arith.mulf %103, %104 : vector<1x32xf32>
    %106 = arith.subf %0, %102 : vector<8x32xf32>
    %107 = vector.broadcast %105 : vector<1x32xf32> to vector<8x32xf32>
    %108 = arith.mulf %107, %106 : vector<8x32xf32>
    %109 = arith.addf %102, %108 : vector<8x32xf32>
    %110 = arith.addf %109, %0 : vector<8x32xf32>
    %c0_46 = arith.constant 0 : index
    %c0_47 = arith.constant 0 : index
    %111 = vector.load %arg11[%c0_46, %c0_47] : memref<1x32xf32, #tpu.memory_space<vmem>>, vector<1x32xf32>
    %c0_48 = arith.constant 0 : index
    %c0_49 = arith.constant 0 : index
    %112 = vector.load %arg12[%c0_48, %c0_49] : memref<1x32xf32, #tpu.memory_space<vmem>>, vector<1x32xf32>
    %cst_50 = arith.constant dense<0.000000e+00> : vector<8xf32>
    %113 = vector.multi_reduction <add>, %110, %cst_50 [1] : vector<8x32xf32> to vector<8xf32>
    %114 = vector.shape_cast %113 : vector<8xf32> to vector<8x1xf32>
    %cst_51 = arith.constant 3.200000e+01 : f32
    %115 = vector.broadcast %cst_51 : f32 to vector<8x1xf32>
    %116 = arith.divf %114, %115 : vector<8x1xf32>
    %117 = vector.broadcast %116 : vector<8x1xf32> to vector<8x32xf32>
    %118 = arith.subf %110, %117 : vector<8x32xf32>
    %119 = arith.mulf %118, %118 : vector<8x32xf32>
    %cst_52 = arith.constant dense<0.000000e+00> : vector<8xf32>
    %120 = vector.multi_reduction <add>, %119, %cst_52 [1] : vector<8x32xf32> to vector<8xf32>
    %121 = vector.shape_cast %120 : vector<8xf32> to vector<8x1xf32>
    %cst_53 = arith.constant 3.200000e+01 : f32
    %122 = vector.broadcast %cst_53 : f32 to vector<8x1xf32>
    %123 = arith.divf %121, %122 : vector<8x1xf32>
    %124 = vector.broadcast %116 : vector<8x1xf32> to vector<8x32xf32>
    %125 = arith.subf %110, %124 : vector<8x32xf32>
    %cst_54 = arith.constant 9.99999996E-13 : f32
    %126 = vector.broadcast %cst_54 : f32 to vector<8x1xf32>
    %127 = arith.addf %123, %126 : vector<8x1xf32>
    %128 = math.rsqrt %127 : vector<8x1xf32>
    %129 = vector.broadcast %128 : vector<8x1xf32> to vector<8x32xf32>
    %130 = arith.mulf %125, %129 : vector<8x32xf32>
    %131 = vector.broadcast %111 : vector<1x32xf32> to vector<8x32xf32>
    %132 = arith.mulf %130, %131 : vector<8x32xf32>
    %133 = vector.broadcast %112 : vector<1x32xf32> to vector<8x32xf32>
    %134 = arith.addf %132, %133 : vector<8x32xf32>
    %cst_55 = arith.constant 0.699999988 : f32
    %135 = vector.broadcast %cst_55 : f32 to vector<8x32xf32>
    %136 = arith.mulf %135, %134 : vector<8x32xf32>
    %cst_56 = arith.constant 3.000000e-01 : f32
    %137 = vector.broadcast %cst_56 : f32 to vector<8x32xf32>
    %138 = arith.mulf %137, %94 : vector<8x32xf32>
    %139 = arith.addf %136, %138 : vector<8x32xf32>
    %c0_57 = arith.constant 0 : index
    %c0_58 = arith.constant 0 : index
    %140 = vector.load %arg13[%c0_57, %c0_58] : memref<8x32xf32, #tpu.memory_space<vmem>>, vector<8x32xf32>
    tpu.vector_store %arg13[%c0_57, %c0_58], %139 {strides = array<i32>} : memref<8x32xf32, #tpu.memory_space<vmem>>, vector<8x32xf32>,
    return
  }
  func.func @transform_0(%arg0: i32) -> (i32, i32) {
    %c0_i32 = arith.constant 0 : i32
    %c0_i32_0 = arith.constant 0 : i32
    return %arg0, %c0_i32 : i32, i32
  }
  func.func @transform_1(%arg0: i32) -> (i32, i32) {
    %c0_i32 = arith.constant 0 : i32
    %c0_i32_0 = arith.constant 0 : i32
    %c0_i32_1 = arith.constant 0 : i32
    return %c0_i32, %c0_i32_0 : i32, i32
  }
  func.func @transform_2(%arg0: i32) -> (i32, i32) {
    %c0_i32 = arith.constant 0 : i32
    %c0_i32_0 = arith.constant 0 : i32
    %c0_i32_1 = arith.constant 0 : i32
    return %c0_i32, %c0_i32_0 : i32, i32
  }
  func.func @transform_3(%arg0: i32) -> (i32, i32) {
    %c0_i32 = arith.constant 0 : i32
    %c0_i32_0 = arith.constant 0 : i32
    %c0_i32_1 = arith.constant 0 : i32
    return %c0_i32, %c0_i32_0 : i32, i32
  }
  func.func @transform_4(%arg0: i32) -> (i32, i32) {
    %c0_i32 = arith.constant 0 : i32
    %c0_i32_0 = arith.constant 0 : i32
    %c0_i32_1 = arith.constant 0 : i32
    return %c0_i32, %c0_i32_0 : i32, i32
  }
  func.func @transform_5(%arg0: i32) -> (i32, i32) {
    %c0_i32 = arith.constant 0 : i32
    %c0_i32_0 = arith.constant 0 : i32
    %c0_i32_1 = arith.constant 0 : i32
    return %c0_i32, %c0_i32_0 : i32, i32
  }
  func.func @transform_6(%arg0: i32) -> (i32, i32) {
    %c0_i32 = arith.constant 0 : i32
    %c0_i32_0 = arith.constant 0 : i32
    %c0_i32_1 = arith.constant 0 : i32
    return %c0_i32, %c0_i32_0 : i32, i32
  }
  func.func @transform_7(%arg0: i32) -> (i32, i32) {
    %c0_i32 = arith.constant 0 : i32
    %c0_i32_0 = arith.constant 0 : i32
    %c0_i32_1 = arith.constant 0 : i32
    return %c0_i32, %c0_i32_0 : i32, i32
  }
  func.func @transform_8(%arg0: i32) -> (i32, i32) {
    %c0_i32 = arith.constant 0 : i32
    %c0_i32_0 = arith.constant 0 : i32
    %c0_i32_1 = arith.constant 0 : i32
    return %c0_i32, %c0_i32_0 : i32, i32
  }
  func.func @transform_9(%arg0: i32) -> (i32, i32) {
    %c0_i32 = arith.constant 0 : i32
    %c0_i32_0 = arith.constant 0 : i32
    %c0_i32_1 = arith.constant 0 : i32
    return %c0_i32, %c0_i32_0 : i32, i32
  }
  func.func @transform_10(%arg0: i32) -> (i32, i32) {
    %c0_i32 = arith.constant 0 : i32
    %c0_i32_0 = arith.constant 0 : i32
    %c0_i32_1 = arith.constant 0 : i32
    return %c0_i32, %c0_i32_0 : i32, i32
  }
  func.func @transform_11(%arg0: i32) -> (i32, i32) {
    %c0_i32 = arith.constant 0 : i32
    %c0_i32_0 = arith.constant 0 : i32
    %c0_i32_1 = arith.constant 0 : i32
    return %c0_i32, %c0_i32_0 : i32, i32
  }
  func.func @transform_12(%arg0: i32) -> (i32, i32) {
    %c0_i32 = arith.constant 0 : i32
    %c0_i32_0 = arith.constant 0 : i32
    return %arg0, %c0_i32 : i32, i32
  }
}

</mosaic_0001>

<llo_original>
// kernel: tpu_custom_call.1
$region0: #{tpu_custom_call.1}
  #allocation0 [shape = 'u32[]', space=smem, size = 0x4, offset = 0x4, fixed_abs, tag = 'smem constant byte address 0x4 - core index']
  #allocation1 [shape = 'u32[144,128]{1,0:T(1,128)}', space=vmem, size = 0x12000, scoped, tag = 'internal scratch']
  #allocation2 [shape = 'f32[8,32]{1,0:T(8,128)}', space=vmem, size = 0x1000, scoped, tag = 'scratch operand']
  %s0 = inlined_call_operand.hbm [shape: f32[16,32], index: 0, kind: input, shape index: {}]
  %s1 = inlined_call_operand.hbm [shape: f32[8,8], index: 1, kind: input, shape index: {}]
  %s2 = inlined_call_operand.hbm [shape: f32[8,8], index: 2, kind: input, shape index: {}]
  %s3 = inlined_call_operand.hbm [shape: bf16[32,96], index: 3, kind: input, shape index: {}]
  %s4 = inlined_call_operand.vmem [shape: f32[1,96], index: 4, kind: input, shape index: {}]
  %s5 = inlined_call_operand.vmem [shape: bf16[32,32], index: 5, kind: input, shape index: {}]
  %s6 = inlined_call_operand.vmem [shape: f32[1,32], index: 6, kind: input, shape index: {}]
  %s7 = inlined_call_operand.vmem [shape: f32[1,32], index: 7, kind: input, shape index: {}]
  %s8 = inlined_call_operand.vmem [shape: f32[1,32], index: 8, kind: input, shape index: {}]
  %s9 = inlined_call_operand.vmem [shape: f32[1,32], index: 9, kind: input, shape index: {}]
  %s10 = inlined_call_operand.vmem [shape: f32[1,32], index: 10, kind: input, shape index: {}]
  %s11 = inlined_call_operand.vmem [shape: f32[1,32], index: 11, kind: input, shape index: {}]
  %s12 = inlined_call_operand.hbm [shape: f32[16,32], index: 12, kind: output, shape index: {}]
  %s13 = sld [smem:[#allocation0]]
  $region97: #{tpu_custom_call.1} parent=0
    _
  %s15 = ssub.s32 1, %s13
  %s16 = scalar_select 0, %s15, %s13
  $region1: #{tpu_custom_call.1} parent=0
    #allocation3 [shape = 'u8[8192]{0}', space=vmem, size = 0x2000, scoped, tag = 'input window, operand 0']
    #allocation4 [shape = 's32[2]{0}', space=sflag, size = 0x8, scoped, tag = 'scoped memory for tpu_custom_call.1']
    #allocation5 [shape = 's32[2]{0}', space=sflag, size = 0x8, scoped, tag = 'scoped memory for tpu_custom_call.1']
    #allocation6 [shape = 'u8[4096]{0}', space=vmem, size = 0x1000, scoped, tag = 'input window, operand 1, single buffered']
    #allocation7 [shape = 's32[1]{0}', space=sflag, size = 0x4, scoped, tag = 'scoped memory for tpu_custom_call.1']
    #allocation8 [shape = 'u8[4096]{0}', space=vmem, size = 0x1000, scoped, tag = 'input window, operand 2, single buffered']
    #allocation9 [shape = 'u8[8192]{0}', space=vmem, size = 0x2000, scoped, tag = 'input window, operand 3, single buffered']
    #allocation10 [shape = 's32[1]{0}', space=sflag, size = 0x4, scoped, tag = 'scoped memory for tpu_custom_call.1']
    #allocation11 [shape = 'u8[8192]{0}', space=vmem, size = 0x2000, scoped, tag = 'output window, operand 0']
    %17 = vsyncpa [#allocation4], 0
    %s18 = scalar_lea.sflag [#allocation4], 1
    %19 = vsyncpa %s18, 0
    %20 = vsyncpa [#allocation7], 0
    %21 = vsyncpa [#allocation10], 0
    %22 = vsyncpa [#allocation5], 0
    %s23 = scalar_lea.sflag [#allocation5], 1
    %24 = vsyncpa %s23, 0
    loop: start=0, step=1, limit=4
    $region2: #{tpu_custom_call.1} parent=1 // loop_pre_header
      _
    $region3: #{tpu_custom_call.1} parent=1 // loop_header
      %s26 = sphi 0, %s30
      %p27 = scmp.ge.s32.totalorder %s26, 4
      %s36 = sphi 0, %s38
      %s39 = sphi 0, %s36
      %s40 = sphi 0, %s39
      %s56 = sphi 0, %s40
      %s60 = sphi 0, %s60
      %s62 = sphi 0, %s60
      %s63 = sphi 0, %s62
      %s77 = sphi 0, %s63
      %s81 = sphi 0, %s81
      %s83 = sphi 0, %s81
      %s84 = sphi 0, %s83
      %s98 = sphi 0, %s84
      %s102 = sphi 0, %s102
      %s104 = sphi 0, %s102
      %s105 = sphi 0, %s104
      %s119 = sphi 0, %s105
      %s123 = sphi 0, %s123
      %s125 = sphi 0, %s123
      %s126 = sphi 0, %s125
      %s140 = sphi 0, %s126
      %s144 = sphi 0, %s144
      %s146 = sphi 0, %s144
      %s147 = sphi 0, %s146
      %s161 = sphi 0, %s147
      %s165 = sphi 0, %s165
      %s167 = sphi 0, %s165
      %s168 = sphi 0, %s167
      %s182 = sphi 0, %s168
      %s186 = sphi 0, %s186
      %s188 = sphi 0, %s186
      %s189 = sphi 0, %s188
      %s203 = sphi 0, %s189
      %s207 = sphi 0, %s207
      %s209 = sphi 0, %s207
      %s210 = sphi 0, %s209
      %s224 = sphi 0, %s210
      %s228 = sphi 0, %s228
      %s230 = sphi 0, %s228
      %s231 = sphi 0, %s230
      %s245 = sphi 0, %s231
      %s249 = sphi 0, %s249
      %s251 = sphi 0, %s249
      %s252 = sphi 0, %s251
      %s266 = sphi 0, %s252
      %s270 = sphi 0, %s270
      %s272 = sphi 0, %s270
      %s273 = sphi 0, %s272
      %s287 = sphi 0, %s273
      %s293 = sphi 0, %s295
      %s296 = sphi 0, %s293
      %s297 = sphi 0, %s296
      %s313 = sphi 0, %s297
    $region4: #{tpu_custom_call.1} parent=1 // loop_header_branch
      %29 = sbr.rel (%p27) target = $region8
    $region5: #{tpu_custom_call.1} parent=1 // loop_body
      %s31 = ssub.s32 %s26, 1
      %s32 = ssub.s32 %s26, 2
      %s33 = sadd.s32 %s26, 1
      %s34 = ssub.s32 %s26, %s33
      %p35 = scmp.eq.s32.totalorder %s34, 0
      %s37 = sadd.s32 %s36, 1
      %s38 = scalar_select %p35, %s36, %s37
      %p41 = pneg %p35
      %p42 = scmp.eq.s32.totalorder %s26, 1
      %p43 = por %p41, %p42
      %p44 = scmp.ne.s32.totalorder %s36, %s39
      %p45 = scmp.eq.s32.totalorder %s26, 0
      %p46 = por %p44, %p45
      %p47 = scmp.ne.s32.totalorder %s36, %s39
      %p48 = scmp.eq.s32.totalorder %s31, 1
      %p49 = por %p47, %p48
      %p50 = scmp.ne.s32.totalorder %s39, %s40
      %p51 = scmp.eq.s32.totalorder %s31, 0
      %p52 = por %p50, %p51
      %p53 = scmp.ne.s32.totalorder %s39, %s40
      %p54 = scmp.eq.s32.totalorder %s32, 1
      %p55 = por %p53, %p54
      %p57 = scmp.ne.s32.totalorder %s40, %s56
      %p58 = scmp.eq.s32.totalorder %s32, 0
      %p59 = por %p57, %p58
      %s61 = sadd.s32 %s60, 1
      %p64 = scmp.eq.s32.totalorder %s26, 1
      %p65 = scmp.ne.s32.totalorder %s60, %s62
      %p66 = scmp.eq.s32.totalorder %s26, 0
      %p67 = por %p65, %p66
      %p68 = scmp.ne.s32.totalorder %s60, %s62
      %p69 = scmp.eq.s32.totalorder %s31, 1
      %p70 = por %p68, %p69
      %p71 = scmp.ne.s32.totalorder %s62, %s63
      %p72 = scmp.eq.s32.totalorder %s31, 0
      %p73 = por %p71, %p72
      %p74 = scmp.ne.s32.totalorder %s62, %s63
      %p75 = scmp.eq.s32.totalorder %s32, 1
      %p76 = por %p74, %p75
      %p78 = scmp.ne.s32.totalorder %s63, %s77
      %p79 = scmp.eq.s32.totalorder %s32, 0
      %p80 = por %p78, %p79
      %s82 = sadd.s32 %s81, 1
      %p85 = scmp.eq.s32.totalorder %s26, 1
      %p86 = scmp.ne.s32.totalorder %s81, %s83
      %p87 = scmp.eq.s32.totalorder %s26, 0
      %p88 = por %p86, %p87
      %p89 = scmp.ne.s32.totalorder %s81, %s83
      %p90 = scmp.eq.s32.totalorder %s31, 1
      %p91 = por %p89, %p90
      %p92 = scmp.ne.s32.totalorder %s83, %s84
      %p93 = scmp.eq.s32.totalorder %s31, 0
      %p94 = por %p92, %p93
      %p95 = scmp.ne.s32.totalorder %s83, %s84
      %p96 = scmp.eq.s32.totalorder %s32, 1
      %p97 = por %p95, %p96
      %p99 = scmp.ne.s32.totalorder %s84, %s98
      %p100 = scmp.eq.s32.totalorder %s32, 0
      %p101 = por %p99, %p100
      %s103 = sadd.s32 %s102, 1
      %p106 = scmp.eq.s32.totalorder %s26, 1
      %p107 = scmp.ne.s32.totalorder %s102, %s104
      %p108 = scmp.eq.s32.totalorder %s26, 0
      %p109 = por %p107, %p108
      %p110 = scmp.ne.s32.totalorder %s102, %s104
      %p111 = scmp.eq.s32.totalorder %s31, 1
      %p112 = por %p110, %p111
      %p113 = scmp.ne.s32.totalorder %s104, %s105
      %p114 = scmp.eq.s32.totalorder %s31, 0
      %p115 = por %p113, %p114
      %p116 = scmp.ne.s32.totalorder %s104, %s105
      %p117 = scmp.eq.s32.totalorder %s32, 1
      %p118 = por %p116, %p117
      %p120 = scmp.ne.s32.totalorder %s105, %s119
      %p121 = scmp.eq.s32.totalorder %s32, 0
      %p122 = por %p120, %p121
      %s124 = sadd.s32 %s123, 1
      %p127 = scmp.eq.s32.totalorder %s26, 1
      %p128 = scmp.ne.s32.totalorder %s123, %s125
      %p129 = scmp.eq.s32.totalorder %s26, 0
      %p130 = por %p128, %p129
      %p131 = scmp.ne.s32.totalorder %s123, %s125
      %p132 = scmp.eq.s32.totalorder %s31, 1
      %p133 = por %p131, %p132
      %p134 = scmp.ne.s32.totalorder %s125, %s126
      %p135 = scmp.eq.s32.totalorder %s31, 0
      %p136 = por %p134, %p135
      %p137 = scmp.ne.s32.totalorder %s125, %s126
      %p138 = scmp.eq.s32.totalorder %s32, 1
      %p139 = por %p137, %p138
      %p141 = scmp.ne.s32.totalorder %s126, %s140
      %p142 = scmp.eq.s32.totalorder %s32, 0
      %p143 = por %p141, %p142
      %s145 = sadd.s32 %s144, 1
      %p148 = scmp.eq.s32.totalorder %s26, 1
      %p149 = scmp.ne.s32.totalorder %s144, %s146
      %p150 = scmp.eq.s32.totalorder %s26, 0
      %p151 = por %p149, %p150
      %p152 = scmp.ne.s32.totalorder %s144, %s146
      %p153 = scmp.eq.s32.totalorder %s31, 1
      %p154 = por %p152, %p153
      %p155 = scmp.ne.s32.totalorder %s146, %s147
      %p156 = scmp.eq.s32.totalorder %s31, 0
      %p157 = por %p155, %p156
      %p158 = scmp.ne.s32.totalorder %s146, %s147
      %p159 = scmp.eq.s32.totalorder %s32, 1
      %p160 = por %p158, %p159
      %p162 = scmp.ne.s32.totalorder %s147, %s161
      %p163 = scmp.eq.s32.totalorder %s32, 0
      %p164 = por %p162, %p163
      %s166 = sadd.s32 %s165, 1
      %p169 = scmp.eq.s32.totalorder %s26, 1
      %p170 = scmp.ne.s32.totalorder %s165, %s167
      %p171 = scmp.eq.s32.totalorder %s26, 0
      %p172 = por %p170, %p171
      %p173 = scmp.ne.s32.totalorder %s165, %s167
      %p174 = scmp.eq.s32.totalorder %s31, 1
      %p175 = por %p173, %p174
      %p176 = scmp.ne.s32.totalorder %s167, %s168
      %p177 = scmp.eq.s32.totalorder %s31, 0
      %p178 = por %p176, %p177
      %p179 = scmp.ne.s32.totalorder %s167, %s168
      %p180 = scmp.eq.s32.totalorder %s32, 1
      %p181 = por %p179, %p180
      %p183 = scmp.ne.s32.totalorder %s168, %s182
      %p184 = scmp.eq.s32.totalorder %s32, 0
      %p185 = por %p183, %p184
      %s187 = sadd.s32 %s186, 1
      %p190 = scmp.eq.s32.totalorder %s26, 1
      %p191 = scmp.ne.s32.totalorder %s186, %s188
      %p192 = scmp.eq.s32.totalorder %s26, 0
      %p193 = por %p191, %p192
      %p194 = scmp.ne.s32.totalorder %s186, %s188
      %p195 = scmp.eq.s32.totalorder %s31, 1
      %p196 = por %p194, %p195
      %p197 = scmp.ne.s32.totalorder %s188, %s189
      %p198 = scmp.eq.s32.totalorder %s31, 0
      %p199 = por %p197, %p198
      %p200 = scmp.ne.s32.totalorder %s188, %s189
      %p201 = scmp.eq.s32.totalorder %s32, 1
      %p202 = por %p200, %p201
      %p204 = scmp.ne.s32.totalorder %s189, %s203
      %p205 = scmp.eq.s32.totalorder %s32, 0
      %p206 = por %p204, %p205
      %s208 = sadd.s32 %s207, 1
      %p211 = scmp.eq.s32.totalorder %s26, 1
      %p212 = scmp.ne.s32.totalorder %s207, %s209
      %p213 = scmp.eq.s32.totalorder %s26, 0
      %p214 = por %p212, %p213
      %p215 = scmp.ne.s32.totalorder %s207, %s209
      %p216 = scmp.eq.s32.totalorder %s31, 1
      %p217 = por %p215, %p216
      %p218 = scmp.ne.s32.totalorder %s209, %s210
      %p219 = scmp.eq.s32.totalorder %s31, 0
      %p220 = por %p218, %p219
      %p221 = scmp.ne.s32.totalorder %s209, %s210
      %p222 = scmp.eq.s32.totalorder %s32, 1
      %p223 = por %p221, %p222
      %p225 = scmp.ne.s32.totalorder %s210, %s224
      %p226 = scmp.eq.s32.totalorder %s32, 0
      %p227 = por %p225, %p226
      %s229 = sadd.s32 %s228, 1
      %p232 = scmp.eq.s32.totalorder %s26, 1
      %p233 = scmp.ne.s32.totalorder %s228, %s230
      %p234 = scmp.eq.s32.totalorder %s26, 0
      %p235 = por %p233, %p234
      %p236 = scmp.ne.s32.totalorder %s228, %s230
      %p237 = scmp.eq.s32.totalorder %s31, 1
      %p238 = por %p236, %p237
      %p239 = scmp.ne.s32.totalorder %s230, %s231
      %p240 = scmp.eq.s32.totalorder %s31, 0
      %p241 = por %p239, %p240
      %p242 = scmp.ne.s32.totalorder %s230, %s231
      %p243 = scmp.eq.s32.totalorder %s32, 1
      %p244 = por %p242, %p243
      %p246 = scmp.ne.s32.totalorder %s231, %s245
      %p247 = scmp.eq.s32.totalorder %s32, 0
      %p248 = por %p246, %p247
      %s250 = sadd.s32 %s249, 1
      %p253 = scmp.eq.s32.totalorder %s26, 1
      %p254 = scmp.ne.s32.totalorder %s249, %s251
      %p255 = scmp.eq.s32.totalorder %s26, 0
      %p256 = por %p254, %p255
      %p257 = scmp.ne.s32.totalorder %s249, %s251
      %p258 = scmp.eq.s32.totalorder %s31, 1
      %p259 = por %p257, %p258
      %p260 = scmp.ne.s32.totalorder %s251, %s252
      %p261 = scmp.eq.s32.totalorder %s31, 0
      %p262 = por %p260, %p261
      %p263 = scmp.ne.s32.totalorder %s251, %s252
      %p264 = scmp.eq.s32.totalorder %s32, 1
      %p265 = por %p263, %p264
      %p267 = scmp.ne.s32.totalorder %s252, %s266
      %p268 = scmp.eq.s32.totalorder %s32, 0
      %p269 = por %p267, %p268
      %s271 = sadd.s32 %s270, 1
      %p274 = scmp.eq.s32.totalorder %s26, 1
      %p275 = scmp.ne.s32.totalorder %s270, %s272
      %p276 = scmp.eq.s32.totalorder %s26, 0
      %p277 = por %p275, %p276
      %p278 = scmp.ne.s32.totalorder %s270, %s272
      %p279 = scmp.eq.s32.totalorder %s31, 1
      %p280 = por %p278, %p279
      %p281 = scmp.ne.s32.totalorder %s272, %s273
      %p282 = scmp.eq.s32.totalorder %s31, 0
      %p283 = por %p281, %p282
      %p284 = scmp.ne.s32.totalorder %s272, %s273
      %p285 = scmp.eq.s32.totalorder %s32, 1
      %p286 = por %p284, %p285
      %p288 = scmp.ne.s32.totalorder %s273, %s287
      %p289 = scmp.eq.s32.totalorder %s32, 0
      %p290 = por %p288, %p289
      %s291 = ssub.s32 %s26, %s33
      %p292 = scmp.eq.s32.totalorder %s291, 0
      %s294 = sadd.s32 %s293, 1
      %s295 = scalar_select %p292, %s293, %s294
      %p298 = pneg %p292
      %p299 = scmp.eq.s32.totalorder %s26, 1
      %p300 = por %p298, %p299
      %p301 = scmp.ne.s32.totalorder %s293, %s296
      %p302 = scmp.eq.s32.totalorder %s26, 0
      %p303 = por %p301, %p302
      %p304 = scmp.ne.s32.totalorder %s293, %s296
      %p305 = scmp.eq.s32.totalorder %s31, 1
      %p306 = por %p304, %p305
      %p307 = scmp.ne.s32.totalorder %s296, %s297
      %p308 = scmp.eq.s32.totalorder %s31, 0
      %p309 = por %p307, %p308
      %p310 = scmp.ne.s32.totalorder %s296, %s297
      %p311 = scmp.eq.s32.totalorder %s32, 1
      %p312 = por %p310, %p311
      %p314 = scmp.ne.s32.totalorder %s297, %s313
      %p315 = scmp.eq.s32.totalorder %s32, 0
      %p316 = por %p314, %p315
      %p317 = scmp.le.s32.totalorder 1, %s26
      %p318 = scmp.lt.s32.totalorder %s26, 3
      %p319 = pnand %p317, %p318
      %p320 = pneg %p319
      // Predicated region
      $region9: #{tpu_custom_call.1} parent=5 // pred_check
        _
      $region10: #{tpu_custom_call.1} parent=5 // pred_check_branch
        %322 = sbr.rel (%p319) target = $region12
      $region11: #{tpu_custom_call.1} parent=5 // pred_region
        %s323 = ssub.s32 %s26, 1
        // Predicated region
        $region13: #{tpu_custom_call.1} parent=11 // pred_check
          %p324 = pneg %p73
        $region14: #{tpu_custom_call.1} parent=11 // pred_check_branch
          %326 = sbr.rel (%p324) target = $region16
        $region15: #{tpu_custom_call.1} parent=11 // pred_region
          %s328 = ssub.s32 128, 128
          %329 = vsyncadd [#allocation7], %s328
          %s331 = sshll.u32 [#allocation6], 4
          %s332 = int_to_ptr.vmem [resolvable:$true] %s331
          %334 = dma.hbm_to_vmem [thread:$0]  %s1, 128, %s332, [#allocation7]
        $region16: #{tpu_custom_call.1} parent=11 // pred_fallthru
          _
        // Predicated region
        $region17: #{tpu_custom_call.1} parent=11 // pred_check
          %p335 = pneg %p94
        $region18: #{tpu_custom_call.1} parent=11 // pred_check_branch
          %337 = sbr.rel (%p335) target = $region20
        $region19: #{tpu_custom_call.1} parent=11 // pred_region
          %s339 = ssub.s32 128, 128
          %340 = vsyncadd [#allocation7], %s339
          %s342 = sshll.u32 [#allocation8], 4
          %s343 = int_to_ptr.vmem [resolvable:$true] %s342
          %345 = dma.hbm_to_vmem [thread:$0]  %s2, 128, %s343, [#allocation7]
        $region20: #{tpu_custom_call.1} parent=11 // pred_fallthru
          _
        // Predicated region
        $region21: #{tpu_custom_call.1} parent=11 // pred_check
          %p346 = pneg %p115
        $region22: #{tpu_custom_call.1} parent=11 // pred_check_branch
          %348 = sbr.rel (%p346) target = $region24
        $region23: #{tpu_custom_call.1} parent=11 // pred_region
          %s350 = ssub.s32 256, 256
          %351 = vsyncadd [#allocation10], %s350
          %s352 = sshll.u32 [#allocation9], 4
          %s353 = int_to_ptr.vmem [resolvable:$true] %s352
          %358 = dma.hbm_to_vmem [thread:$0]  %s3, 256, %s353, [#allocation10], 64, 64, 4
        $region24: #{tpu_custom_call.1} parent=11 // pred_fallthru
          _
        // Predicated region
        $region25: #{tpu_custom_call.1} parent=11 // pred_check
          %p359 = pneg %p136
        $region26: #{tpu_custom_call.1} parent=11 // pred_check_branch
          %361 = sbr.rel (%p359) target = $region28
        $region27: #{tpu_custom_call.1} parent=11 // pred_region
          _
        $region28: #{tpu_custom_call.1} parent=11 // pred_fallthru
          _
        // Predicated region
        $region29: #{tpu_custom_call.1} parent=11 // pred_check
          %p362 = pneg %p157
        $region30: #{tpu_custom_call.1} parent=11 // pred_check_branch
          %364 = sbr.rel (%p362) target = $region32
        $region31: #{tpu_custom_call.1} parent=11 // pred_region
          _
        $region32: #{tpu_custom_call.1} parent=11 // pred_fallthru
          _
        // Predicated region
        $region33: #{tpu_custom_call.1} parent=11 // pred_check
          %p365 = pneg %p178
        $region34: #{tpu_custom_call.1} parent=11 // pred_check_branch
          %367 = sbr.rel (%p365) target = $region36
        $region35: #{tpu_custom_call.1} parent=11 // pred_region
          _
        $region36: #{tpu_custom_call.1} parent=11 // pred_fallthru
          _
        // Predicated region
        $region37: #{tpu_custom_call.1} parent=11 // pred_check
          %p368 = pneg %p199
        $region38: #{tpu_custom_call.1} parent=11 // pred_check_branch
          %370 = sbr.rel (%p368) target = $region40
        $region39: #{tpu_custom_call.1} parent=11 // pred_region
          _
        $region40: #{tpu_custom_call.1} parent=11 // pred_fallthru
          _
        // Predicated region
        $region41: #{tpu_custom_call.1} parent=11 // pred_check
          %p371 = pneg %p220
        $region42: #{tpu_custom_call.1} parent=11 // pred_check_branch
          %373 = sbr.rel (%p371) target = $region44
        $region43: #{tpu_custom_call.1} parent=11 // pred_region
          _
        $region44: #{tpu_custom_call.1} parent=11 // pred_fallthru
          _
        // Predicated region
        $region45: #{tpu_custom_call.1} parent=11 // pred_check
          %p374 = pneg %p241
        $region46: #{tpu_custom_call.1} parent=11 // pred_check_branch
          %376 = sbr.rel (%p374) target = $region48
        $region47: #{tpu_custom_call.1} parent=11 // pred_region
          _
        $region48: #{tpu_custom_call.1} parent=11 // pred_fallthru
          _
        // Predicated region
        $region49: #{tpu_custom_call.1} parent=11 // pred_check
          %p377 = pneg %p262
        $region50: #{tpu_custom_call.1} parent=11 // pred_check_branch
          %379 = sbr.rel (%p377) target = $region52
        $region51: #{tpu_custom_call.1} parent=11 // pred_region
          _
        $region52: #{tpu_custom_call.1} parent=11 // pred_fallthru
          _
        // Predicated region
        $region53: #{tpu_custom_call.1} parent=11 // pred_check
          %p380 = pneg %p283
        $region54: #{tpu_custom_call.1} parent=11 // pred_check_branch
          %382 = sbr.rel (%p380) target = $region56
        $region55: #{tpu_custom_call.1} parent=11 // pred_region
          _
        $region56: #{tpu_custom_call.1} parent=11 // pred_fallthru
          _
      $region12: #{tpu_custom_call.1} parent=5 // pred_fallthru
        _
      %p383 = scmp.lt.s32.totalorder %s26, 2
      // Predicated region
      $region57: #{tpu_custom_call.1} parent=5 // pred_check
        %p384 = pneg %p383
      $region58: #{tpu_custom_call.1} parent=5 // pred_check_branch
        %386 = sbr.rel (%p384) target = $region60
      $region59: #{tpu_custom_call.1} parent=5 // pred_region
        // Predicated region
        $region61: #{tpu_custom_call.1} parent=59 // pred_check
          %p387 = pneg %p46
        $region62: #{tpu_custom_call.1} parent=59 // pred_check_branch
          %389 = sbr.rel (%p387) target = $region64
        $region63: #{tpu_custom_call.1} parent=59 // pred_region
          %s390 = sand.u32 %s36, 1
          %s391 = scalar_lea.sflag [#allocation4], %s390
          %s392 = sand.u32 %s36, 1
          %s393 = smul.addr %s392, 8
          %s394 = scalar_lea.vmem [#allocation3], %s393
          %s396 = ssub.s32 128, 128
          %397 = vsyncadd %s391, %s396
          %s398 = smul.addr %s26, 128
          %s399 = scalar_lea.hbm %s0, %s398
          %s401 = sshll.u32 %s394, 4
          %s402 = int_to_ptr.vmem [resolvable:$true] %s401
          %404 = dma.hbm_to_vmem [thread:$0]  %s399, 128, %s402, %s391
        $region64: #{tpu_custom_call.1} parent=59 // pred_fallthru
          _
      $region60: #{tpu_custom_call.1} parent=5 // pred_fallthru
        _
      %p405 = scmp.le.s32.totalorder 1, %s26
      %p406 = scmp.lt.s32.totalorder %s26, 3
      %p407 = pnand %p405, %p406
      %p408 = pneg %p407
      // Predicated region
      $region65: #{tpu_custom_call.1} parent=5 // pred_check
        _
      $region66: #{tpu_custom_call.1} parent=5 // pred_check_branch
        %410 = sbr.rel (%p407) target = $region68
      $region67: #{tpu_custom_call.1} parent=5 // pred_region
        %s411 = ssub.s32 %s26, 1
        %s412 = sand.u32 %s39, 1
        %s413 = scalar_lea.sflag [#allocation4], %s412
        %s414 = sand.u32 %s39, 1
        %s415 = smul.addr %s414, 8
        %s416 = scalar_lea.vmem [#allocation3], %s415
        // Predicated region
        $region69: #{tpu_custom_call.1} parent=67 // pred_check
          %p417 = pneg %p52
        $region70: #{tpu_custom_call.1} parent=67 // pred_check_branch
          %419 = sbr.rel (%p417) target = $region72
        $region71: #{tpu_custom_call.1} parent=67 // pred_region
          %420 = dma.done %s413, 128
        $region72: #{tpu_custom_call.1} parent=67 // pred_fallthru
          _
        // Predicated region
        $region73: #{tpu_custom_call.1} parent=67 // pred_check
          %p421 = pneg %p73
        $region74: #{tpu_custom_call.1} parent=67 // pred_check_branch
          %423 = sbr.rel (%p421) target = $region76
        $region75: #{tpu_custom_call.1} parent=67 // pred_region
          %424 = dma.done [#allocation7], 128
        $region76: #{tpu_custom_call.1} parent=67 // pred_fallthru
          _
        // Predicated region
        $region77: #{tpu_custom_call.1} parent=67 // pred_check
          %p425 = pneg %p94
        $region78: #{tpu_custom_call.1} parent=67 // pred_check_branch
          %427 = sbr.rel (%p425) target = $region80
        $region79: #{tpu_custom_call.1} parent=67 // pred_region
          %428 = dma.done [#allocation7], 128
        $region80: #{tpu_custom_call.1} parent=67 // pred_fallthru
          _
        // Predicated region
        $region81: #{tpu_custom_call.1} parent=67 // pred_check
          %p429 = pneg %p115
        $region82: #{tpu_custom_call.1} parent=67 // pred_check_branch
          %431 = sbr.rel (%p429) target = $region84
        $region83: #{tpu_custom_call.1} parent=67 // pred_region
          %432 = dma.done [#allocation10], 256
        $region84: #{tpu_custom_call.1} parent=67 // pred_fallthru
          _
        %s433 = sand.u32 %s39, 1
        %s434 = scalar_lea.sflag [#allocation4], %s433
        %s435 = sand.u32 %s39, 1
        %s436 = smul.addr %s435, 8
        %s437 = scalar_lea.vmem [#allocation3], %s436
        %p438 = pneg %p52
        %p439 = pneg %p49
        %p440 = pneg %p73
        %p441 = pneg %p70
        %p442 = pneg %p94
        %p443 = pneg %p91
        %p444 = pneg %p115
        %p445 = pneg %p112
        %p446 = pneg %p136
        %p447 = pneg %p133
        %p448 = pneg %p157
        %p449 = pneg %p154
        %p450 = pneg %p178
        %p451 = pneg %p175
        %p452 = pneg %p199
        %p453 = pneg %p196
        %p454 = pneg %p220
        %p455 = pneg %p217
        %p456 = pneg %p241
        %p457 = pneg %p238
        %p458 = pneg %p262
        %p459 = pneg %p259
        %p460 = pneg %p283
        %p461 = pneg %p280
        %p462 = pneg %p309
        %p463 = pneg %p306
        %s464 = sand.u32 %s296, 1
        %s465 = scalar_lea.sflag [#allocation5], %s464
        %s466 = sand.u32 %s296, 1
        %s467 = smul.addr %s466, 8
        %s468 = scalar_lea.vmem [#allocation11], %s467
        %v470 = vld [vmem:[%s416] sm:$0xff]
        %v471 = vpack.c.bf16 %v470, %v470
        %v472 = vld [vmem:[#allocation9] sm:$0xf]
        %v473 = vld [vmem:[#allocation9 + $0x4] sm:$0xf]
        %v474 = vld [vmem:[#allocation9 + $0x8] sm:$0xf]
        %v475 = vld [vmem:[#allocation9 + $0xc] sm:$0xf]
        %v476 = vld [vmem:[%s4] sm:$0x1]
        %v478 = vlaneseq
        %v479 = vshrl.u32 %v478, 7
        %v480 = vsub.s32 0, %v479
        %v481 = vrot.slane %v476, %v480
        %v487 = vunpack.c.l.b16 %v472
        %v488 = vunpack.c.l.b16 %v473
        %v489 = vunpack.c.l.b16 %v474
        %v490 = vunpack.c.l.b16 %v475
        %v491 = vpack.c.b16 %v488, %v487
        %v492 = vpack.c.b16 %v490, %v489
        %vm495 = vcmask 261120
        %v497 = vsel %vm495, %v471, 0
        %499 = vmatprep.subr.bf16.mxu0 0
        %500 = vmatpush1.bf16.msra.mxu0 %v491
        %501 = vmatprep.subr.bf16.mxu0 0
        %502 = vmatpush1.bf16.msra.mxu0 %v492
        %503 = vmatprep.subr.bf16.mxu0 0
        %504 = vmatpush1.bf16.msra.mxu0 0
        %505 = vmatprep.subr.bf16.mxu0 0
        %506 = vmatpush1.bf16.msra.mxu0 0
        %507 = vmatprep.subr.bf16.mxu0 0
        %508 = vmatpush1.bf16.msra.mxu0 0
        %509 = vmatprep.subr.bf16.mxu0 0
        %510 = vmatpush1.bf16.msra.mxu0 0
        %511 = vmatprep.subr.bf16.mxu0 0
        %512 = vmatpush1.bf16.msra.mxu0 0
        %513 = vmatprep.subr.bf16.mxu0 0
        %514 = vmatpush1.bf16.msra.mxu0 0
        %515 = vmatprep.subr.bf16.mxu0 0
        %516 = vmatpush1.bf16.msra.mxu0 0
        %517 = vmatprep.subr.bf16.mxu0 0
        %518 = vmatpush1.bf16.msra.mxu0 0
        %519 = vmatprep.subr.bf16.mxu0 0
        %520 = vmatpush1.bf16.msra.mxu0 0
        %521 = vmatprep.subr.bf16.mxu0 0
        %522 = vmatpush1.bf16.msra.mxu0 0
        %523 = vmatprep.subr.bf16.mxu0 0
        %524 = vmatpush1.bf16.msra.mxu0 0
        %525 = vmatprep.subr.bf16.mxu0 0
        %526 = vmatpush1.bf16.msra.mxu0 0
        %527 = vmatprep.subr.bf16.mxu0 0
        %528 = vmatpush1.bf16.msra.mxu0 0
        %529 = vmatprep.subr.bf16.mxu0 0
        %530 = vmatpush1.bf16.msra.mxu0 0
        %531 = vmatprep.mubr.bf16.mxu0 0
        %532 = vmatmul.mubr.bf16.gmra.mrb[0].mxu0 %v497
        %v533 = vpop.f32.mrb[0].mxu0
        %v534 = vadd.f32 %v481, %v533
        %v535 = vpop.f32.mrb[0].mxu0
        %v536 = vpop.f32.mrb[0].mxu0
        %v537 = vpop.f32.mrb[0].mxu0
        %538 = vdwg.mxu0
        %v539 = vpack.c.bf16 %v534, %v534
        %v540 = vlaneseq
        %v541 = vshrl.u32 %v540, 7
        %v542 = vlaneseq
        %v543 = vand.u32 %v542, 127
        %vm544 = vcmp.le.s32.totalorder %v543, %v541
        %v545 = vsel %vm544, 0.0, -10000.0
        %547 = vrot.lane.b32.xlu0 %v539, 96
        %v548 = vpop.permute.xlu0 %547
        %vm549 = vcmask 130048
        %v551 = vsel %vm549, %v539, 0
        %v554 = vsel %vm549, %v548, 0
        %556 = vmatprep.subr.bf16.mxu0 0
        %557 = vmatpush1.bf16.xpose.msra.mxu0 %v554
        %558 = vmatprep.subr.bf16.mxu0 0
        %559 = vmatpush1.bf16.xpose.msra.mxu0 0
        %560 = vmatprep.subr.bf16.mxu0 0
        %561 = vmatpush1.bf16.xpose.msra.mxu0 0
        %562 = vmatprep.subr.bf16.mxu0 0
        %563 = vmatpush1.bf16.xpose.msra.mxu0 0
        %564 = vmatprep.subr.bf16.mxu0 0
        %565 = vmatpush1.bf16.xpose.msra.mxu0 0
        %566 = vmatprep.subr.bf16.mxu0 0
        %567 = vmatpush1.bf16.xpose.msra.mxu0 0
        %568 = vmatprep.subr.bf16.mxu0 0
        %569 = vmatpush1.bf16.xpose.msra.mxu0 0
        %570 = vmatprep.subr.bf16.mxu0 0
        %571 = vmatpush1.bf16.xpose.msra.mxu0 0
        %572 = vmatprep.subr.bf16.mxu0 0
        %573 = vmatpush1.bf16.xpose.msra.mxu0 0
        %574 = vmatprep.subr.bf16.mxu0 0
        %575 = vmatpush1.bf16.xpose.msra.mxu0 0
        %576 = vmatprep.subr.bf16.mxu0 0
        %577 = vmatpush1.bf16.xpose.msra.mxu0 0
        %578 = vmatprep.subr.bf16.mxu0 0
        %579 = vmatpush1.bf16.xpose.msra.mxu0 0
        %580 = vmatprep.subr.bf16.mxu0 0
        %581 = vmatpush1.bf16.xpose.msra.mxu0 0
        %582 = vmatprep.subr.bf16.mxu0 0
        %583 = vmatpush1.bf16.xpose.msra.mxu0 0
        %584 = vmatprep.subr.bf16.mxu0 0
        %585 = vmatpush1.bf16.xpose.msra.mxu0 0
        %586 = vmatprep.subr.bf16.mxu0 0
        %587 = vmatpush1.bf16.xpose.msra.mxu0 0
        %588 = vmatprep.mubr.bf16.mxu0 0
        %589 = vmatmul.mubr.bf16.gmra.mrb[0].mxu0 %v551
        %v590 = vpop.f32.mrb[0].mxu0
        %v591 = vadd.f32 0.0, %v590
        %v592 = vpop.f32.mrb[0].mxu0
        %v593 = vpop.f32.mrb[0].mxu0
        %v594 = vpop.f32.mrb[0].mxu0
        %595 = vdwg.mxu0
        %v596 = vmul.f32 %v591, 0.25
        %v597 = vadd.f32 %v596, %v545
        %vm598 = vcmask 64512
        %v599 = vsel %vm598, %v597, -inf
        %600 = vmax.xlane.f32.xlu0 %v599
        %v601 = vpop.xlane.xlu0 %600
        %v602 = vsub.f32 %v597, %v601
        %v603 = vmul.f32 %v602, 1.442695
        %v604 = vpow.pop %v603
        %v605 = vsel %vm598, %v604, 0.0
        %606 = vadd.xlane.f32.xlu0 %v605
        %v607 = vpop.xlane.xlu0 %606
        %v608 = vrcp.pop %v607
        %v609 = vmul.f32 %v604, %v608
        %v610 = vpack.c.bf16 %v609, %v609
        %611 = vrot.lane.b32.xlu0 %v539, 64
        %v612 = vpop.permute.xlu0 %611
        %v614 = vsel %vm598, %v610, 0
        %vm616 = vcmask 1043456
        %v618 = vsel %vm616, %v612, 0
        %620 = vmatprep.subr.bf16.mxu0 0
        %621 = vmatpush1.bf16.msra.mxu0 %v618
        %622 = vmatprep.subr.bf16.mxu0 0
        %623 = vmatpush1.bf16.msra.mxu0 0
        %624 = vmatprep.subr.bf16.mxu0 0
        %625 = vmatpush1.bf16.msra.mxu0 0
        %626 = vmatprep.subr.bf16.mxu0 0
        %627 = vmatpush1.bf16.msra.mxu0 0
        %628 = vmatprep.subr.bf16.mxu0 0
        %629 = vmatpush1.bf16.msra.mxu0 0
        %630 = vmatprep.subr.bf16.mxu0 0
        %631 = vmatpush1.bf16.msra.mxu0 0
        %632 = vmatprep.subr.bf16.mxu0 0
        %633 = vmatpush1.bf16.msra.mxu0 0
        %634 = vmatprep.subr.bf16.mxu0 0
        %635 = vmatpush1.bf16.msra.mxu0 0
        %636 = vmatprep.subr.bf16.mxu0 0
        %637 = vmatpush1.bf16.msra.mxu0 0
        %638 = vmatprep.subr.bf16.mxu0 0
        %639 = vmatpush1.bf16.msra.mxu0 0
        %640 = vmatprep.subr.bf16.mxu0 0
        %641 = vmatpush1.bf16.msra.mxu0 0
        %642 = vmatprep.subr.bf16.mxu0 0
        %643 = vmatpush1.bf16.msra.mxu0 0
        %644 = vmatprep.subr.bf16.mxu0 0
        %645 = vmatpush1.bf16.msra.mxu0 0
        %646 = vmatprep.subr.bf16.mxu0 0
        %647 = vmatpush1.bf16.msra.mxu0 0
        %648 = vmatprep.subr.bf16.mxu0 0
        %649 = vmatpush1.bf16.msra.mxu0 0
        %650 = vmatprep.subr.bf16.mxu0 0
        %651 = vmatpush1.bf16.msra.mxu0 0
        %652 = vmatprep.mubr.bf16.mxu0 0
        %653 = vmatmul.mubr.bf16.gmra.mrb[0].mxu0 %v614
        %v654 = vpop.f32.mrb[0].mxu0
        %v655 = vadd.f32 0.0, %v654
        %v656 = vpop.f32.mrb[0].mxu0
        %v657 = vpop.f32.mrb[0].mxu0
        %v658 = vpop.f32.mrb[0].mxu0
        %659 = vdwg.mxu0
        %660 = vst.msk [vmem:[#allocation2] sm:$0xff] %vm549, %v655
        %661 = vrot.lane.b32.xlu0 %v539, 112
        %v662 = vpop.permute.xlu0 %661
        %663 = vrot.lane.b32.xlu0 %v539, 80
        %v664 = vpop.permute.xlu0 %663
        %v666 = vsel %vm549, %v662, 0
        %v669 = vsel %vm549, %v664, 0
        %671 = vmatprep.subr.bf16.mxu0 0
        %672 = vmatpush1.bf16.xpose.msra.mxu0 %v669
        %673 = vmatprep.subr.bf16.mxu0 0
        %674 = vmatpush1.bf16.xpose.msra.mxu0 0
        %675 = vmatprep.subr.bf16.mxu0 0
        %676 = vmatpush1.bf16.xpose.msra.mxu0 0
        %677 = vmatprep.subr.bf16.mxu0 0
        %678 = vmatpush1.bf16.xpose.msra.mxu0 0
        %679 = vmatprep.subr.bf16.mxu0 0
        %680 = vmatpush1.bf16.xpose.msra.mxu0 0
        %681 = vmatprep.subr.bf16.mxu0 0
        %682 = vmatpush1.bf16.xpose.msra.mxu0 0
        %683 = vmatprep.subr.bf16.mxu0 0
        %684 = vmatpush1.bf16.xpose.msra.mxu0 0
        %685 = vmatprep.subr.bf16.mxu0 0
        %686 = vmatpush1.bf16.xpose.msra.mxu0 0
        %687 = vmatprep.subr.bf16.mxu0 0
        %688 = vmatpush1.bf16.xpose.msra.mxu0 0
        %689 = vmatprep.subr.bf16.mxu0 0
        %690 = vmatpush1.bf16.xpose.msra.mxu0 0
        %691 = vmatprep.subr.bf16.mxu0 0
        %692 = vmatpush1.bf16.xpose.msra.mxu0 0
        %693 = vmatprep.subr.bf16.mxu0 0
        %694 = vmatpush1.bf16.xpose.msra.mxu0 0
        %695 = vmatprep.subr.bf16.mxu0 0
        %696 = vmatpush1.bf16.xpose.msra.mxu0 0
        %697 = vmatprep.subr.bf16.mxu0 0
        %698 = vmatpush1.bf16.xpose.msra.mxu0 0
        %699 = vmatprep.subr.bf16.mxu0 0
        %700 = vmatpush1.bf16.xpose.msra.mxu0 0
        %701 = vmatprep.subr.bf16.mxu0 0
        %702 = vmatpush1.bf16.xpose.msra.mxu0 0
        %703 = vmatprep.mubr.bf16.mxu0 0
        %704 = vmatmul.mubr.bf16.gmra.mrb[0].mxu0 %v666
        %v705 = vpop.f32.mrb[0].mxu0
        %v706 = vadd.f32 0.0, %v705
        %v707 = vpop.f32.mrb[0].mxu0
        %v708 = vpop.f32.mrb[0].mxu0
        %v709 = vpop.f32.mrb[0].mxu0
        %710 = vdwg.mxu0
        %v711 = vmul.f32 %v706, 0.25
        %v712 = vadd.f32 %v711, %v545
        %v713 = vsel %vm598, %v712, -inf
        %714 = vmax.xlane.f32.xlu0 %v713
        %v715 = vpop.xlane.xlu0 %714
        %v716 = vsub.f32 %v712, %v715
        %v717 = vmul.f32 %v716, 1.442695
        %v718 = vpow.pop %v717
        %v719 = vsel %vm598, %v718, 0.0
        %720 = vadd.xlane.f32.xlu0 %v719
        %v721 = vpop.xlane.xlu0 %720
        %v722 = vrcp.pop %v721
        %v723 = vmul.f32 %v718, %v722
        %v724 = vpack.c.bf16 %v723, %v723
        %725 = vrot.lane.b32.xlu0 %v539, 48
        %v726 = vpop.permute.xlu0 %725
        %v728 = vsel %vm598, %v724, 0
        %v731 = vsel %vm616, %v726, 0
        %733 = vmatprep.subr.bf16.mxu0 0
        %734 = vmatpush1.bf16.msra.mxu0 %v731
        %735 = vmatprep.subr.bf16.mxu0 0
        %736 = vmatpush1.bf16.msra.mxu0 0
        %737 = vmatprep.subr.bf16.mxu0 0
        %738 = vmatpush1.bf16.msra.mxu0 0
        %739 = vmatprep.subr.bf16.mxu0 0
        %740 = vmatpush1.bf16.msra.mxu0 0
        %741 = vmatprep.subr.bf16.mxu0 0
        %742 = vmatpush1.bf16.msra.mxu0 0
        %743 = vmatprep.subr.bf16.mxu0 0
        %744 = vmatpush1.bf16.msra.mxu0 0
        %745 = vmatprep.subr.bf16.mxu0 0
        %746 = vmatpush1.bf16.msra.mxu0 0
        %747 = vmatprep.subr.bf16.mxu0 0
        %748 = vmatpush1.bf16.msra.mxu0 0
        %749 = vmatprep.subr.bf16.mxu0 0
        %750 = vmatpush1.bf16.msra.mxu0 0
        %751 = vmatprep.subr.bf16.mxu0 0
        %752 = vmatpush1.bf16.msra.mxu0 0
        %753 = vmatprep.subr.bf16.mxu0 0
        %754 = vmatpush1.bf16.msra.mxu0 0
        %755 = vmatprep.subr.bf16.mxu0 0
        %756 = vmatpush1.bf16.msra.mxu0 0
        %757 = vmatprep.subr.bf16.mxu0 0
        %758 = vmatpush1.bf16.msra.mxu0 0
        %759 = vmatprep.subr.bf16.mxu0 0
        %760 = vmatpush1.bf16.msra.mxu0 0
        %761 = vmatprep.subr.bf16.mxu0 0
        %762 = vmatpush1.bf16.msra.mxu0 0
        %763 = vmatprep.subr.bf16.mxu0 0
        %764 = vmatpush1.bf16.msra.mxu0 0
        %765 = vmatprep.mubr.bf16.mxu0 0
        %766 = vmatmul.mubr.bf16.gmra.mrb[0].mxu0 %v728
        %v767 = vpop.f32.mrb[0].mxu0
        %v768 = vadd.f32 0.0, %v767
        %v769 = vpop.f32.mrb[0].mxu0
        %v770 = vpop.f32.mrb[0].mxu0
        %v771 = vpop.f32.mrb[0].mxu0
        %772 = vdwg.mxu0
        %774 = vrot.lane.b32.xlu0 %v768, 16
        %v775 = vpop.permute.xlu0 %774
        %vm777 = vcmask 261248
        %778 = vst.msk [vmem:[#allocation2] sm:$0xff] %vm777, %v775
        %v779 = vld [vmem:[#allocation2] sm:$0xff]
        %v780 = vpack.c.bf16 %v779, %v779
        %v781 = vld [vmem:[%s5] sm:$0xf]
        %v782 = vld [vmem:[%s5 + $0x4] sm:$0xf]
        %v783 = vld [vmem:[%s5 + $0x8] sm:$0xf]
        %v784 = vld [vmem:[%s5 + $0xc] sm:$0xf]
        %v785 = vld [vmem:[%s6] sm:$0x1]
        %v787 = vlaneseq
        %v788 = vshrl.u32 %v787, 7
        %v789 = vsub.s32 0, %v788
        %v790 = vrot.slane %v785, %v789
        %v796 = vunpack.c.l.b16 %v781
        %v797 = vunpack.c.l.b16 %v782
        %v798 = vunpack.c.l.b16 %v783
        %v799 = vunpack.c.l.b16 %v784
        %v800 = vpack.c.b16 %v797, %v796
        %v801 = vpack.c.b16 %v799, %v798
        %v805 = vsel %vm495, %v780, 0
        %807 = vmatprep.subr.bf16.mxu0 0
        %808 = vmatpush1.bf16.msra.mxu0 %v800
        %809 = vmatprep.subr.bf16.mxu0 0
        %810 = vmatpush1.bf16.msra.mxu0 %v801
        %811 = vmatprep.subr.bf16.mxu0 0
        %812 = vmatpush1.bf16.msra.mxu0 0
        %813 = vmatprep.subr.bf16.mxu0 0
        %814 = vmatpush1.bf16.msra.mxu0 0
        %815 = vmatprep.subr.bf16.mxu0 0
        %816 = vmatpush1.bf16.msra.mxu0 0
        %817 = vmatprep.subr.bf16.mxu0 0
        %818 = vmatpush1.bf16.msra.mxu0 0
        %819 = vmatprep.subr.bf16.mxu0 0
        %820 = vmatpush1.bf16.msra.mxu0 0
        %821 = vmatprep.subr.bf16.mxu0 0
        %822 = vmatpush1.bf16.msra.mxu0 0
        %823 = vmatprep.subr.bf16.mxu0 0
        %824 = vmatpush1.bf16.msra.mxu0 0
        %825 = vmatprep.subr.bf16.mxu0 0
        %826 = vmatpush1.bf16.msra.mxu0 0
        %827 = vmatprep.subr.bf16.mxu0 0
        %828 = vmatpush1.bf16.msra.mxu0 0
        %829 = vmatprep.subr.bf16.mxu0 0
        %830 = vmatpush1.bf16.msra.mxu0 0
        %831 = vmatprep.subr.bf16.mxu0 0
        %832 = vmatpush1.bf16.msra.mxu0 0
        %833 = vmatprep.subr.bf16.mxu0 0
        %834 = vmatpush1.bf16.msra.mxu0 0
        %835 = vmatprep.subr.bf16.mxu0 0
        %836 = vmatpush1.bf16.msra.mxu0 0
        %837 = vmatprep.subr.bf16.mxu0 0
        %838 = vmatpush1.bf16.msra.mxu0 0
        %839 = vmatprep.mubr.bf16.mxu0 0
        %840 = vmatmul.mubr.bf16.gmra.mrb[0].mxu0 %v805
        %v841 = vpop.f32.mrb[0].mxu0
        %v842 = vadd.f32 %v790, %v841
        %v843 = vpop.f32.mrb[0].mxu0
        %v844 = vpop.f32.mrb[0].mxu0
        %v845 = vpop.f32.mrb[0].mxu0
        %846 = vdwg.mxu0
        %v847 = vadd.f32 %v842, %v470
        %v848 = vld [vmem:[%s7] sm:$0x1]
        %v849 = vld [vmem:[%s8] sm:$0x1]
        %v850 = vsel %vm495, %v847, 0.0
        %851 = vadd.xlane.f32.xlu0 %v850
        %v852 = vpop.xlane.xlu0 %851
        %v853 = vrcp.pop 32.0
        %v854 = vmul.f32 %v852, %v853
        %v855 = vsub.f32 %v847, %v854
        %v856 = vmul.f32 %v855, %v855
        %v857 = vsel %vm495, %v856, 0.0
        %858 = vadd.xlane.f32.xlu0 %v857
        %v859 = vpop.xlane.xlu0 %858
        %v860 = vmul.f32 %v859, %v853
        %v861 = vadd.f32 %v860, 1e-12
        %v862 = vrsqrt.pop %v861
        %v863 = vmul.f32 %v855, %v862
        %v865 = vlaneseq
        %v866 = vshrl.u32 %v865, 7
        %v867 = vsub.s32 0, %v866
        %v868 = vrot.slane %v848, %v867
        %v870 = vmul.f32 %v863, %v868
        %v872 = vlaneseq
        %v873 = vshrl.u32 %v872, 7
        %v874 = vsub.s32 0, %v873
        %v875 = vrot.slane %v849, %v874
        %v877 = vadd.f32 %v870, %v875
        %v878 = vld [vmem:[#allocation8] sm:$0xff]
        %v879 = vld [vmem:[#allocation6] sm:$0xff]
        %v881 = vsel %vm598, %v878, 0
        %883 = vmatprep.subr.mxu0 0.0
        %884 = vmatpush1.msra.mxu0 %v470
        %885 = vmatprep.subr.mxu0 0.0
        %886 = vmatpush1.msra.mxu0 0.0
        %887 = vmatprep.subr.mxu0 0.0
        %888 = vmatpush1.msra.mxu0 0.0
        %889 = vmatprep.subr.mxu0 0.0
        %890 = vmatpush1.msra.mxu0 0.0
        %891 = vmatprep.subr.mxu0 0.0
        %892 = vmatpush1.msra.mxu0 0.0
        %893 = vmatprep.subr.mxu0 0.0
        %894 = vmatpush1.msra.mxu0 0.0
        %895 = vmatprep.subr.mxu0 0.0
        %896 = vmatpush1.msra.mxu0 0.0
        %897 = vmatprep.subr.mxu0 0.0
        %898 = vmatpush1.msra.mxu0 0.0
        %899 = vmatprep.subr.mxu0 0.0
        %900 = vmatpush1.msra.mxu0 0.0
        %901 = vmatprep.subr.mxu0 0.0
        %902 = vmatpush1.msra.mxu0 0.0
        %903 = vmatprep.subr.mxu0 0.0
        %904 = vmatpush1.msra.mxu0 0.0
        %905 = vmatprep.subr.mxu0 0.0
        %906 = vmatpush1.msra.mxu0 0.0
        %907 = vmatprep.subr.mxu0 0.0
        %908 = vmatpush1.msra.mxu0 0.0
        %909 = vmatprep.subr.mxu0 0.0
        %910 = vmatpush1.msra.mxu0 0.0
        %911 = vmatprep.subr.mxu0 0.0
        %912 = vmatpush1.msra.mxu0 0.0
        %913 = vmatprep.subr.mxu0 0.0
        %914 = vmatpush1.msra.mxu0 0.0
        %915 = vmatprep.subr.mxu0 0.0
        %916 = vmatpush1.msra.mxu0 0.0
        %917 = vmatprep.subr.mxu0 0.0
        %918 = vmatpush1.msra.mxu0 0.0
        %919 = vmatprep.subr.mxu0 0.0
        %920 = vmatpush1.msra.mxu0 0.0
        %921 = vmatprep.subr.mxu0 0.0
        %922 = vmatpush1.msra.mxu0 0.0
        %923 = vmatprep.subr.mxu0 0.0
        %924 = vmatpush1.msra.mxu0 0.0
        %925 = vmatprep.subr.mxu0 0.0
        %926 = vmatpush1.msra.mxu0 0.0
        %927 = vmatprep.subr.mxu0 0.0
        %928 = vmatpush1.msra.mxu0 0.0
        %929 = vmatprep.subr.mxu0 0.0
        %930 = vmatpush1.msra.mxu0 0.0
        %931 = vmatprep.subr.mxu0 0.0
        %932 = vmatpush1.msra.mxu0 0.0
        %933 = vmatprep.subr.mxu0 0.0
        %934 = vmatpush1.msra.mxu0 0.0
        %935 = vmatprep.subr.mxu0 0.0
        %936 = vmatpush1.msra.mxu0 0.0
        %937 = vmatprep.subr.mxu0 0.0
        %938 = vmatpush1.msra.mxu0 0.0
        %939 = vmatprep.subr.mxu0 0.0
        %940 = vmatpush1.msra.mxu0 0.0
        %941 = vmatprep.subr.mxu0 0.0
        %942 = vmatpush1.msra.mxu0 0.0
        %943 = vmatprep.subr.mxu0 0.0
        %944 = vmatpush1.msra.mxu0 0.0
        %945 = vmatprep.subr.mxu0 0.0
        %946 = vmatpush1.msra.mxu0 0.0
        %947 = vmatprep.mubr.f32.mxu0 0.0
        %948 = vmatmul.mubr.f32.gmra.mrb[0].mxu0 %v881
        %v949 = vpop.f32.mrb[0].mxu0
        %v950 = vadd.f32 0.0, %v949
        %v951 = vpop.f32.mrb[0].mxu0
        %952 = vdwg.mxu0
        %v954 = vsel %vm598, %v879, 0
        %956 = vmatprep.subr.mxu0 0.0
        %957 = vmatpush1.msra.mxu0 %v950
        %958 = vmatprep.subr.mxu0 0.0
        %959 = vmatpush1.msra.mxu0 0.0
        %960 = vmatprep.subr.mxu0 0.0
        %961 = vmatpush1.msra.mxu0 0.0
        %962 = vmatprep.subr.mxu0 0.0
        %963 = vmatpush1.msra.mxu0 0.0
        %964 = vmatprep.subr.mxu0 0.0
        %965 = vmatpush1.msra.mxu0 0.0
        %966 = vmatprep.subr.mxu0 0.0
        %967 = vmatpush1.msra.mxu0 0.0
        %968 = vmatprep.subr.mxu0 0.0
        %969 = vmatpush1.msra.mxu0 0.0
        %970 = vmatprep.subr.mxu0 0.0
        %971 = vmatpush1.msra.mxu0 0.0
        %972 = vmatprep.subr.mxu0 0.0
        %973 = vmatpush1.msra.mxu0 0.0
        %974 = vmatprep.subr.mxu0 0.0
        %975 = vmatpush1.msra.mxu0 0.0
        %976 = vmatprep.subr.mxu0 0.0
        %977 = vmatpush1.msra.mxu0 0.0
        %978 = vmatprep.subr.mxu0 0.0
        %979 = vmatpush1.msra.mxu0 0.0
        %980 = vmatprep.subr.mxu0 0.0
        %981 = vmatpush1.msra.mxu0 0.0
        %982 = vmatprep.subr.mxu0 0.0
        %983 = vmatpush1.msra.mxu0 0.0
        %984 = vmatprep.subr.mxu0 0.0
        %985 = vmatpush1.msra.mxu0 0.0
        %986 = vmatprep.subr.mxu0 0.0
        %987 = vmatpush1.msra.mxu0 0.0
        %988 = vmatprep.subr.mxu0 0.0
        %989 = vmatpush1.msra.mxu0 0.0
        %990 = vmatprep.subr.mxu0 0.0
        %991 = vmatpush1.msra.mxu0 0.0
        %992 = vmatprep.subr.mxu0 0.0
        %993 = vmatpush1.msra.mxu0 0.0
        %994 = vmatprep.subr.mxu0 0.0
        %995 = vmatpush1.msra.mxu0 0.0
        %996 = vmatprep.subr.mxu0 0.0
        %997 = vmatpush1.msra.mxu0 0.0
        %998 = vmatprep.subr.mxu0 0.0
        %999 = vmatpush1.msra.mxu0 0.0
        %1000 = vmatprep.subr.mxu0 0.0
        %1001 = vmatpush1.msra.mxu0 0.0
        %1002 = vmatprep.subr.mxu0 0.0
        %1003 = vmatpush1.msra.mxu0 0.0
        %1004 = vmatprep.subr.mxu0 0.0
        %1005 = vmatpush1.msra.mxu0 0.0
        %1006 = vmatprep.subr.mxu0 0.0
        %1007 = vmatpush1.msra.mxu0 0.0
        %1008 = vmatprep.subr.mxu0 0.0
        %1009 = vmatpush1.msra.mxu0 0.0
        %1010 = vmatprep.subr.mxu0 0.0
        %1011 = vmatpush1.msra.mxu0 0.0
        %1012 = vmatprep.subr.mxu0 0.0
        %1013 = vmatpush1.msra.mxu0 0.0
        %1014 = vmatprep.subr.mxu0 0.0
        %1015 = vmatpush1.msra.mxu0 0.0
        %1016 = vmatprep.subr.mxu0 0.0
        %1017 = vmatpush1.msra.mxu0 0.0
        %1018 = vmatprep.subr.mxu0 0.0
        %1019 = vmatpush1.msra.mxu0 0.0
        %1020 = vmatprep.mubr.f32.mxu0 0.0
        %1021 = vmatmul.mubr.f32.gmra.mrb[0].mxu0 %v954
        %v1022 = vpop.f32.mrb[0].mxu0
        %v1023 = vadd.f32 0.0, %v1022
        %v1024 = vpop.f32.mrb[0].mxu0
        %1025 = vdwg.mxu0
        %v1026 = vld [vmem:[%s9] sm:$0x1]
        %v1027 = vmul.f32 %v1026, %v1026
        %v1028 = vsub.f32 %v470, %v1023
        %v1030 = vlaneseq
        %v1031 = vshrl.u32 %v1030, 7
        %v1032 = vsub.s32 0, %v1031
        %v1033 = vrot.slane %v1027, %v1032
        %v1035 = vmul.f32 %v1033, %v1028
        %v1036 = vadd.f32 %v1023, %v1035
        %v1037 = vadd.f32 %v1036, %v470
        %v1038 = vld [vmem:[%s10] sm:$0x1]
        %v1039 = vld [vmem:[%s11] sm:$0x1]
        %v1040 = vsel %vm495, %v1037, 0.0
        %1041 = vadd.xlane.f32.xlu0 %v1040
        %v1042 = vpop.xlane.xlu0 %1041
        %v1043 = vmul.f32 %v1042, %v853
        %v1044 = vsub.f32 %v1037, %v1043
        %v1045 = vmul.f32 %v1044, %v1044
        %v1046 = vsel %vm495, %v1045, 0.0
        %1047 = vadd.xlane.f32.xlu0 %v1046
        %v1048 = vpop.xlane.xlu0 %1047
        %v1049 = vmul.f32 %v1048, %v853
        %v1050 = vadd.f32 %v1049, 1e-12
        %v1051 = vrsqrt.pop %v1050
        %v1052 = vmul.f32 %v1044, %v1051
        %v1054 = vlaneseq
        %v1055 = vshrl.u32 %v1054, 7
        %v1056 = vsub.s32 0, %v1055
        %v1057 = vrot.slane %v1038, %v1056
        %v1059 = vmul.f32 %v1052, %v1057
        %v1061 = vlaneseq
        %v1062 = vshrl.u32 %v1061, 7
        %v1063 = vsub.s32 0, %v1062
        %v1064 = vrot.slane %v1039, %v1063
        %v1066 = vadd.f32 %v1059, %v1064
        %v1067 = vmul.f32 %v1066, 0.7
        %v1068 = vmul.f32 %v877, 0.3
        %v1069 = vadd.f32 %v1067, %v1068
        %1070 = vst.msk [vmem:[%s468] sm:$0xff] %vm495, %v1069
        %s1071 = sand.u32 %s296, 1
        %s1072 = scalar_lea.sflag [#allocation5], %s1071
        %s1073 = sand.u32 %s296, 1
        %s1074 = smul.addr %s1073, 8
        %s1075 = scalar_lea.vmem [#allocation11], %s1074
        // Predicated region
        $region85: #{tpu_custom_call.1} parent=67 // pred_check
          %p1076 = pneg %p306
        $region86: #{tpu_custom_call.1} parent=67 // pred_check_branch
          %1078 = sbr.rel (%p1076) target = $region88
        $region87: #{tpu_custom_call.1} parent=67 // pred_region
          %s1080 = ssub.s32 128, 128
          %1081 = vsyncadd %s1072, %s1080
          %s1082 = smul.addr %s31, 128
          %s1083 = scalar_lea.hbm %s12, %s1082
          %s1085 = sshll.u32 %s1075, 4
          %s1086 = int_to_ptr.vmem [resolvable:$true] %s1085
          %1088 = dma.vmem_to_hbm [thread:$0]  %s1086, 128, %s1083, %s1072
        $region88: #{tpu_custom_call.1} parent=67 // pred_fallthru
          _
      $region68: #{tpu_custom_call.1} parent=5 // pred_fallthru
        _
      %p1089 = scmp.le.s32.totalorder 2, %s26
      // Predicated region
      $region89: #{tpu_custom_call.1} parent=5 // pred_check
        %p1090 = pneg %p1089
      $region90: #{tpu_custom_call.1} parent=5 // pred_check_branch
        %1092 = sbr.rel (%p1090) target = $region92
      $region91: #{tpu_custom_call.1} parent=5 // pred_region
        %s1093 = ssub.s32 %s26, 2
        // Predicated region
        $region93: #{tpu_custom_call.1} parent=91 // pred_check
          %p1094 = pneg %p312
        $region94: #{tpu_custom_call.1} parent=91 // pred_check_branch
          %1096 = sbr.rel (%p1094) target = $region96
        $region95: #{tpu_custom_call.1} parent=91 // pred_region
          %s1097 = sand.u32 %s297, 1
          %s1098 = scalar_lea.sflag [#allocation5], %s1097
          %s1099 = sand.u32 %s297, 1
          %s1100 = smul.addr %s1099, 8
          %s1101 = scalar_lea.vmem [#allocation11], %s1100
          %1102 = dma.done %s1098, 128
        $region96: #{tpu_custom_call.1} parent=91 // pred_fallthru
          _
      $region92: #{tpu_custom_call.1} parent=5 // pred_fallthru
        _
    $region6: #{tpu_custom_call.1} parent=1 // loop_footer
      %s30 = sadd.s32 1, %s26
    $region7: #{tpu_custom_call.1} parent=1 // loop_footer_branch
      %25 = sbr.rel target = $region3
    $region8: #{tpu_custom_call.1} parent=1 // loop_exit
      _
    %1103 = vsyncpa [#allocation4], 1
    %s1104 = scalar_lea.sflag [#allocation4], 1
    %1105 = vsyncpa %s1104, 1
    %1106 = vsyncpa [#allocation7], 1
    %1107 = vsyncpa [#allocation10], 1
    %1108 = vsyncpa [#allocation5], 1
    %s1109 = scalar_lea.sflag [#allocation5], 1
    %1110 = vsyncpa %s1109, 1

// kernel: tpu_custom_call.1
$region0: #{tpu_custom_call.1}
  #allocation0 [shape = 'u32[]', space=smem, size = 0x4, offset = 0x4, fixed_abs, tag = 'smem constant byte address 0x4 - core index']
  #allocation1 [shape = 'u32[144,128]{1,0:T(1,128)}', space=vmem, size = 0x12000, scoped, tag = 'internal scratch']
  #allocation2 [shape = 'f32[8,32]{1,0:T(8,128)}', space=vmem, size = 0x1000, scoped, tag = 'scratch operand']
  %s0 = inlined_call_operand.hbm [shape: f32[16,32], index: 0, kind: input, shape index: {}]
  %s1 = inlined_call_operand.hbm [shape: f32[8,8], index: 1, kind: input, shape index: {}]
  %s2 = inlined_call_operand.hbm [shape: f32[8,8], index: 2, kind: input, shape index: {}]
  %s3 = inlined_call_operand.hbm [shape: bf16[32,96], index: 3, kind: input, shape index: {}]
  %s4 = inlined_call_operand.vmem [shape: f32[1,96], index: 4, kind: input, shape index: {}]
  %s5 = inlined_call_operand.vmem [shape: bf16[32,32], index: 5, kind: input, shape index: {}]
  %s6 = inlined_call_operand.vmem [shape: f32[1,32], index: 6, kind: input, shape index: {}]
  %s7 = inlined_call_operand.vmem [shape: f32[1,32], index: 7, kind: input, shape index: {}]
  %s8 = inlined_call_operand.vmem [shape: f32[1,32], index: 8, kind: input, shape index: {}]
  %s9 = inlined_call_operand.vmem [shape: f32[1,32], index: 9, kind: input, shape index: {}]
  %s10 = inlined_call_operand.vmem [shape: f32[1,32], index: 10, kind: input, shape index: {}]
  %s11 = inlined_call_operand.vmem [shape: f32[1,32], index: 11, kind: input, shape index: {}]
  %s12 = inlined_call_operand.hbm [shape: f32[16,32], index: 12, kind: output, shape index: {}]
  %s13 = sld [smem:[#allocation0]]
  $region97: #{tpu_custom_call.1} parent=0
    _
  %s15 = ssub.s32 1, %s13
  %s16 = scalar_select 0, %s15, %s13
  $region1: #{tpu_custom_call.1} parent=0
    #allocation3 [shape = 'u8[8192]{0}', space=vmem, size = 0x2000, scoped, tag = 'input window, operand 0']
    #allocation4 [shape = 's32[2]{0}', space=sflag, size = 0x8, scoped, tag = 'scoped memory for tpu_custom_call.1']
    #allocation5 [shape = 's32[2]{0}', space=sflag, size = 0x8, scoped, tag = 'scoped memory for tpu_custom_call.1']
    #allocation6 [shape = 'u8[4096]{0}', space=vmem, size = 0x1000, scoped, tag = 'input window, operand 1, single buffered']
    #allocation7 [shape = 's32[1]{0}', space=sflag, size = 0x4, scoped, tag = 'scoped memory for tpu_custom_call.1']
    #allocation8 [shape = 'u8[4096]{0}', space=vmem, size = 0x1000, scoped, tag = 'input window, operand 2, single buffered']
    #allocation9 [shape = 'u8[8192]{0}', space=vmem, size = 0x2000, scoped, tag = 'input window, operand 3, single buffered']
    #allocation10 [shape = 's32[1]{0}', space=sflag, size = 0x4, scoped, tag = 'scoped memory for tpu_custom_call.1']
    #allocation11 [shape = 'u8[8192]{0}', space=vmem, size = 0x2000, scoped, tag = 'output window, operand 0']
    %17 = vsyncpa [#allocation4], 0
    %s18 = scalar_lea.sflag [#allocation4], 1
    %19 = vsyncpa %s18, 0
    %20 = vsyncpa [#allocation7], 0
    %21 = vsyncpa [#allocation10], 0
    %22 = vsyncpa [#allocation5], 0
    %s23 = scalar_lea.sflag [#allocation5], 1
    %24 = vsyncpa %s23, 0
    loop: start=0, step=1, limit=4
    $region2: #{tpu_custom_call.1} parent=1 // loop_pre_header
      _
    $region3: #{tpu_custom_call.1} parent=1 // loop_header
      %s26 = sphi 0, %s30
      %p27 = scmp.ge.s32.totalorder %s26, 4
      %s36 = sphi 0, %s38
      %s39 = sphi 0, %s36
      %s40 = sphi 0, %s39
      %s56 = sphi 0, %s40
      %s60 = sphi 0, %s60
      %s62 = sphi 0, %s60
      %s63 = sphi 0, %s62
      %s77 = sphi 0, %s63
      %s81 = sphi 0, %s81
      %s83 = sphi 0, %s81
      %s84 = sphi 0, %s83
      %s98 = sphi 0, %s84
      %s102 = sphi 0, %s102
      %s104 = sphi 0, %s102
      %s105 = sphi 0, %s104
      %s119 = sphi 0, %s105
      %s123 = sphi 0, %s123
      %s125 = sphi 0, %s123
      %s126 = sphi 0, %s125
      %s140 = sphi 0, %s126
      %s144 = sphi 0, %s144
      %s146 = sphi 0, %s144
      %s147 = sphi 0, %s146
      %s161 = sphi 0, %s147
      %s165 = sphi 0, %s165
      %s167 = sphi 0, %s165
      %s168 = sphi 0, %s167
      %s182 = sphi 0, %s168
      %s186 = sphi 0, %s186
      %s188 = sphi 0, %s186
      %s189 = sphi 0, %s188
      %s203 = sphi 0, %s189
      %s207 = sphi 0, %s207
      %s209 = sphi 0, %s207
      %s210 = sphi 0, %s209
      %s224 = sphi 0, %s210
      %s228 = sphi 0, %s228
      %s230 = sphi 0, %s228
      %s231 = sphi 0, %s230
      %s245 = sphi 0, %s231
      %s249 = sphi 0, %s249
      %s251 = sphi 0, %s249
      %s252 = sphi 0, %s251
      %s266 = sphi 0, %s252
      %s270 = sphi 0, %s270
      %s272 = sphi 0, %s270
      %s273 = sphi 0, %s272
      %s287 = sphi 0, %s273
      %s293 = sphi 0, %s295
      %s296 = sphi 0, %s293
      %s297 = sphi 0, %s296
      %s313 = sphi 0, %s297
    $region4: #{tpu_custom_call.1} parent=1 // loop_header_branch
      %29 = sbr.rel (%p27) target = $region8
    $region5: #{tpu_custom_call.1} parent=1 // loop_body
      %s31 = ssub.s32 %s26, 1
      %s32 = ssub.s32 %s26, 2
      %s33 = sadd.s32 %s26, 1
      %s34 = ssub.s32 %s26, %s33
      %p35 = scmp.eq.s32.totalorder %s34, 0
      %s37 = sadd.s32 %s36, 1
      %s38 = scalar_select %p35, %s36, %s37
      %p41 = pneg %p35
      %p42 = scmp.eq.s32.totalorder %s26, 1
      %p43 = por %p41, %p42
      %p44 = scmp.ne.s32.totalorder %s36, %s39
      %p45 = scmp.eq.s32.totalorder %s26, 0
      %p46 = por %p44, %p45
      %p47 = scmp.ne.s32.totalorder %s36, %s39
      %p48 = scmp.eq.s32.totalorder %s31, 1
      %p49 = por %p47, %p48
      %p50 = scmp.ne.s32.totalorder %s39, %s40
      %p51 = scmp.eq.s32.totalorder %s31, 0
      %p52 = por %p50, %p51
      %p53 = scmp.ne.s32.totalorder %s39, %s40
      %p54 = scmp.eq.s32.totalorder %s32, 1
      %p55 = por %p53, %p54
      %p57 = scmp.ne.s32.totalorder %s40, %s56
      %p58 = scmp.eq.s32.totalorder %s32, 0
      %p59 = por %p57, %p58
      %s61 = sadd.s32 %s60, 1
      %p64 = scmp.eq.s32.totalorder %s26, 1
      %p65 = scmp.ne.s32.totalorder %s60, %s62
      %p66 = scmp.eq.s32.totalorder %s26, 0
      %p67 = por %p65, %p66
      %p68 = scmp.ne.s32.totalorder %s60, %s62
      %p69 = scmp.eq.s32.totalorder %s31, 1
      %p70 = por %p68, %p69
      %p71 = scmp.ne.s32.totalorder %s62, %s63
      %p72 = scmp.eq.s32.totalorder %s31, 0
      %p73 = por %p71, %p72
      %p74 = scmp.ne.s32.totalorder %s62, %s63
      %p75 = scmp.eq.s32.totalorder %s32, 1
      %p76 = por %p74, %p75
      %p78 = scmp.ne.s32.totalorder %s63, %s77
      %p79 = scmp.eq.s32.totalorder %s32, 0
      %p80 = por %p78, %p79
      %s82 = sadd.s32 %s81, 1
      %p85 = scmp.eq.s32.totalorder %s26, 1
      %p86 = scmp.ne.s32.totalorder %s81, %s83
      %p87 = scmp.eq.s32.totalorder %s26, 0
      %p88 = por %p86, %p87
      %p89 = scmp.ne.s32.totalorder %s81, %s83
      %p90 = scmp.eq.s32.totalorder %s31, 1
      %p91 = por %p89, %p90
      %p92 = scmp.ne.s32.totalorder %s83, %s84
      %p93 = scmp.eq.s32.totalorder %s31, 0
      %p94 = por %p92, %p93
      %p95 = scmp.ne.s32.totalorder %s83, %s84
      %p96 = scmp.eq.s32.totalorder %s32, 1
      %p97 = por %p95, %p96
      %p99 = scmp.ne.s32.totalorder %s84, %s98
      %p100 = scmp.eq.s32.totalorder %s32, 0
      %p101 = por %p99, %p100
      %s103 = sadd.s32 %s102, 1
      %p106 = scmp.eq.s32.totalorder %s26, 1
      %p107 = scmp.ne.s32.totalorder %s102, %s104
      %p108 = scmp.eq.s32.totalorder %s26, 0
      %p109 = por %p107, %p108
      %p110 = scmp.ne.s32.totalorder %s102, %s104
      %p111 = scmp.eq.s32.totalorder %s31, 1
      %p112 = por %p110, %p111
      %p113 = scmp.ne.s32.totalorder %s104, %s105
      %p114 = scmp.eq.s32.totalorder %s31, 0
      %p115 = por %p113, %p114
      %p116 = scmp.ne.s32.totalorder %s104, %s105
      %p117 = scmp.eq.s32.totalorder %s32, 1
      %p118 = por %p116, %p117
      %p120 = scmp.ne.s32.totalorder %s105, %s119
      %p121 = scmp.eq.s32.totalorder %s32, 0
      %p122 = por %p120, %p121
      %s124 = sadd.s32 %s123, 1
      %p127 = scmp.eq.s32.totalorder %s26, 1
      %p128 = scmp.ne.s32.totalorder %s123, %s125
      %p129 = scmp.eq.s32.totalorder %s26, 0
      %p130 = por %p128, %p129
      %p131 = scmp.ne.s32.totalorder %s123, %s125
      %p132 = scmp.eq.s32.totalorder %s31, 1
      %p133 = por %p131, %p132
      %p134 = scmp.ne.s32.totalorder %s125, %s126
      %p135 = scmp.eq.s32.totalorder %s31, 0
      %p136 = por %p134, %p135
      %p137 = scmp.ne.s32.totalorder %s125, %s126
      %p138 = scmp.eq.s32.totalorder %s32, 1
      %p139 = por %p137, %p138
      %p141 = scmp.ne.s32.totalorder %s126, %s140
      %p142 = scmp.eq.s32.totalorder %s32, 0
      %p143 = por %p141, %p142
      %s145 = sadd.s32 %s144, 1
      %p148 = scmp.eq.s32.totalorder %s26, 1
      %p149 = scmp.ne.s32.totalorder %s144, %s146
      %p150 = scmp.eq.s32.totalorder %s26, 0
      %p151 = por %p149, %p150
      %p152 = scmp.ne.s32.totalorder %s144, %s146
      %p153 = scmp.eq.s32.totalorder %s31, 1
      %p154 = por %p152, %p153
      %p155 = scmp.ne.s32.totalorder %s146, %s147
      %p156 = scmp.eq.s32.totalorder %s31, 0
      %p157 = por %p155, %p156
      %p158 = scmp.ne.s32.totalorder %s146, %s147
      %p159 = scmp.eq.s32.totalorder %s32, 1
      %p160 = por %p158, %p159
      %p162 = scmp.ne.s32.totalorder %s147, %s161
      %p163 = scmp.eq.s32.totalorder %s32, 0
      %p164 = por %p162, %p163
      %s166 = sadd.s32 %s165, 1
      %p169 = scmp.eq.s32.totalorder %s26, 1
      %p170 = scmp.ne.s32.totalorder %s165, %s167
      %p171 = scmp.eq.s32.totalorder %s26, 0
      %p172 = por %p170, %p171
      %p173 = scmp.ne.s32.totalorder %s165, %s167
      %p174 = scmp.eq.s32.totalorder %s31, 1
      %p175 = por %p173, %p174
      %p176 = scmp.ne.s32.totalorder %s167, %s168
      %p177 = scmp.eq.s32.totalorder %s31, 0
      %p178 = por %p176, %p177
      %p179 = scmp.ne.s32.totalorder %s167, %s168
      %p180 = scmp.eq.s32.totalorder %s32, 1
      %p181 = por %p179, %p180
      %p183 = scmp.ne.s32.totalorder %s168, %s182
      %p184 = scmp.eq.s32.totalorder %s32, 0
      %p185 = por %p183, %p184
      %s187 = sadd.s32 %s186, 1
      %p190 = scmp.eq.s32.totalorder %s26, 1
      %p191 = scmp.ne.s32.totalorder %s186, %s188
      %p192 = scmp.eq.s32.totalorder %s26, 0
      %p193 = por %p191, %p192
      %p194 = scmp.ne.s32.totalorder %s186, %s188
      %p195 = scmp.eq.s32.totalorder %s31, 1
      %p196 = por %p194, %p195
      %p197 = scmp.ne.s32.totalorder %s188, %s189
      %p198 = scmp.eq.s32.totalorder %s31, 0
      %p199 = por %p197, %p198
      %p200 = scmp.ne.s32.totalorder %s188, %s189
      %p201 = scmp.eq.s32.totalorder %s32, 1
      %p202 = por %p200, %p201
      %p204 = scmp.ne.s32.totalorder %s189, %s203
      %p205 = scmp.eq.s32.totalorder %s32, 0
      %p206 = por %p204, %p205
      %s208 = sadd.s32 %s207, 1
      %p211 = scmp.eq.s32.totalorder %s26, 1
      %p212 = scmp.ne.s32.totalorder %s207, %s209
      %p213 = scmp.eq.s32.totalorder %s26, 0
      %p214 = por %p212, %p213
      %p215 = scmp.ne.s32.totalorder %s207, %s209
      %p216 = scmp.eq.s32.totalorder %s31, 1
      %p217 = por %p215, %p216
      %p218 = scmp.ne.s32.totalorder %s209, %s210
      %p219 = scmp.eq.s32.totalorder %s31, 0
      %p220 = por %p218, %p219
      %p221 = scmp.ne.s32.totalorder %s209, %s210
      %p222 = scmp.eq.s32.totalorder %s32, 1
      %p223 = por %p221, %p222
      %p225 = scmp.ne.s32.totalorder %s210, %s224
      %p226 = scmp.eq.s32.totalorder %s32, 0
      %p227 = por %p225, %p226
      %s229 = sadd.s32 %s228, 1
      %p232 = scmp.eq.s32.totalorder %s26, 1
      %p233 = scmp.ne.s32.totalorder %s228, %s230
      %p234 = scmp.eq.s32.totalorder %s26, 0
      %p235 = por %p233, %p234
      %p236 = scmp.ne.s32.totalorder %s228, %s230
      %p237 = scmp.eq.s32.totalorder %s31, 1
      %p238 = por %p236, %p237
      %p239 = scmp.ne.s32.totalorder %s230, %s231
      %p240 = scmp.eq.s32.totalorder %s31, 0
      %p241 = por %p239, %p240
      %p242 = scmp.ne.s32.totalorder %s230, %s231
      %p243 = scmp.eq.s32.totalorder %s32, 1
      %p244 = por %p242, %p243
      %p246 = scmp.ne.s32.totalorder %s231, %s245
      %p247 = scmp.eq.s32.totalorder %s32, 0
      %p248 = por %p246, %p247
      %s250 = sadd.s32 %s249, 1
      %p253 = scmp.eq.s32.totalorder %s26, 1
      %p254 = scmp.ne.s32.totalorder %s249, %s251
      %p255 = scmp.eq.s32.totalorder %s26, 0
      %p256 = por %p254, %p255
      %p257 = scmp.ne.s32.totalorder %s249, %s251
      %p258 = scmp.eq.s32.totalorder %s31, 1
      %p259 = por %p257, %p258
      %p260 = scmp.ne.s32.totalorder %s251, %s252
      %p261 = scmp.eq.s32.totalorder %s31, 0
      %p262 = por %p260, %p261
      %p263 = scmp.ne.s32.totalorder %s251, %s252
      %p264 = scmp.eq.s32.totalorder %s32, 1
      %p265 = por %p263, %p264
      %p267 = scmp.ne.s32.totalorder %s252, %s266
      %p268 = scmp.eq.s32.totalorder %s32, 0
      %p269 = por %p267, %p268
      %s271 = sadd.s32 %s270, 1
      %p274 = scmp.eq.s32.totalorder %s26, 1
      %p275 = scmp.ne.s32.totalorder %s270, %s272
      %p276 = scmp.eq.s32.totalorder %s26, 0
      %p277 = por %p275, %p276
      %p278 = scmp.ne.s32.totalorder %s270, %s272
      %p279 = scmp.eq.s32.totalorder %s31, 1
      %p280 = por %p278, %p279
      %p281 = scmp.ne.s32.totalorder %s272, %s273
      %p282 = scmp.eq.s32.totalorder %s31, 0
      %p283 = por %p281, %p282
      %p284 = scmp.ne.s32.totalorder %s272, %s273
      %p285 = scmp.eq.s32.totalorder %s32, 1
      %p286 = por %p284, %p285
      %p288 = scmp.ne.s32.totalorder %s273, %s287
      %p289 = scmp.eq.s32.totalorder %s32, 0
      %p290 = por %p288, %p289
      %s291 = ssub.s32 %s26, %s33
      %p292 = scmp.eq.s32.totalorder %s291, 0
      %s294 = sadd.s32 %s293, 1
      %s295 = scalar_select %p292, %s293, %s294
      %p298 = pneg %p292
      %p299 = scmp.eq.s32.totalorder %s26, 1
      %p300 = por %p298, %p299
      %p301 = scmp.ne.s32.totalorder %s293, %s296
      %p302 = scmp.eq.s32.totalorder %s26, 0
      %p303 = por %p301, %p302
      %p304 = scmp.ne.s32.totalorder %s293, %s296
      %p305 = scmp.eq.s32.totalorder %s31, 1
      %p306 = por %p304, %p305
      %p307 = scmp.ne.s32.totalorder %s296, %s297
      %p308 = scmp.eq.s32.totalorder %s31, 0
      %p309 = por %p307, %p308
      %p310 = scmp.ne.s32.totalorder %s296, %s297
      %p311 = scmp.eq.s32.totalorder %s32, 1
      %p312 = por %p310, %p311
      %p314 = scmp.ne.s32.totalorder %s297, %s313
      %p315 = scmp.eq.s32.totalorder %s32, 0
      %p316 = por %p314, %p315
      %p317 = scmp.le.s32.totalorder 1, %s26
      %p318 = scmp.lt.s32.totalorder %s26, 3
      %p319 = pnand %p317, %p318
      %p320 = pneg %p319
      // Predicated region
      $region9: #{tpu_custom_call.1} parent=5 // pred_check
        _
      $region10: #{tpu_custom_call.1} parent=5 // pred_check_branch
        %322 = sbr.rel (%p319) target = $region12
      $region11: #{tpu_custom_call.1} parent=5 // pred_region
        %s323 = ssub.s32 %s26, 1
        // Predicated region
        $region13: #{tpu_custom_call.1} parent=11 // pred_check
          %p324 = pneg %p73
        $region14: #{tpu_custom_call.1} parent=11 // pred_check_branch
          %326 = sbr.rel (%p324) target = $region16
        $region15: #{tpu_custom_call.1} parent=11 // pred_region
          %s328 = ssub.s32 128, 128
          %329 = vsyncadd [#allocation7], %s328
          %s331 = sshll.u32 [#allocation6], 4
          %s332 = int_to_ptr.vmem [resolvable:$true] %s331
          %334 = dma.hbm_to_vmem [thread:$0]  %s1, 128, %s332, [#allocation7]
        $region16: #{tpu_custom_call.1} parent=11 // pred_fallthru
          _
        // Predicated region
        $region17: #{tpu_custom_call.1} parent=11 // pred_check
          %p335 = pneg %p94
        $region18: #{tpu_custom_call.1} parent=11 // pred_check_branch
          %337 = sbr.rel (%p335) target = $region20
        $region19: #{tpu_custom_call.1} parent=11 // pred_region
          %s339 = ssub.s32 128, 128
          %340 = vsyncadd [#allocation7], %s339
          %s342 = sshll.u32 [#allocation8], 4
          %s343 = int_to_ptr.vmem [resolvable:$true] %s342
          %345 = dma.hbm_to_vmem [thread:$0]  %s2, 128, %s343, [#allocation7]
        $region20: #{tpu_custom_call.1} parent=11 // pred_fallthru
          _
        // Predicated region
        $region21: #{tpu_custom_call.1} parent=11 // pred_check
          %p346 = pneg %p115
        $region22: #{tpu_custom_call.1} parent=11 // pred_check_branch
          %348 = sbr.rel (%p346) target = $region24
        $region23: #{tpu_custom_call.1} parent=11 // pred_region
          %s350 = ssub.s32 256, 256
          %351 = vsyncadd [#allocation10], %s350
          %s352 = sshll.u32 [#allocation9], 4
          %s353 = int_to_ptr.vmem [resolvable:$true] %s352
          %358 = dma.hbm_to_vmem [thread:$0]  %s3, 256, %s353, [#allocation10], 64, 64, 4
        $region24: #{tpu_custom_call.1} parent=11 // pred_fallthru
          _
        // Predicated region
        $region25: #{tpu_custom_call.1} parent=11 // pred_check
          %p359 = pneg %p136
        $region26: #{tpu_custom_call.1} parent=11 // pred_check_branch
          %361 = sbr.rel (%p359) target = $region28
        $region27: #{tpu_custom_call.1} parent=11 // pred_region
          _
        $region28: #{tpu_custom_call.1} parent=11 // pred_fallthru
          _
        // Predicated region
        $region29: #{tpu_custom_call.1} parent=11 // pred_check
          %p362 = pneg %p157
        $region30: #{tpu_custom_call.1} parent=11 // pred_check_branch
          %364 = sbr.rel (%p362) target = $region32
        $region31: #{tpu_custom_call.1} parent=11 // pred_region
          _
        $region32: #{tpu_custom_call.1} parent=11 // pred_fallthru
          _
        // Predicated region
        $region33: #{tpu_custom_call.1} parent=11 // pred_check
          %p365 = pneg %p178
        $region34: #{tpu_custom_call.1} parent=11 // pred_check_branch
          %367 = sbr.rel (%p365) target = $region36
        $region35: #{tpu_custom_call.1} parent=11 // pred_region
          _
        $region36: #{tpu_custom_call.1} parent=11 // pred_fallthru
          _
        // Predicated region
        $region37: #{tpu_custom_call.1} parent=11 // pred_check
          %p368 = pneg %p199
        $region38: #{tpu_custom_call.1} parent=11 // pred_check_branch
          %370 = sbr.rel (%p368) target = $region40
        $region39: #{tpu_custom_call.1} parent=11 // pred_region
          _
        $region40: #{tpu_custom_call.1} parent=11 // pred_fallthru
          _
        // Predicated region
        $region41: #{tpu_custom_call.1} parent=11 // pred_check
          %p371 = pneg %p220
        $region42: #{tpu_custom_call.1} parent=11 // pred_check_branch
          %373 = sbr.rel (%p371) target = $region44
        $region43: #{tpu_custom_call.1} parent=11 // pred_region
          _
        $region44: #{tpu_custom_call.1} parent=11 // pred_fallthru
          _
        // Predicated region
        $region45: #{tpu_custom_call.1} parent=11 // pred_check
          %p374 = pneg %p241
        $region46: #{tpu_custom_call.1} parent=11 // pred_check_branch
          %376 = sbr.rel (%p374) target = $region48
        $region47: #{tpu_custom_call.1} parent=11 // pred_region
          _
        $region48: #{tpu_custom_call.1} parent=11 // pred_fallthru
          _
        // Predicated region
        $region49: #{tpu_custom_call.1} parent=11 // pred_check
          %p377 = pneg %p262
        $region50: #{tpu_custom_call.1} parent=11 // pred_check_branch
          %379 = sbr.rel (%p377) target = $region52
        $region51: #{tpu_custom_call.1} parent=11 // pred_region
          _
        $region52: #{tpu_custom_call.1} parent=11 // pred_fallthru
          _
        // Predicated region
        $region53: #{tpu_custom_call.1} parent=11 // pred_check
          %p380 = pneg %p283
        $region54: #{tpu_custom_call.1} parent=11 // pred_check_branch
          %382 = sbr.rel (%p380) target = $region56
        $region55: #{tpu_custom_call.1} parent=11 // pred_region
          _
        $region56: #{tpu_custom_call.1} parent=11 // pred_fallthru
          _
      $region12: #{tpu_custom_call.1} parent=5 // pred_fallthru
        _
      %p383 = scmp.lt.s32.totalorder %s26, 2
      // Predicated region
      $region57: #{tpu_custom_call.1} parent=5 // pred_check
        %p384 = pneg %p383
      $region58: #{tpu_custom_call.1} parent=5 // pred_check_branch
        %386 = sbr.rel (%p384) target = $region60
      $region59: #{tpu_custom_call.1} parent=5 // pred_region
        // Predicated region
        $region61: #{tpu_custom_call.1} parent=59 // pred_check
          %p387 = pneg %p46
        $region62: #{tpu_custom_call.1} parent=59 // pred_check_branch
          %389 = sbr.rel (%p387) target = $region64
        $region63: #{tpu_custom_call.1} parent=59 // pred_region
          %s390 = sand.u32 %s36, 1
          %s391 = scalar_lea.sflag [#allocation4], %s390
          %s392 = sand.u32 %s36, 1
          %s393 = smul.addr %s392, 8
          %s394 = scalar_lea.vmem [#allocation3], %s393
          %s396 = ssub.s32 128, 128
          %397 = vsyncadd %s391, %s396
          %s398 = smul.addr %s26, 128
          %s399 = scalar_lea.hbm %s0, %s398
          %s401 = sshll.u32 %s394, 4
          %s402 = int_to_ptr.vmem [resolvable:$true] %s401
          %404 = dma.hbm_to_vmem [thread:$0]  %s399, 128, %s402, %s391
        $region64: #{tpu_custom_call.1} parent=59 // pred_fallthru
          _
      $region60: #{tpu_custom_call.1} parent=5 // pred_fallthru
        _
      %p405 = scmp.le.s32.totalorder 1, %s26
      %p406 = scmp.lt.s32.totalorder %s26, 3
      %p407 = pnand %p405, %p406
      %p408 = pneg %p407
      // Predicated region
      $region65: #{tpu_custom_call.1} parent=5 // pred_check
        _
      $region66: #{tpu_custom_call.1} parent=5 // pred_check_branch
        %410 = sbr.rel (%p407) target = $region68
      $region67: #{tpu_custom_call.1} parent=5 // pred_region
        %s411 = ssub.s32 %s26, 1
        %s412 = sand.u32 %s39, 1
        %s413 = scalar_lea.sflag [#allocation4], %s412
        %s414 = sand.u32 %s39, 1
        %s415 = smul.addr %s414, 8
        %s416 = scalar_lea.vmem [#allocation3], %s415
        // Predicated region
        $region69: #{tpu_custom_call.1} parent=67 // pred_check
          %p417 = pneg %p52
        $region70: #{tpu_custom_call.1} parent=67 // pred_check_branch
          %419 = sbr.rel (%p417) target = $region72
        $region71: #{tpu_custom_call.1} parent=67 // pred_region
          %420 = dma.done %s413, 128
        $region72: #{tpu_custom_call.1} parent=67 // pred_fallthru
          _
        // Predicated region
        $region73: #{tpu_custom_call.1} parent=67 // pred_check
          %p421 = pneg %p73
        $region74: #{tpu_custom_call.1} parent=67 // pred_check_branch
          %423 = sbr.rel (%p421) target = $region76
        $region75: #{tpu_custom_call.1} parent=67 // pred_region
          %424 = dma.done [#allocation7], 128
        $region76: #{tpu_custom_call.1} parent=67 // pred_fallthru
          _
        // Predicated region
        $region77: #{tpu_custom_call.1} parent=67 // pred_check
          %p425 = pneg %p94
        $region78: #{tpu_custom_call.1} parent=67 // pred_check_branch
          %427 = sbr.rel (%p425) target = $region80
        $region79: #{tpu_custom_call.1} parent=67 // pred_region
          %428 = dma.done [#allocation7], 128
        $region80: #{tpu_custom_call.1} parent=67 // pred_fallthru
          _
        // Predicated region
        $region81: #{tpu_custom_call.1} parent=67 // pred_check
          %p429 = pneg %p115
        $region82: #{tpu_custom_call.1} parent=67 // pred_check_branch
          %431 = sbr.rel (%p429) target = $region84
        $region83: #{tpu_custom_call.1} parent=67 // pred_region
          %432 = dma.done [#allocation10], 256
        $region84: #{tpu_custom_call.1} parent=67 // pred_fallthru
          _
        %s433 = sand.u32 %s39, 1
        %s434 = scalar_lea.sflag [#allocation4], %s433
        %s435 = sand.u32 %s39, 1
        %s436 = smul.addr %s435, 8
        %s437 = scalar_lea.vmem [#allocation3], %s436
        %p438 = pneg %p52
        %p439 = pneg %p49
        %p440 = pneg %p73
        %p441 = pneg %p70
        %p442 = pneg %p94
        %p443 = pneg %p91
        %p444 = pneg %p115
        %p445 = pneg %p112
        %p446 = pneg %p136
        %p447 = pneg %p133
        %p448 = pneg %p157
        %p449 = pneg %p154
        %p450 = pneg %p178
        %p451 = pneg %p175
        %p452 = pneg %p199
        %p453 = pneg %p196
        %p454 = pneg %p220
        %p455 = pneg %p217
        %p456 = pneg %p241
        %p457 = pneg %p238
        %p458 = pneg %p262
        %p459 = pneg %p259
        %p460 = pneg %p283
        %p461 = pneg %p280
        %p462 = pneg %p309
        %p463 = pneg %p306
        %s464 = sand.u32 %s296, 1
        %s465 = scalar_lea.sflag [#allocation5], %s464
        %s466 = sand.u32 %s296, 1
        %s467 = smul.addr %s466, 8
        %s468 = scalar_lea.vmem [#allocation11], %s467
        %v470 = vld [vmem:[%s416] sm:$0xff]
        %v471 = vpack.c.bf16 %v470, %v470
        %v472 = vld [vmem:[#allocation9] sm:$0xf]
        %v473 = vld [vmem:[#allocation9 + $0x4] sm:$0xf]
        %v474 = vld [vmem:[#allocation9 + $0x8] sm:$0xf]
        %v475 = vld [vmem:[#allocation9 + $0xc] sm:$0xf]
        %v476 = vld [vmem:[%s4] sm:$0x1]
        %v478 = vlaneseq
        %v479 = vshrl.u32 %v478, 7
        %v480 = vsub.s32 0, %v479
        %v481 = vrot.slane %v476, %v480
        %v487 = vunpack.c.l.b16 %v472
        %v488 = vunpack.c.l.b16 %v473
        %v489 = vunpack.c.l.b16 %v474
        %v490 = vunpack.c.l.b16 %v475
        %v491 = vpack.c.b16 %v488, %v487
        %v492 = vpack.c.b16 %v490, %v489
        %vm495 = vcmask 261120
        %v497 = vsel %vm495, %v471, 0
        %499 = vmatprep.subr.bf16.mxu0 0
        %500 = vmatpush1.bf16.msra.mxu0 %v491
        %501 = vmatprep.subr.bf16.mxu0 0
        %502 = vmatpush1.bf16.msra.mxu0 %v492
        %503 = vmatprep.subr.bf16.mxu0 0
        %504 = vmatpush1.bf16.msra.mxu0 0
        %505 = vmatprep.subr.bf16.mxu0 0
        %506 = vmatpush1.bf16.msra.mxu0 0
        %507 = vmatprep.subr.bf16.mxu0 0
        %508 = vmatpush1.bf16.msra.mxu0 0
        %509 = vmatprep.subr.bf16.mxu0 0
        %510 = vmatpush1.bf16.msra.mxu0 0
        %511 = vmatprep.subr.bf16.mxu0 0
        %512 = vmatpush1.bf16.msra.mxu0 0
        %513 = vmatprep.subr.bf16.mxu0 0
        %514 = vmatpush1.bf16.msra.mxu0 0
        %515 = vmatprep.subr.bf16.mxu0 0
        %516 = vmatpush1.bf16.msra.mxu0 0
        %517 = vmatprep.subr.bf16.mxu0 0
        %518 = vmatpush1.bf16.msra.mxu0 0
        %519 = vmatprep.subr.bf16.mxu0 0
        %520 = vmatpush1.bf16.msra.mxu0 0
        %521 = vmatprep.subr.bf16.mxu0 0
        %522 = vmatpush1.bf16.msra.mxu0 0
        %523 = vmatprep.subr.bf16.mxu0 0
        %524 = vmatpush1.bf16.msra.mxu0 0
        %525 = vmatprep.subr.bf16.mxu0 0
        %526 = vmatpush1.bf16.msra.mxu0 0
        %527 = vmatprep.subr.bf16.mxu0 0
        %528 = vmatpush1.bf16.msra.mxu0 0
        %529 = vmatprep.subr.bf16.mxu0 0
        %530 = vmatpush1.bf16.msra.mxu0 0
        %531 = vmatprep.mubr.bf16.mxu0 0
        %532 = vmatmul.mubr.bf16.gmra.mrb[0].mxu0 %v497
        %v533 = vpop.f32.mrb[0].mxu0
        %v534 = vadd.f32 %v481, %v533
        %v535 = vpop.f32.mrb[0].mxu0
        %v536 = vpop.f32.mrb[0].mxu0
        %v537 = vpop.f32.mrb[0].mxu0
        %538 = vdwg.mxu0
        %v539 = vpack.c.bf16 %v534, %v534
        %v540 = vlaneseq
        %v541 = vshrl.u32 %v540, 7
        %v542 = vlaneseq
        %v543 = vand.u32 %v542, 127
        %vm544 = vcmp.le.s32.totalorder %v543, %v541
        %v545 = vsel %vm544, 0.0, -10000.0
        %547 = vrot.lane.b32.xlu0 %v539, 96
        %v548 = vpop.permute.xlu0 %547
        %vm549 = vcmask 130048
        %v551 = vsel %vm549, %v539, 0
        %v554 = vsel %vm549, %v548, 0
        %556 = vmatprep.subr.bf16.mxu0 0
        %557 = vmatpush1.bf16.xpose.msra.mxu0 %v554
        %558 = vmatprep.subr.bf16.mxu0 0
        %559 = vmatpush1.bf16.xpose.msra.mxu0 0
        %560 = vmatprep.subr.bf16.mxu0 0
        %561 = vmatpush1.bf16.xpose.msra.mxu0 0
        %562 = vmatprep.subr.bf16.mxu0 0
        %563 = vmatpush1.bf16.xpose.msra.mxu0 0
        %564 = vmatprep.subr.bf16.mxu0 0
        %565 = vmatpush1.bf16.xpose.msra.mxu0 0
        %566 = vmatprep.subr.bf16.mxu0 0
        %567 = vmatpush1.bf16.xpose.msra.mxu0 0
        %568 = vmatprep.subr.bf16.mxu0 0
        %569 = vmatpush1.bf16.xpose.msra.mxu0 0
        %570 = vmatprep.subr.bf16.mxu0 0
        %571 = vmatpush1.bf16.xpose.msra.mxu0 0
        %572 = vmatprep.subr.bf16.mxu0 0
        %573 = vmatpush1.bf16.xpose.msra.mxu0 0
        %574 = vmatprep.subr.bf16.mxu0 0
        %575 = vmatpush1.bf16.xpose.msra.mxu0 0
        %576 = vmatprep.subr.bf16.mxu0 0
        %577 = vmatpush1.bf16.xpose.msra.mxu0 0
        %578 = vmatprep.subr.bf16.mxu0 0
        %579 = vmatpush1.bf16.xpose.msra.mxu0 0
        %580 = vmatprep.subr.bf16.mxu0 0
        %581 = vmatpush1.bf16.xpose.msra.mxu0 0
        %582 = vmatprep.subr.bf16.mxu0 0
        %583 = vmatpush1.bf16.xpose.msra.mxu0 0
        %584 = vmatprep.subr.bf16.mxu0 0
        %585 = vmatpush1.bf16.xpose.msra.mxu0 0
        %586 = vmatprep.subr.bf16.mxu0 0
        %587 = vmatpush1.bf16.xpose.msra.mxu0 0
        %588 = vmatprep.mubr.bf16.mxu0 0
        %589 = vmatmul.mubr.bf16.gmra.mrb[0].mxu0 %v551
        %v590 = vpop.f32.mrb[0].mxu0
        %v591 = vadd.f32 0.0, %v590
        %v592 = vpop.f32.mrb[0].mxu0
        %v593 = vpop.f32.mrb[0].mxu0
        %v594 = vpop.f32.mrb[0].mxu0
        %595 = vdwg.mxu0
        %v596 = vmul.f32 %v591, 0.25
        %v597 = vadd.f32 %v596, %v545
        %vm598 = vcmask 64512
        %v599 = vsel %vm598, %v597, -inf
        %600 = vmax.xlane.f32.xlu0 %v599
        %v601 = vpop.xlane.xlu0 %600
        %v602 = vsub.f32 %v597, %v601
        %v603 = vmul.f32 %v602, 1.442695
        %v604 = vpow.pop %v603
        %v605 = vsel %vm598, %v604, 0.0
        %606 = vadd.xlane.f32.xlu0 %v605
        %v607 = vpop.xlane.xlu0 %606
        %v608 = vrcp.pop %v607
        %v609 = vmul.f32 %v604, %v608
        %v610 = vpack.c.bf16 %v609, %v609
        %611 = vrot.lane.b32.xlu0 %v539, 64
        %v612 = vpop.permute.xlu0 %611
        %v614 = vsel %vm598, %v610, 0
        %vm616 = vcmask 1043456
        %v618 = vsel %vm616, %v612, 0
        %620 = vmatprep.subr.bf16.mxu0 0
        %621 = vmatpush1.bf16.msra.mxu0 %v618
        %622 = vmatprep.subr.bf16.mxu0 0
        %623 = vmatpush1.bf16.msra.mxu0 0
        %624 = vmatprep.subr.bf16.mxu0 0
        %625 = vmatpush1.bf16.msra.mxu0 0
        %626 = vmatprep.subr.bf16.mxu0 0
        %627 = vmatpush1.bf16.msra.mxu0 0
        %628 = vmatprep.subr.bf16.mxu0 0
        %629 = vmatpush1.bf16.msra.mxu0 0
        %630 = vmatprep.subr.bf16.mxu0 0
        %631 = vmatpush1.bf16.msra.mxu0 0
        %632 = vmatprep.subr.bf16.mxu0 0
        %633 = vmatpush1.bf16.msra.mxu0 0
        %634 = vmatprep.subr.bf16.mxu0 0
        %635 = vmatpush1.bf16.msra.mxu0 0
        %636 = vmatprep.subr.bf16.mxu0 0
        %637 = vmatpush1.bf16.msra.mxu0 0
        %638 = vmatprep.subr.bf16.mxu0 0
        %639 = vmatpush1.bf16.msra.mxu0 0
        %640 = vmatprep.subr.bf16.mxu0 0
        %641 = vmatpush1.bf16.msra.mxu0 0
        %642 = vmatprep.subr.bf16.mxu0 0
        %643 = vmatpush1.bf16.msra.mxu0 0
        %644 = vmatprep.subr.bf16.mxu0 0
        %645 = vmatpush1.bf16.msra.mxu0 0
        %646 = vmatprep.subr.bf16.mxu0 0
        %647 = vmatpush1.bf16.msra.mxu0 0
        %648 = vmatprep.subr.bf16.mxu0 0
        %649 = vmatpush1.bf16.msra.mxu0 0
        %650 = vmatprep.subr.bf16.mxu0 0
        %651 = vmatpush1.bf16.msra.mxu0 0
        %652 = vmatprep.mubr.bf16.mxu0 0
        %653 = vmatmul.mubr.bf16.gmra.mrb[0].mxu0 %v614
        %v654 = vpop.f32.mrb[0].mxu0
        %v655 = vadd.f32 0.0, %v654
        %v656 = vpop.f32.mrb[0].mxu0
        %v657 = vpop.f32.mrb[0].mxu0
        %v658 = vpop.f32.mrb[0].mxu0
        %659 = vdwg.mxu0
        %660 = vst.msk [vmem:[#allocation2] sm:$0xff] %vm549, %v655
        %661 = vrot.lane.b32.xlu0 %v539, 112
        %v662 = vpop.permute.xlu0 %661
        %663 = vrot.lane.b32.xlu0 %v539, 80
        %v664 = vpop.permute.xlu0 %663
        %v666 = vsel %vm549, %v662, 0
        %v669 = vsel %vm549, %v664, 0
        %671 = vmatprep.subr.bf16.mxu0 0
        %672 = vmatpush1.bf16.xpose.msra.mxu0 %v669
        %673 = vmatprep.subr.bf16.mxu0 0
        %674 = vmatpush1.bf16.xpose.msra.mxu0 0
        %675 = vmatprep.subr.bf16.mxu0 0
        %676 = vmatpush1.bf16.xpose.msra.mxu0 0
        %677 = vmatprep.subr.bf16.mxu0 0
        %678 = vmatpush1.bf16.xpose.msra.mxu0 0
        %679 = vmatprep.subr.bf16.mxu0 0
        %680 = vmatpush1.bf16.xpose.msra.mxu0 0
        %681 = vmatprep.subr.bf16.mxu0 0
        %682 = vmatpush1.bf16.xpose.msra.mxu0 0
        %683 = vmatprep.subr.bf16.mxu0 0
        %684 = vmatpush1.bf16.xpose.msra.mxu0 0
        %685 = vmatprep.subr.bf16.mxu0 0
        %686 = vmatpush1.bf16.xpose.msra.mxu0 0
        %687 = vmatprep.subr.bf16.mxu0 0
        %688 = vmatpush1.bf16.xpose.msra.mxu0 0
        %689 = vmatprep.subr.bf16.mxu0 0
        %690 = vmatpush1.bf16.xpose.msra.mxu0 0
        %691 = vmatprep.subr.bf16.mxu0 0
        %692 = vmatpush1.bf16.xpose.msra.mxu0 0
        %693 = vmatprep.subr.bf16.mxu0 0
        %694 = vmatpush1.bf16.xpose.msra.mxu0 0
        %695 = vmatprep.subr.bf16.mxu0 0
        %696 = vmatpush1.bf16.xpose.msra.mxu0 0
        %697 = vmatprep.subr.bf16.mxu0 0
        %698 = vmatpush1.bf16.xpose.msra.mxu0 0
        %699 = vmatprep.subr.bf16.mxu0 0
        %700 = vmatpush1.bf16.xpose.msra.mxu0 0
        %701 = vmatprep.subr.bf16.mxu0 0
        %702 = vmatpush1.bf16.xpose.msra.mxu0 0
        %703 = vmatprep.mubr.bf16.mxu0 0
        %704 = vmatmul.mubr.bf16.gmra.mrb[0].mxu0 %v666
        %v705 = vpop.f32.mrb[0].mxu0
        %v706 = vadd.f32 0.0, %v705
        %v707 = vpop.f32.mrb[0].mxu0
        %v708 = vpop.f32.mrb[0].mxu0
        %v709 = vpop.f32.mrb[0].mxu0
        %710 = vdwg.mxu0
        %v711 = vmul.f32 %v706, 0.25
        %v712 = vadd.f32 %v711, %v545
        %v713 = vsel %vm598, %v712, -inf
        %714 = vmax.xlane.f32.xlu0 %v713
        %v715 = vpop.xlane.xlu0 %714
        %v716 = vsub.f32 %v712, %v715
        %v717 = vmul.f32 %v716, 1.442695
        %v718 = vpow.pop %v717
        %v719 = vsel %vm598, %v718, 0.0
        %720 = vadd.xlane.f32.xlu0 %v719
        %v721 = vpop.xlane.xlu0 %720
        %v722 = vrcp.pop %v721
        %v723 = vmul.f32 %v718, %v722
        %v724 = vpack.c.bf16 %v723, %v723
        %725 = vrot.lane.b32.xlu0 %v539, 48
        %v726 = vpop.permute.xlu0 %725
        %v728 = vsel %vm598, %v724, 0
        %v731 = vsel %vm616, %v726, 0
        %733 = vmatprep.subr.bf16.mxu0 0
        %734 = vmatpush1.bf16.msra.mxu0 %v731
        %735 = vmatprep.subr.bf16.mxu0 0
        %736 = vmatpush1.bf16.msra.mxu0 0
        %737 = vmatprep.subr.bf16.mxu0 0
        %738 = vmatpush1.bf16.msra.mxu0 0
        %739 = vmatprep.subr.bf16.mxu0 0
        %740 = vmatpush1.bf16.msra.mxu0 0
        %741 = vmatprep.subr.bf16.mxu0 0
        %742 = vmatpush1.bf16.msra.mxu0 0
        %743 = vmatprep.subr.bf16.mxu0 0
        %744 = vmatpush1.bf16.msra.mxu0 0
        %745 = vmatprep.subr.bf16.mxu0 0
        %746 = vmatpush1.bf16.msra.mxu0 0
        %747 = vmatprep.subr.bf16.mxu0 0
        %748 = vmatpush1.bf16.msra.mxu0 0
        %749 = vmatprep.subr.bf16.mxu0 0
        %750 = vmatpush1.bf16.msra.mxu0 0
        %751 = vmatprep.subr.bf16.mxu0 0
        %752 = vmatpush1.bf16.msra.mxu0 0
        %753 = vmatprep.subr.bf16.mxu0 0
        %754 = vmatpush1.bf16.msra.mxu0 0
        %755 = vmatprep.subr.bf16.mxu0 0
        %756 = vmatpush1.bf16.msra.mxu0 0
        %757 = vmatprep.subr.bf16.mxu0 0
        %758 = vmatpush1.bf16.msra.mxu0 0
        %759 = vmatprep.subr.bf16.mxu0 0
        %760 = vmatpush1.bf16.msra.mxu0 0
        %761 = vmatprep.subr.bf16.mxu0 0
        %762 = vmatpush1.bf16.msra.mxu0 0
        %763 = vmatprep.subr.bf16.mxu0 0
        %764 = vmatpush1.bf16.msra.mxu0 0
        %765 = vmatprep.mubr.bf16.mxu0 0
        %766 = vmatmul.mubr.bf16.gmra.mrb[0].mxu0 %v728
        %v767 = vpop.f32.mrb[0].mxu0
        %v768 = vadd.f32 0.0, %v767
        %v769 = vpop.f32.mrb[0].mxu0
        %v770 = vpop.f32.mrb[0].mxu0
        %v771 = vpop.f32.mrb[0].mxu0
        %772 = vdwg.mxu0
        %774 = vrot.lane.b32.xlu0 %v768, 16
        %v775 = vpop.permute.xlu0 %774
        %vm777 = vcmask 261248
        %778 = vst.msk [vmem:[#allocation2] sm:$0xff] %vm777, %v775
        %v779 = vld [vmem:[#allocation2] sm:$0xff]
        %v780 = vpack.c.bf16 %v779, %v779
        %v781 = vld [vmem:[%s5] sm:$0xf]
        %v782 = vld [vmem:[%s5 + $0x4] sm:$0xf]
        %v783 = vld [vmem:[%s5 + $0x8] sm:$0xf]
        %v784 = vld [vmem:[%s5 + $0xc] sm:$0xf]
        %v785 = vld [vmem:[%s6] sm:$0x1]
        %v787 = vlaneseq
        %v788 = vshrl.u32 %v787, 7
        %v789 = vsub.s32 0, %v788
        %v790 = vrot.slane %v785, %v789
        %v796 = vunpack.c.l.b16 %v781
        %v797 = vunpack.c.l.b16 %v782
        %v798 = vunpack.c.l.b16 %v783
        %v799 = vunpack.c.l.b16 %v784
        %v800 = vpack.c.b16 %v797, %v796
        %v801 = vpack.c.b16 %v799, %v798
        %v805 = vsel %vm495, %v780, 0
        %807 = vmatprep.subr.bf16.mxu0 0
        %808 = vmatpush1.bf16.msra.mxu0 %v800
        %809 = vmatprep.subr.bf16.mxu0 0
        %810 = vmatpush1.bf16.msra.mxu0 %v801
        %811 = vmatprep.subr.bf16.mxu0 0
        %812 = vmatpush1.bf16.msra.mxu0 0
        %813 = vmatprep.subr.bf16.mxu0 0
        %814 = vmatpush1.bf16.msra.mxu0 0
        %815 = vmatprep.subr.bf16.mxu0 0
        %816 = vmatpush1.bf16.msra.mxu0 0
        %817 = vmatprep.subr.bf16.mxu0 0
        %818 = vmatpush1.bf16.msra.mxu0 0
        %819 = vmatprep.subr.bf16.mxu0 0
        %820 = vmatpush1.bf16.msra.mxu0 0
        %821 = vmatprep.subr.bf16.mxu0 0
        %822 = vmatpush1.bf16.msra.mxu0 0
        %823 = vmatprep.subr.bf16.mxu0 0
        %824 = vmatpush1.bf16.msra.mxu0 0
        %825 = vmatprep.subr.bf16.mxu0 0
        %826 = vmatpush1.bf16.msra.mxu0 0
        %827 = vmatprep.subr.bf16.mxu0 0
        %828 = vmatpush1.bf16.msra.mxu0 0
        %829 = vmatprep.subr.bf16.mxu0 0
        %830 = vmatpush1.bf16.msra.mxu0 0
        %831 = vmatprep.subr.bf16.mxu0 0
        %832 = vmatpush1.bf16.msra.mxu0 0
        %833 = vmatprep.subr.bf16.mxu0 0
        %834 = vmatpush1.bf16.msra.mxu0 0
        %835 = vmatprep.subr.bf16.mxu0 0
        %836 = vmatpush1.bf16.msra.mxu0 0
        %837 = vmatprep.subr.bf16.mxu0 0
        %838 = vmatpush1.bf16.msra.mxu0 0
        %839 = vmatprep.mubr.bf16.mxu0 0
        %840 = vmatmul.mubr.bf16.gmra.mrb[0].mxu0 %v805
        %v841 = vpop.f32.mrb[0].mxu0
        %v842 = vadd.f32 %v790, %v841
        %v843 = vpop.f32.mrb[0].mxu0
        %v844 = vpop.f32.mrb[0].mxu0
        %v845 = vpop.f32.mrb[0].mxu0
        %846 = vdwg.mxu0
        %v847 = vadd.f32 %v842, %v470
        %v848 = vld [vmem:[%s7] sm:$0x1]
        %v849 = vld [vmem:[%s8] sm:$0x1]
        %v850 = vsel %vm495, %v847, 0.0
        %851 = vadd.xlane.f32.xlu0 %v850
        %v852 = vpop.xlane.xlu0 %851
        %v853 = vrcp.pop 32.0
        %v854 = vmul.f32 %v852, %v853
        %v855 = vsub.f32 %v847, %v854
        %v856 = vmul.f32 %v855, %v855
        %v857 = vsel %vm495, %v856, 0.0
        %858 = vadd.xlane.f32.xlu0 %v857
        %v859 = vpop.xlane.xlu0 %858
        %v860 = vmul.f32 %v859, %v853
        %v861 = vadd.f32 %v860, 1e-12
        %v862 = vrsqrt.pop %v861
        %v863 = vmul.f32 %v855, %v862
        %v865 = vlaneseq
        %v866 = vshrl.u32 %v865, 7
        %v867 = vsub.s32 0, %v866
        %v868 = vrot.slane %v848, %v867
        %v870 = vmul.f32 %v863, %v868
        %v872 = vlaneseq
        %v873 = vshrl.u32 %v872, 7
        %v874 = vsub.s32 0, %v873
        %v875 = vrot.slane %v849, %v874
        %v877 = vadd.f32 %v870, %v875
        %v878 = vld [vmem:[#allocation8] sm:$0xff]
        %v879 = vld [vmem:[#allocation6] sm:$0xff]
        %v881 = vsel %vm598, %v878, 0
        %883 = vmatprep.subr.mxu0 0.0
        %884 = vmatpush1.msra.mxu0 %v470
        %885 = vmatprep.subr.mxu0 0.0
        %886 = vmatpush1.msra.mxu0 0.0
        %887 = vmatprep.subr.mxu0 0.0
        %888 = vmatpush1.msra.mxu0 0.0
        %889 = vmatprep.subr.mxu0 0.0
        %890 = vmatpush1.msra.mxu0 0.0
        %891 = vmatprep.subr.mxu0 0.0
        %892 = vmatpush1.msra.mxu0 0.0
        %893 = vmatprep.subr.mxu0 0.0
        %894 = vmatpush1.msra.mxu0 0.0
        %895 = vmatprep.subr.mxu0 0.0
        %896 = vmatpush1.msra.mxu0 0.0
        %897 = vmatprep.subr.mxu0 0.0
        %898 = vmatpush1.msra.mxu0 0.0
        %899 = vmatprep.subr.mxu0 0.0
        %900 = vmatpush1.msra.mxu0 0.0
        %901 = vmatprep.subr.mxu0 0.0
        %902 = vmatpush1.msra.mxu0 0.0
        %903 = vmatprep.subr.mxu0 0.0
        %904 = vmatpush1.msra.mxu0 0.0
        %905 = vmatprep.subr.mxu0 0.0
        %906 = vmatpush1.msra.mxu0 0.0
        %907 = vmatprep.subr.mxu0 0.0
        %908 = vmatpush1.msra.mxu0 0.0
        %909 = vmatprep.subr.mxu0 0.0
        %910 = vmatpush1.msra.mxu0 0.0
        %911 = vmatprep.subr.mxu0 0.0
        %912 = vmatpush1.msra.mxu0 0.0
        %913 = vmatprep.subr.mxu0 0.0
        %914 = vmatpush1.msra.mxu0 0.0
        %915 = vmatprep.subr.mxu0 0.0
        %916 = vmatpush1.msra.mxu0 0.0
        %917 = vmatprep.subr.mxu0 0.0
        %918 = vmatpush1.msra.mxu0 0.0
        %919 = vmatprep.subr.mxu0 0.0
        %920 = vmatpush1.msra.mxu0 0.0
        %921 = vmatprep.subr.mxu0 0.0
        %922 = vmatpush1.msra.mxu0 0.0
        %923 = vmatprep.subr.mxu0 0.0
        %924 = vmatpush1.msra.mxu0 0.0
        %925 = vmatprep.subr.mxu0 0.0
        %926 = vmatpush1.msra.mxu0 0.0
        %927 = vmatprep.subr.mxu0 0.0
        %928 = vmatpush1.msra.mxu0 0.0
        %929 = vmatprep.subr.mxu0 0.0
        %930 = vmatpush1.msra.mxu0 0.0
        %931 = vmatprep.subr.mxu0 0.0
        %932 = vmatpush1.msra.mxu0 0.0
        %933 = vmatprep.subr.mxu0 0.0
        %934 = vmatpush1.msra.mxu0 0.0
        %935 = vmatprep.subr.mxu0 0.0
        %936 = vmatpush1.msra.mxu0 0.0
        %937 = vmatprep.subr.mxu0 0.0
        %938 = vmatpush1.msra.mxu0 0.0
        %939 = vmatprep.subr.mxu0 0.0
        %940 = vmatpush1.msra.mxu0 0.0
        %941 = vmatprep.subr.mxu0 0.0
        %942 = vmatpush1.msra.mxu0 0.0
        %943 = vmatprep.subr.mxu0 0.0
        %944 = vmatpush1.msra.mxu0 0.0
        %945 = vmatprep.subr.mxu0 0.0
        %946 = vmatpush1.msra.mxu0 0.0
        %947 = vmatprep.mubr.f32.mxu0 0.0
        %948 = vmatmul.mubr.f32.gmra.mrb[0].mxu0 %v881
        %v949 = vpop.f32.mrb[0].mxu0
        %v950 = vadd.f32 0.0, %v949
        %v951 = vpop.f32.mrb[0].mxu0
        %952 = vdwg.mxu0
        %v954 = vsel %vm598, %v879, 0
        %956 = vmatprep.subr.mxu0 0.0
        %957 = vmatpush1.msra.mxu0 %v950
        %958 = vmatprep.subr.mxu0 0.0
        %959 = vmatpush1.msra.mxu0 0.0
        %960 = vmatprep.subr.mxu0 0.0
        %961 = vmatpush1.msra.mxu0 0.0
        %962 = vmatprep.subr.mxu0 0.0
        %963 = vmatpush1.msra.mxu0 0.0
        %964 = vmatprep.subr.mxu0 0.0
        %965 = vmatpush1.msra.mxu0 0.0
        %966 = vmatprep.subr.mxu0 0.0
        %967 = vmatpush1.msra.mxu0 0.0
        %968 = vmatprep.subr.mxu0 0.0
        %969 = vmatpush1.msra.mxu0 0.0
        %970 = vmatprep.subr.mxu0 0.0
        %971 = vmatpush1.msra.mxu0 0.0
        %972 = vmatprep.subr.mxu0 0.0
        %973 = vmatpush1.msra.mxu0 0.0
        %974 = vmatprep.subr.mxu0 0.0
        %975 = vmatpush1.msra.mxu0 0.0
        %976 = vmatprep.subr.mxu0 0.0
        %977 = vmatpush1.msra.mxu0 0.0
        %978 = vmatprep.subr.mxu0 0.0
        %979 = vmatpush1.msra.mxu0 0.0
        %980 = vmatprep.subr.mxu0 0.0
        %981 = vmatpush1.msra.mxu0 0.0
        %982 = vmatprep.subr.mxu0 0.0
        %983 = vmatpush1.msra.mxu0 0.0
        %984 = vmatprep.subr.mxu0 0.0
        %985 = vmatpush1.msra.mxu0 0.0
        %986 = vmatprep.subr.mxu0 0.0
        %987 = vmatpush1.msra.mxu0 0.0
        %988 = vmatprep.subr.mxu0 0.0
        %989 = vmatpush1.msra.mxu0 0.0
        %990 = vmatprep.subr.mxu0 0.0
        %991 = vmatpush1.msra.mxu0 0.0
        %992 = vmatprep.subr.mxu0 0.0
        %993 = vmatpush1.msra.mxu0 0.0
        %994 = vmatprep.subr.mxu0 0.0
        %995 = vmatpush1.msra.mxu0 0.0
        %996 = vmatprep.subr.mxu0 0.0
        %997 = vmatpush1.msra.mxu0 0.0
        %998 = vmatprep.subr.mxu0 0.0
        %999 = vmatpush1.msra.mxu0 0.0
        %1000 = vmatprep.subr.mxu0 0.0
        %1001 = vmatpush1.msra.mxu0 0.0
        %1002 = vmatprep.subr.mxu0 0.0
        %1003 = vmatpush1.msra.mxu0 0.0
        %1004 = vmatprep.subr.mxu0 0.0
        %1005 = vmatpush1.msra.mxu0 0.0
        %1006 = vmatprep.subr.mxu0 0.0
        %1007 = vmatpush1.msra.mxu0 0.0
        %1008 = vmatprep.subr.mxu0 0.0
        %1009 = vmatpush1.msra.mxu0 0.0
        %1010 = vmatprep.subr.mxu0 0.0
        %1011 = vmatpush1.msra.mxu0 0.0
        %1012 = vmatprep.subr.mxu0 0.0
        %1013 = vmatpush1.msra.mxu0 0.0
        %1014 = vmatprep.subr.mxu0 0.0
        %1015 = vmatpush1.msra.mxu0 0.0
        %1016 = vmatprep.subr.mxu0 0.0
        %1017 = vmatpush1.msra.mxu0 0.0
        %1018 = vmatprep.subr.mxu0 0.0
        %1019 = vmatpush1.msra.mxu0 0.0
        %1020 = vmatprep.mubr.f32.mxu0 0.0
        %1021 = vmatmul.mubr.f32.gmra.mrb[0].mxu0 %v954
        %v1022 = vpop.f32.mrb[0].mxu0
        %v1023 = vadd.f32 0.0, %v1022
        %v1024 = vpop.f32.mrb[0].mxu0
        %1025 = vdwg.mxu0
        %v1026 = vld [vmem:[%s9] sm:$0x1]
        %v1027 = vmul.f32 %v1026, %v1026
        %v1028 = vsub.f32 %v470, %v1023
        %v1030 = vlaneseq
        %v1031 = vshrl.u32 %v1030, 7
        %v1032 = vsub.s32 0, %v1031
        %v1033 = vrot.slane %v1027, %v1032
        %v1035 = vmul.f32 %v1033, %v1028
        %v1036 = vadd.f32 %v1023, %v1035
        %v1037 = vadd.f32 %v1036, %v470
        %v1038 = vld [vmem:[%s10] sm:$0x1]
        %v1039 = vld [vmem:[%s11] sm:$0x1]
        %v1040 = vsel %vm495, %v1037, 0.0
        %1041 = vadd.xlane.f32.xlu0 %v1040
        %v1042 = vpop.xlane.xlu0 %1041
        %v1043 = vmul.f32 %v1042, %v853
        %v1044 = vsub.f32 %v1037, %v1043
        %v1045 = vmul.f32 %v1044, %v1044
        %v1046 = vsel %vm495, %v1045, 0.0
        %1047 = vadd.xlane.f32.xlu0 %v1046
        %v1048 = vpop.xlane.xlu0 %1047
        %v1049 = vmul.f32 %v1048, %v853
        %v1050 = vadd.f32 %v1049, 1e-12
        %v1051 = vrsqrt.pop %v1050
        %v1052 = vmul.f32 %v1044, %v1051
        %v1054 = vlaneseq
        %v1055 = vshrl.u32 %v1054, 7
        %v1056 = vsub.s32 0, %v1055
        %v1057 = vrot.slane %v1038, %v1056
        %v1059 = vmul.f32 %v1052, %v1057
        %v1061 = vlaneseq
        %v1062 = vshrl.u32 %v1061, 7
        %v1063 = vsub.s32 0, %v1062
        %v1064 = vrot.slane %v1039, %v1063
        %v1066 = vadd.f32 %v1059, %v1064
        %v1067 = vmul.f32 %v1066, 0.7
        %v1068 = vmul.f32 %v877, 0.3
        %v1069 = vadd.f32 %v1067, %v1068
        %1070 = vst.msk [vmem:[%s468] sm:$0xff] %vm495, %v1069
        %s1071 = sand.u32 %s296, 1
        %s1072 = scalar_lea.sflag [#allocation5], %s1071
        %s1073 = sand.u32 %s296, 1
        %s1074 = smul.addr %s1073, 8
        %s1075 = scalar_lea.vmem [#allocation11], %s1074
        // Predicated region
        $region85: #{tpu_custom_call.1} parent=67 // pred_check
          %p1076 = pneg %p306
        $region86: #{tpu_custom_call.1} parent=67 // pred_check_branch
          %1078 = sbr.rel (%p1076) target = $region88
        $region87: #{tpu_custom_call.1} parent=67 // pred_region
          %s1080 = ssub.s32 128, 128
          %1081 = vsyncadd %s1072, %s1080
          %s1082 = smul.addr %s31, 128
          %s1083 = scalar_lea.hbm %s12, %s1082
          %s1085 = sshll.u32 %s1075, 4
          %s1086 = int_to_ptr.vmem [resolvable:$true] %s1085
          %1088 = dma.vmem_to_hbm [thread:$0]  %s1086, 128, %s1083, %s1072
        $region88: #{tpu_custom_call.1} parent=67 // pred_fallthru
          _
      $region68: #{tpu_custom_call.1} parent=5 // pred_fallthru
        _
      %p1089 = scmp.le.s32.totalorder 2, %s26
      // Predicated region
      $region89: #{tpu_custom_call.1} parent=5 // pred_check
        %p1090 = pneg %p1089
      $region90: #{tpu_custom_call.1} parent=5 // pred_check_branch
        %1092 = sbr.rel (%p1090) target = $region92
      $region91: #{tpu_custom_call.1} parent=5 // pred_region
        %s1093 = ssub.s32 %s26, 2
        // Predicated region
        $region93: #{tpu_custom_call.1} parent=91 // pred_check
          %p1094 = pneg %p312
        $region94: #{tpu_custom_call.1} parent=91 // pred_check_branch
          %1096 = sbr.rel (%p1094) target = $region96
        $region95: #{tpu_custom_call.1} parent=91 // pred_region
          %s1097 = sand.u32 %s297, 1
          %s1098 = scalar_lea.sflag [#allocation5], %s1097
          %s1099 = sand.u32 %s297, 1
          %s1100 = smul.addr %s1099, 8
          %s1101 = scalar_lea.vmem [#allocation11], %s1100
          %1102 = dma.done %s1098, 128
        $region96: #{tpu_custom_call.1} parent=91 // pred_fallthru
          _
      $region92: #{tpu_custom_call.1} parent=5 // pred_fallthru
        _
    $region6: #{tpu_custom_call.1} parent=1 // loop_footer
      %s30 = sadd.s32 1, %s26
    $region7: #{tpu_custom_call.1} parent=1 // loop_footer_branch
      %25 = sbr.rel target = $region3
    $region8: #{tpu_custom_call.1} parent=1 // loop_exit
      _
    %1103 = vsyncpa [#allocation4], 1
    %s1104 = scalar_lea.sflag [#allocation4], 1
    %1105 = vsyncpa %s1104, 1
    %1106 = vsyncpa [#allocation7], 1
    %1107 = vsyncpa [#allocation10], 1
    %1108 = vsyncpa [#allocation5], 1
    %s1109 = scalar_lea.sflag [#allocation5], 1
    %1110 = vsyncpa %s1109, 1

</llo_original>
